<compile_context>
chip_gen: v6e
topology: v6e:2x2x1
jax: 0.10.0
libtpu: 0.0.40
codegen_flags: <defaults>
</compile_context>

<pallas_src>
import jax
import jax.numpy as jnp
from jax.experimental import pallas as pl
from jax.experimental.pallas import tpu as pltpu


# ----------------------- kernel 1: fused conv tower -------------------------
def _make_conv_tower_kernel(s1):
    """conv1 (im2col matmul) + ReLU + pool -> conv2 (single K=288 im2col
    matmul) + ReLU + pool, one image per grid step, all in VMEM/registers."""
    s2 = s1 // 2          # spatial after first pool
    s3 = s1 // 4          # spatial after second pool

    def kernel(p_ref, w1_ref, b1_ref, w2_ref, b2_ref, o_ref, pad_ref, col_ref):
        # ---- conv1: one im2col matmul (s1*s1, Kpad) @ (Kpad, 32), bias, ReLU
        h = jnp.dot(p_ref[0], w1_ref[...], preferred_element_type=jnp.float32)
        h = jnp.maximum(h + b1_ref[...], 0.0)                    # (s1*s1, 32) f32

        # ---- 2x2 maxpool in-register (rows are y*s1 + x).  Every reshape
        #      preserves the 32-lane minor dim -> only sublane regrouping.
        h = h.reshape(s2, 2, s1, 32)
        v = jnp.maximum(h[:, 0], h[:, 1])                        # vertical pairs
        v = v.reshape(s2, s2, 2, 32)
        p1 = jnp.maximum(v[:, :, 0, :], v[:, :, 1, :])           # (s2, s2, 32)

        # ---- conv2 zero-halo: interior is fully overwritten every grid step
        #      and the 1-px border is never written elsewhere, so only the
        #      border is (re)zeroed.  Per-step border zeroing (not
        #      pl.when(pid==0)) stays correct if the batch axis is sharded
        #      across TensorCores: no cross-iteration scratch state.
        zrow = jnp.zeros((1, s2 + 2, 32), jnp.float32)
        zcol = jnp.zeros((s2 + 2, 1, 32), jnp.float32)
        pad_ref[0:1, :, :] = zrow
        pad_ref[s2 + 1:s2 + 2, :, :] = zrow
        pad_ref[:, 0:1, :] = zcol
        pad_ref[:, s2 + 1:s2 + 2, :] = zcol
        pad_ref[1:s2 + 1, 1:s2 + 1, :] = p1

        # ---- conv2 as ONE K=288 im2col matmul: scatter the 9 taps into
        #      contiguous 32-lane K blocks of a bf16 column scratch (the lane
        #      concat is done by stores into scratch, not a value-level concat),
        #      then a single MXU matmul against (288, 64).
        for dy in range(3):                                      # statically unrolled
            for dx in range(3):
                t = dy * 3 + dx
                piece = pad_ref[dy:dy + s2, dx:dx + s2, :].reshape(s2 * s2, 32)
                col_ref[:, t * 32:(t + 1) * 32] = piece.astype(jnp.bfloat16)
        acc = jnp.dot(col_ref[...], w2_ref[...], preferred_element_type=jnp.float32)
        acc = jnp.maximum(acc + b2_ref[...], 0.0)                # (s2*s2, 64) f32

        # ---- 2x2 maxpool in-register (same minor-dim-preserving pattern)
        a = acc.reshape(s3, 2, s2, 64)
        v2 = jnp.maximum(a[:, 0], a[:, 1])
        v2 = v2.reshape(s3, s3, 2, 64)
        p2 = jnp.maximum(v2[:, :, 0, :], v2[:, :, 1, :])         # (s3, s3, 64)

        # ---- lane-dense output: block last dim = s3*64 (>=128 lanes) so the
        #      output VMEM buffer has no lane padding and the write-back is a
        #      dense DMA.  Same memory order as (s3, s3, 64): the wrapper
        #      flatten and fc1 row permutation are unchanged.
        for x2 in range(s3):
            o_ref[0, :, x2 * 64:(x2 + 1) * 64] = p2[:, x2, :].astype(o_ref.dtype)

    return kernel


def conv_tower(patches, w1, b1, w2, b2, s1):
    """patches: (B, s1*s1, Kpad) bf16 -> pooled features (B, s1//4, (s1//4)*64) bf16."""
    B = patches.shape[0]
    kpad = patches.shape[2]
    s2, s3 = s1 // 2, s1 // 4
    return pl.pallas_call(
        _make_conv_tower_kernel(s1),
        out_shape=jax.ShapeDtypeStruct((B, s3, s3 * 64), jnp.bfloat16),
        grid=(B,),
        in_specs=[
            pl.BlockSpec((1, s1 * s1, kpad), lambda i: (i, 0, 0)),
            pl.BlockSpec((kpad, 32), lambda i: (0, 0)),
            pl.BlockSpec((1, 32), lambda i: (0, 0)),
            pl.BlockSpec((9 * 32, 64), lambda i: (0, 0)),
            pl.BlockSpec((1, 64), lambda i: (0, 0)),
        ],
        out_specs=pl.BlockSpec((1, s3, s3 * 64), lambda i: (i, 0, 0)),
        scratch_shapes=[
            pltpu.VMEM((s2 + 2, s2 + 2, 32), jnp.float32),     # conv2 zero-halo
            pltpu.VMEM((s2 * s2, 9 * 32), jnp.bfloat16),       # conv2 im2col columns
        ],
        compiler_params=pltpu.CompilerParams(
            dimension_semantics=("parallel",),   # per-image -> both TCs on v7x
            vmem_limit_bytes=32 * 1024 * 1024,
        ),
    )(patches, w1, b1, w2, b2)


# ------------------------- kernel 2: fused MLP head --------------------------
def _mlp_head_kernel(x_ref, w1_ref, b1_ref, w2_ref, b2_ref, o_ref, acc_ref):
    k = pl.program_id(0)

    @pl.when(k == 0)
    def _():
        acc_ref[...] = jnp.zeros_like(acc_ref)

    # fc1 reduction tile: (B, tk) @ (tk, 128) accumulated in f32 VMEM scratch.
    acc_ref[...] += jnp.dot(x_ref[...], w1_ref[...],
                            preferred_element_type=jnp.float32)

    @pl.when(k == pl.num_programs(0) - 1)
    def _():
        h = jnp.maximum(acc_ref[...] + b1_ref[...], 0.0)         # fc1 bias + ReLU
        o = jnp.dot(h.astype(jnp.bfloat16), w2_ref[...],         # fused fc2
                    preferred_element_type=jnp.float32)
        o_ref[...] = (o + b2_ref[...]).astype(o_ref.dtype)


def mlp_head(x, w1, b1, w2p, b2p, tk=512):
    """x: (B, K) bf16; w1: (K, 128) bf16; w2p/b2p padded to 128 cols -> (B, 128) f32.

    The fc1 reduction is K-tiled (tk x 128 weight tiles, double-buffered by the
    BlockSpec pipeline) so at the native 224x224 model size the ~51 MB fc1
    weight never has to be resident; use tk ~ 4096-8192 there for v7x's 64 MiB
    VMEM budget.
    """
    B, K = x.shape
    Nh = w1.shape[1]
    Np = w2p.shape[1]
    tk = min(tk, K)
    assert K % tk == 0, "fc1 reduction tile must divide the flattened feature size"
    return pl.pallas_call(
        _mlp_head_kernel,
        out_shape=jax.ShapeDtypeStruct((B, Np), jnp.float32),
        grid=(K // tk,),
        in_specs=[
            pl.BlockSpec((B, tk), lambda k: (0, k)),
            pl.BlockSpec((tk, Nh), lambda k: (k, 0)),
            pl.BlockSpec((1, Nh), lambda k: (0, 0)),
            pl.BlockSpec((Nh, Np), lambda k: (0, 0)),
            pl.BlockSpec((1, Np), lambda k: (0, 0)),
        ],
        out_specs=pl.BlockSpec((B, Np), lambda k: (0, 0)),
        scratch_shapes=[pltpu.VMEM((B, Nh), jnp.float32)],
        compiler_params=pltpu.CompilerParams(
            dimension_semantics=("arbitrary",),      # reduction axis
            vmem_limit_bytes=32 * 1024 * 1024,
        ),
    )(x, w1, b1, w2p, b2p)


# ------------------------------ wrapper / glue -------------------------------
def _im2col_3x3_same(x_nhwc, k_pad):
    """(B, H, W, C) -> (B, H*W, k_pad) bf16 patches, feature order (kh, kw, cin)."""
    B, H, W, C = x_nhwc.shape
    xp = jnp.pad(x_nhwc, ((0, 0), (1, 1), (1, 1), (0, 0)))
    taps = [xp[:, dy:dy + H, dx:dx + W, :] for dy in range(3) for dx in range(3)]
    patches = jnp.concatenate(taps, axis=-1).reshape(B, H * W, 9 * C)
    patches = jnp.pad(patches, ((0, 0), (0, 0), (0, k_pad - 9 * C)))
    return patches.astype(jnp.bfloat16)


def prepare_params(params, spatial, n_pad=128, k1=32):
    """One-time re-layout of PyTorch-convention weights into kernel layouts.

    Hoisted out of the jitted forward so the transposes / pads / bf16 casts and
    the fc1 NCHW->NHWC row permutation run once, not per call.
    """
    s3 = spatial // 4
    num_classes = params["fc2_w"].shape[0]
    # conv1: (Cout,Cin,kh,kw) -> (kh,kw,cin,cout) -> (27, 32), K padded to 32.
    w1 = jnp.transpose(params["conv1_w"], (2, 3, 1, 0)).reshape(27, 32)
    w1 = jnp.pad(w1, ((0, k1 - 27), (0, 0))).astype(jnp.bfloat16)
    b1 = params["conv1_b"].reshape(1, 32).astype(jnp.float32)
    # conv2: (Cout,Cin,kh,kw) -> (kh,kw,cin,cout) -> (288, 64) for the single
    # K=288 im2col matmul (row order matches the kernel's tap*32 + cin columns).
    w2 = jnp.transpose(params["conv2_w"], (2, 3, 1, 0)).reshape(9 * 32, 64)
    w2 = w2.astype(jnp.bfloat16)
    b2 = params["conv2_b"].reshape(1, 64).astype(jnp.float32)
    # fc1: PyTorch flattens NCHW (c,h,w); the kernel emits NHWC (h,w,c).
    # Permute the fc1 rows so the kernel computes exactly the PyTorch linear.
    wf1 = params["fc1_w"].reshape(128, 64, s3, s3)                # (out, c, h, w)
    wf1 = jnp.transpose(wf1, (2, 3, 1, 0)).reshape(s3 * s3 * 64, 128)
    wf1 = wf1.astype(jnp.bfloat16)
    bf1 = params["fc1_b"].reshape(1, 128).astype(jnp.float32)
    # fc2: padded to a lane-dense 128-wide logits slab.
    wf2 = jnp.pad(params["fc2_w"].T, ((0, 0), (0, n_pad - num_classes)))
    wf2 = wf2.astype(jnp.bfloat16)
    bf2 = jnp.pad(params["fc2_b"].reshape(1, -1),
                  ((0, 0), (0, n_pad - num_classes))).astype(jnp.float32)
    return {"w1": w1, "b1": b1, "w2": w2, "b2": b2,
            "wf1": wf1, "bf1": bf1, "wf2": wf2, "bf2": bf2}


def brain_tumor_cnn_forward(x_nchw, p, num_classes):
    """x_nchw: (B, 3, S, S) f32, p: prepare_params() output -> (B, num_classes) f32."""
    B, _, S, _ = x_nchw.shape
    assert S % 4 == 0
    s3 = S // 4
    k1 = p["w1"].shape[0]

    x = jnp.transpose(x_nchw, (0, 2, 3, 1))                       # NCHW -> NHWC
    patches = _im2col_3x3_same(x, k1)                             # (B, S*S, 32) bf16
    feats = conv_tower(patches, p["w1"], p["b1"], p["w2"], p["b2"], S)
    feats = feats.reshape(B, s3 * s3 * 64)                        # contiguous flatten
    logits = mlp_head(feats, p["wf1"], p["bf1"], p["wf2"], p["bf2"])  # (B, 128) slab
    return logits[:, :num_classes]


# ------------------------------ reference / init ------------------------------
def _reference_forward(x_nchw, params):
    """Pure-JAX f32 reference matching the PyTorch module (NCHW flatten)."""
    B = x_nchw.shape[0]
    x = jnp.transpose(x_nchw, (0, 2, 3, 1))
    w1 = jnp.transpose(params["conv1_w"], (2, 3, 1, 0))            # HWIO
    y = jax.lax.conv_general_dilated(x, w1, (1, 1), "SAME",
                                     dimension_numbers=("NHWC", "HWIO", "NHWC"))
    y = jnp.maximum(y + params["conv1_b"], 0.0)
    y = jax.lax.reduce_window(y, -jnp.inf, jax.lax.max,
                              (1, 2, 2, 1), (1, 2, 2, 1), "VALID")
    w2 = jnp.transpose(params["conv2_w"], (2, 3, 1, 0))
    y = jax.lax.conv_general_dilated(y, w2, (1, 1), "SAME",
                                     dimension_numbers=("NHWC", "HWIO", "NHWC"))
    y = jnp.maximum(y + params["conv2_b"], 0.0)
    y = jax.lax.reduce_window(y, -jnp.inf, jax.lax.max,
                              (1, 2, 2, 1), (1, 2, 2, 1), "VALID")
    y = jnp.transpose(y, (0, 3, 1, 2)).reshape(B, -1)              # NCHW flatten
    y = jnp.maximum(y @ params["fc1_w"].T + params["fc1_b"], 0.0)
    return y @ params["fc2_w"].T + params["fc2_b"]


def init_params(key, spatial, num_classes):
    """Synthetic weights in PyTorch layouts / init convention."""
    flat = (spatial // 4) * (spatial // 4) * 64   # nn.Module uses 56*56*64 at 224x224
    ks = jax.random.split(key, 8)

    def uinit(k, shape, fan_in):
        bound = 1.0 / jnp.sqrt(jnp.float32(fan_in))
        return jax.random.uniform(k, shape, jnp.float32, -bound, bound)

    return {
        "conv1_w": uinit(ks[0], (32, 3, 3, 3), 3 * 9),
        "conv1_b": uinit(ks[1], (32,), 3 * 9),
        "conv2_w": uinit(ks[2], (64, 32, 3, 3), 32 * 9),
        "conv2_b": uinit(ks[3], (64,), 32 * 9),
        "fc1_w": uinit(ks[4], (128, flat), flat),
        "fc1_b": uinit(ks[5], (128,), flat),
        "fc2_w": uinit(ks[6], (num_classes, 128), 128),
        "fc2_b": uinit(ks[7], (num_classes,), 128),
    }


if __name__ == "__main__":
    B, C, S = 2, 3, 16
    num_classes = 4
    key = jax.random.PRNGKey(0)
    kx, kp = jax.random.split(key)
    x = jax.random.normal(kx, (B, C, S, S), jnp.float32)   # NCHW like PyTorch
    params = init_params(kp, S, num_classes)

    prepped = prepare_params(params, S)                     # one-time re-layout
    fwd = jax.jit(brain_tumor_cnn_forward, static_argnames=("num_classes",))
    logits = fwd(x, prepped, num_classes=num_classes)
    jax.block_until_ready(logits)

    assert logits.shape == (B, num_classes)
    assert logits.dtype == jnp.float32

    # Tolerance check vs. a pure-JAX f32 reference (activations/weights are
    # bf16 on the MXU, so expect ~1e-2 level differences, not exact match).
    ref = _reference_forward(x, params)
    assert jnp.allclose(logits, ref, atol=5e-2, rtol=5e-2), (
        f"max abs err {float(jnp.max(jnp.abs(logits - ref)))}")

    print("KERNEL_OK")
</pallas_src>

<mosaic_0001>
module attributes {stable_mosaic.version = 11 : i64} {
  func.func @_mlp_head_kernel(%arg0: i32, %arg1: memref<2x512xbf16, #tpu.memory_space<vmem>>, %arg2: memref<512x128xbf16, #tpu.memory_space<vmem>>, %arg3: memref<1x128xf32, #tpu.memory_space<vmem>>, %arg4: memref<128x128xbf16, #tpu.memory_space<vmem>>, %arg5: memref<1x128xf32, #tpu.memory_space<vmem>>, %arg6: memref<2x128xf32, #tpu.memory_space<vmem>>, %arg7: memref<2x128xf32, #tpu.memory_space<vmem>>) attributes {dimension_semantics = [#tpu.dimension_semantics<arbitrary>], iteration_bounds = array<i64: 2>, scalar_prefetch = 0 : i64, scratch_operands = 1 : i64, tpu.core_type = #tpu.core_type<tc>, window_params = [{transform_indices = @transform_0, window_bounds = array<i64: 2, 512>}, {transform_indices = @transform_1, window_bounds = array<i64: 512, 128>}, {pipeline_mode = #tpu.pipeline_mode<synchronous>, transform_indices = @transform_2, window_bounds = array<i64: 1, 128>}, {pipeline_mode = #tpu.pipeline_mode<synchronous>, transform_indices = @transform_3, window_bounds = array<i64: 128, 128>}, {pipeline_mode = #tpu.pipeline_mode<synchronous>, transform_indices = @transform_4, window_bounds = array<i64: 1, 128>}, {pipeline_mode = #tpu.pipeline_mode<synchronous>, transform_indices = @transform_5, window_bounds = array<i64: 2, 128>}]} {
    %c0_i32 = arith.constant 0 : i32
    %0 = arith.cmpi eq, %arg0, %c0_i32 : i32
    %1 = arith.extui %0 : i1 to i32
    %c0_i32_0 = arith.constant 0 : i32
    %2 = arith.cmpi ne, %1, %c0_i32_0 : i32
    scf.if %2 {
      %cst_9 = arith.constant 0.000000e+00 : f32
      %12 = vector.broadcast %cst_9 : f32 to vector<2x128xf32>
      %c0_10 = arith.constant 0 : index
      %c0_11 = arith.constant 0 : index
      %13 = vector.load %arg7[%c0_10, %c0_11] : memref<2x128xf32, #tpu.memory_space<vmem>>, vector<2x128xf32>
      tpu.vector_store %arg7[%c0_10, %c0_11], %12 {strides = array<i32>} : memref<2x128xf32, #tpu.memory_space<vmem>>, vector<2x128xf32>,
    } else {
    }
    %c0 = arith.constant 0 : index
    %c0_1 = arith.constant 0 : index
    %3 = vector.load %arg7[%c0, %c0_1] : memref<2x128xf32, #tpu.memory_space<vmem>>, vector<2x128xf32>
    %c0_2 = arith.constant 0 : index
    %c0_3 = arith.constant 0 : index
    %4 = vector.load %arg1[%c0_2, %c0_3] : memref<2x512xbf16, #tpu.memory_space<vmem>>, vector<2x512xbf16>
    %c0_4 = arith.constant 0 : index
    %c0_5 = arith.constant 0 : index
    %5 = vector.load %arg2[%c0_4, %c0_5] : memref<512x128xbf16, #tpu.memory_space<vmem>>, vector<512x128xbf16>
    %cst = arith.constant dense<0.000000e+00> : vector<2x128xf32>
    %6 = tpu.matmul %4, %5, %cst {dimension_numbers = #tpu.dot_dimension_numbers<[1], [0], [0], [1], [0, 0, 1, 1], [], []>} : vector<2x512xbf16>, vector<512x128xbf16>, vector<2x128xf32> -> vector<2x128xf32>
    %7 = arith.addf %3, %6 : vector<2x128xf32>
    %c0_6 = arith.constant 0 : index
    %c0_7 = arith.constant 0 : index
    %8 = vector.load %arg7[%c0_6, %c0_7] : memref<2x128xf32, #tpu.memory_space<vmem>>, vector<2x128xf32>
    tpu.vector_store %arg7[%c0_6, %c0_7], %7 {strides = array<i32>} : memref<2x128xf32, #tpu.memory_space<vmem>>, vector<2x128xf32>,
    %c1_i32 = arith.constant 1 : i32
    %9 = arith.cmpi eq, %arg0, %c1_i32 : i32
    %10 = arith.extui %9 : i1 to i32
    %c0_i32_8 = arith.constant 0 : i32
    %11 = arith.cmpi ne, %10, %c0_i32_8 : i32
    scf.if %11 {
      %c0_9 = arith.constant 0 : index
      %c0_10 = arith.constant 0 : index
      %12 = vector.load %arg7[%c0_9, %c0_10] : memref<2x128xf32, #tpu.memory_space<vmem>>, vector<2x128xf32>
      %c0_11 = arith.constant 0 : index
      %c0_12 = arith.constant 0 : index
      %13 = vector.load %arg3[%c0_11, %c0_12] : memref<1x128xf32, #tpu.memory_space<vmem>>, vector<1x128xf32>
      %14 = vector.broadcast %13 : vector<1x128xf32> to vector<2x128xf32>
      %15 = arith.addf %12, %14 : vector<2x128xf32>
      %cst_13 = arith.constant 0.000000e+00 : f32
      %16 = vector.broadcast %cst_13 : f32 to vector<2x128xf32>
      %17 = arith.maximumf %15, %16 : vector<2x128xf32>
      %18 = arith.truncf %17 : vector<2x128xf32> to vector<2x128xbf16>
      %c0_14 = arith.constant 0 : index
      %c0_15 = arith.constant 0 : index
      %19 = vector.load %arg4[%c0_14, %c0_15] : memref<128x128xbf16, #tpu.memory_space<vmem>>, vector<128x128xbf16>
      %cst_16 = arith.constant dense<0.000000e+00> : vector<2x128xf32>
      %20 = tpu.matmul %18, %19, %cst_16 {dimension_numbers = #tpu.dot_dimension_numbers<[1], [0], [0], [1], [0, 0, 1, 1], [], []>} : vector<2x128xbf16>, vector<128x128xbf16>, vector<2x128xf32> -> vector<2x128xf32>
      %c0_17 = arith.constant 0 : index
      %c0_18 = arith.constant 0 : index
      %21 = vector.load %arg5[%c0_17, %c0_18] : memref<1x128xf32, #tpu.memory_space<vmem>>, vector<1x128xf32>
      %22 = vector.broadcast %21 : vector<1x128xf32> to vector<2x128xf32>
      %23 = arith.addf %20, %22 : vector<2x128xf32>
      %c0_19 = arith.constant 0 : index
      %c0_20 = arith.constant 0 : index
      %24 = vector.load %arg6[%c0_19, %c0_20] : memref<2x128xf32, #tpu.memory_space<vmem>>, vector<2x128xf32>
      tpu.vector_store %arg6[%c0_19, %c0_20], %23 {strides = array<i32>} : memref<2x128xf32, #tpu.memory_space<vmem>>, vector<2x128xf32>,
    } else {
    }
    return
  }
  func.func @transform_0(%arg0: i32) -> (i32, i32) {
    %c0_i32 = arith.constant 0 : i32
    %c0_i32_0 = arith.constant 0 : i32
    return %c0_i32, %arg0 : i32, i32
  }
  func.func @transform_1(%arg0: i32) -> (i32, i32) {
    %c0_i32 = arith.constant 0 : i32
    %c0_i32_0 = arith.constant 0 : i32
    return %arg0, %c0_i32 : i32, i32
  }
  func.func @transform_2(%arg0: i32) -> (i32, i32) {
    %c0_i32 = arith.constant 0 : i32
    %c0_i32_0 = arith.constant 0 : i32
    %c0_i32_1 = arith.constant 0 : i32
    return %c0_i32, %c0_i32_0 : i32, i32
  }
  func.func @transform_3(%arg0: i32) -> (i32, i32) {
    %c0_i32 = arith.constant 0 : i32
    %c0_i32_0 = arith.constant 0 : i32
    %c0_i32_1 = arith.constant 0 : i32
    return %c0_i32, %c0_i32_0 : i32, i32
  }
  func.func @transform_4(%arg0: i32) -> (i32, i32) {
    %c0_i32 = arith.constant 0 : i32
    %c0_i32_0 = arith.constant 0 : i32
    %c0_i32_1 = arith.constant 0 : i32
    return %c0_i32, %c0_i32_0 : i32, i32
  }
  func.func @transform_5(%arg0: i32) -> (i32, i32) {
    %c0_i32 = arith.constant 0 : i32
    %c0_i32_0 = arith.constant 0 : i32
    %c0_i32_1 = arith.constant 0 : i32
    return %c0_i32, %c0_i32_0 : i32, i32
  }
}

module attributes {stable_mosaic.version = 11 : i64} {
  func.func @kernel(%arg0: i32, %arg1: memref<1x256x32xbf16, #tpu.memory_space<vmem>>, %arg2: memref<32x32xbf16, #tpu.memory_space<vmem>>, %arg3: memref<1x32xf32, #tpu.memory_space<vmem>>, %arg4: memref<288x64xbf16, #tpu.memory_space<vmem>>, %arg5: memref<1x64xf32, #tpu.memory_space<vmem>>, %arg6: memref<1x4x256xbf16, #tpu.memory_space<vmem>>, %arg7: memref<10x10x32xf32, #tpu.memory_space<vmem>>, %arg8: memref<64x288xbf16, #tpu.memory_space<vmem>>) attributes {dimension_semantics = [#tpu.dimension_semantics<parallel>], iteration_bounds = array<i64: 2>, scalar_prefetch = 0 : i64, scratch_operands = 2 : i64, tpu.core_type = #tpu.core_type<tc>, window_params = [{transform_indices = @transform_0, window_bounds = array<i64: 1, 256, 32>}, {pipeline_mode = #tpu.pipeline_mode<synchronous>, transform_indices = @transform_1, window_bounds = array<i64: 32, 32>}, {pipeline_mode = #tpu.pipeline_mode<synchronous>, transform_indices = @transform_2, window_bounds = array<i64: 1, 32>}, {pipeline_mode = #tpu.pipeline_mode<synchronous>, transform_indices = @transform_3, window_bounds = array<i64: 288, 64>}, {pipeline_mode = #tpu.pipeline_mode<synchronous>, transform_indices = @transform_4, window_bounds = array<i64: 1, 64>}, {transform_indices = @transform_5, window_bounds = array<i64: 1, 4, 256>}]} {
    %c0 = arith.constant 0 : index
    %c0_0 = arith.constant 0 : index
    %c0_1 = arith.constant 0 : index
    %0 = vector.load %arg1[%c0, %c0_0, %c0_1] : memref<1x256x32xbf16, #tpu.memory_space<vmem>>, vector<1x256x32xbf16>
    %1 = vector.shape_cast %0 : vector<1x256x32xbf16> to vector<256x32xbf16>
    %c0_2 = arith.constant 0 : index
    %c0_3 = arith.constant 0 : index
    %2 = vector.load %arg2[%c0_2, %c0_3] : memref<32x32xbf16, #tpu.memory_space<vmem>>, vector<32x32xbf16>
    %cst = arith.constant dense<0.000000e+00> : vector<256x32xf32>
    %3 = tpu.matmul %1, %2, %cst {dimension_numbers = #tpu.dot_dimension_numbers<[1], [0], [0], [1], [0, 0, 1, 1], [], []>} : vector<256x32xbf16>, vector<32x32xbf16>, vector<256x32xf32> -> vector<256x32xf32>
    %c0_4 = arith.constant 0 : index
    %c0_5 = arith.constant 0 : index
    %4 = vector.load %arg3[%c0_4, %c0_5] : memref<1x32xf32, #tpu.memory_space<vmem>>, vector<1x32xf32>
    %5 = vector.broadcast %4 : vector<1x32xf32> to vector<256x32xf32>
    %6 = arith.addf %3, %5 : vector<256x32xf32>
    %cst_6 = arith.constant 0.000000e+00 : f32
    %7 = vector.broadcast %cst_6 : f32 to vector<256x32xf32>
    %8 = arith.maximumf %6, %7 : vector<256x32xf32>
    %9 = vector.shape_cast %8 : vector<256x32xf32> to vector<8x2x16x32xf32>
    %10 = vector.extract_strided_slice %9 {offsets = [0, 0, 0, 0], sizes = [8, 1, 16, 32], strides = [1, 1, 1, 1]} : vector<8x2x16x32xf32> to vector<8x1x16x32xf32>
    %11 = vector.shape_cast %10 : vector<8x1x16x32xf32> to vector<8x16x32xf32>
    %12 = vector.extract_strided_slice %9 {offsets = [0, 1, 0, 0], sizes = [8, 1, 16, 32], strides = [1, 1, 1, 1]} : vector<8x2x16x32xf32> to vector<8x1x16x32xf32>
    %13 = vector.shape_cast %12 : vector<8x1x16x32xf32> to vector<8x16x32xf32>
    %14 = arith.maximumf %11, %13 : vector<8x16x32xf32>
    %15 = vector.shape_cast %14 : vector<8x16x32xf32> to vector<8x8x2x32xf32>
    %16 = vector.extract_strided_slice %15 {offsets = [0, 0, 0, 0], sizes = [8, 8, 1, 32], strides = [1, 1, 1, 1]} : vector<8x8x2x32xf32> to vector<8x8x1x32xf32>
    %17 = vector.shape_cast %16 : vector<8x8x1x32xf32> to vector<8x8x32xf32>
    %18 = vector.extract_strided_slice %15 {offsets = [0, 0, 1, 0], sizes = [8, 8, 1, 32], strides = [1, 1, 1, 1]} : vector<8x8x2x32xf32> to vector<8x8x1x32xf32>
    %19 = vector.shape_cast %18 : vector<8x8x1x32xf32> to vector<8x8x32xf32>
    %20 = arith.maximumf %17, %19 : vector<8x8x32xf32>
    %cst_7 = arith.constant 0.000000e+00 : f32
    %21 = vector.broadcast %cst_7 : f32 to vector<1x10x32xf32>
    %cst_8 = arith.constant 0.000000e+00 : f32
    %22 = vector.broadcast %cst_8 : f32 to vector<10x1x32xf32>
    %c0_9 = arith.constant 0 : index
    %c0_10 = arith.constant 0 : index
    %c0_11 = arith.constant 0 : index
    %23 = vector.load %arg7[%c0_9, %c0_10, %c0_11] : memref<10x10x32xf32, #tpu.memory_space<vmem>>, vector<1x10x32xf32>
    tpu.vector_store %arg7[%c0_9, %c0_10, %c0_11], %21 {strides = array<i32>} : memref<10x10x32xf32, #tpu.memory_space<vmem>>, vector<1x10x32xf32>,
    %c9 = arith.constant 9 : index
    %c0_12 = arith.constant 0 : index
    %c0_13 = arith.constant 0 : index
    %24 = vector.load %arg7[%c9, %c0_12, %c0_13] : memref<10x10x32xf32, #tpu.memory_space<vmem>>, vector<1x10x32xf32>
    tpu.vector_store %arg7[%c9, %c0_12, %c0_13], %21 {strides = array<i32>} : memref<10x10x32xf32, #tpu.memory_space<vmem>>, vector<1x10x32xf32>,
    %c0_14 = arith.constant 0 : index
    %c0_15 = arith.constant 0 : index
    %c0_16 = arith.constant 0 : index
    %25 = vector.load %arg7[%c0_14, %c0_15, %c0_16] : memref<10x10x32xf32, #tpu.memory_space<vmem>>, vector<10x1x32xf32>
    tpu.vector_store %arg7[%c0_14, %c0_15, %c0_16], %22 {strides = array<i32>} : memref<10x10x32xf32, #tpu.memory_space<vmem>>, vector<10x1x32xf32>,
    %c0_17 = arith.constant 0 : index
    %c9_18 = arith.constant 9 : index
    %c0_19 = arith.constant 0 : index
    %26 = vector.load %arg7[%c0_17, %c9_18, %c0_19] : memref<10x10x32xf32, #tpu.memory_space<vmem>>, vector<10x1x32xf32>
    tpu.vector_store %arg7[%c0_17, %c9_18, %c0_19], %22 {strides = array<i32>} : memref<10x10x32xf32, #tpu.memory_space<vmem>>, vector<10x1x32xf32>,
    %c1 = arith.constant 1 : index
    %c1_20 = arith.constant 1 : index
    %c0_21 = arith.constant 0 : index
    %27 = vector.load %arg7[%c1, %c1_20, %c0_21] : memref<10x10x32xf32, #tpu.memory_space<vmem>>, vector<8x8x32xf32>
    tpu.vector_store %arg7[%c1, %c1_20, %c0_21], %20 {strides = array<i32>} : memref<10x10x32xf32, #tpu.memory_space<vmem>>, vector<8x8x32xf32>,
    %c0_22 = arith.constant 0 : index
    %c0_23 = arith.constant 0 : index
    %c0_24 = arith.constant 0 : index
    %28 = vector.load %arg7[%c0_22, %c0_23, %c0_24] : memref<10x10x32xf32, #tpu.memory_space<vmem>>, vector<8x8x32xf32>
    %29 = vector.shape_cast %28 : vector<8x8x32xf32> to vector<64x32xf32>
    %30 = arith.truncf %29 : vector<64x32xf32> to vector<64x32xbf16>
    %c0_25 = arith.constant 0 : index
    %c0_26 = arith.constant 0 : index
    %31 = vector.load %arg8[%c0_25, %c0_26] : memref<64x288xbf16, #tpu.memory_space<vmem>>, vector<64x32xbf16>
    tpu.vector_store %arg8[%c0_25, %c0_26], %30 {strides = array<i32>} : memref<64x288xbf16, #tpu.memory_space<vmem>>, vector<64x32xbf16>,
    %c0_27 = arith.constant 0 : index
    %c1_28 = arith.constant 1 : index
    %c0_29 = arith.constant 0 : index
    %32 = vector.load %arg7[%c0_27, %c1_28, %c0_29] : memref<10x10x32xf32, #tpu.memory_space<vmem>>, vector<8x8x32xf32>
    %33 = vector.shape_cast %32 : vector<8x8x32xf32> to vector<64x32xf32>
    %34 = arith.truncf %33 : vector<64x32xf32> to vector<64x32xbf16>
    %c0_30 = arith.constant 0 : index
    %c32 = arith.constant 32 : index
    %35 = vector.load %arg8[%c0_30, %c32] : memref<64x288xbf16, #tpu.memory_space<vmem>>, vector<64x32xbf16>
    tpu.vector_store %arg8[%c0_30, %c32], %34 {strides = array<i32>} : memref<64x288xbf16, #tpu.memory_space<vmem>>, vector<64x32xbf16>,
    %c0_31 = arith.constant 0 : index
    %c2 = arith.constant 2 : index
    %c0_32 = arith.constant 0 : index
    %36 = vector.load %arg7[%c0_31, %c2, %c0_32] : memref<10x10x32xf32, #tpu.memory_space<vmem>>, vector<8x8x32xf32>
    %37 = vector.shape_cast %36 : vector<8x8x32xf32> to vector<64x32xf32>
    %38 = arith.truncf %37 : vector<64x32xf32> to vector<64x32xbf16>
    %c0_33 = arith.constant 0 : index
    %c64 = arith.constant 64 : index
    %39 = vector.load %arg8[%c0_33, %c64] : memref<64x288xbf16, #tpu.memory_space<vmem>>, vector<64x32xbf16>
    tpu.vector_store %arg8[%c0_33, %c64], %38 {strides = array<i32>} : memref<64x288xbf16, #tpu.memory_space<vmem>>, vector<64x32xbf16>,
    %c1_34 = arith.constant 1 : index
    %c0_35 = arith.constant 0 : index
    %c0_36 = arith.constant 0 : index
    %40 = vector.load %arg7[%c1_34, %c0_35, %c0_36] : memref<10x10x32xf32, #tpu.memory_space<vmem>>, vector<8x8x32xf32>
    %41 = vector.shape_cast %40 : vector<8x8x32xf32> to vector<64x32xf32>
    %42 = arith.truncf %41 : vector<64x32xf32> to vector<64x32xbf16>
    %c0_37 = arith.constant 0 : index
    %c96 = arith.constant 96 : index
    %43 = vector.load %arg8[%c0_37, %c96] : memref<64x288xbf16, #tpu.memory_space<vmem>>, vector<64x32xbf16>
    tpu.vector_store %arg8[%c0_37, %c96], %42 {strides = array<i32>} : memref<64x288xbf16, #tpu.memory_space<vmem>>, vector<64x32xbf16>,
    %c1_38 = arith.constant 1 : index
    %c1_39 = arith.constant 1 : index
    %c0_40 = arith.constant 0 : index
    %44 = vector.load %arg7[%c1_38, %c1_39, %c0_40] : memref<10x10x32xf32, #tpu.memory_space<vmem>>, vector<8x8x32xf32>
    %45 = vector.shape_cast %44 : vector<8x8x32xf32> to vector<64x32xf32>
    %46 = arith.truncf %45 : vector<64x32xf32> to vector<64x32xbf16>
    %c0_41 = arith.constant 0 : index
    %c128 = arith.constant 128 : index
    %47 = vector.load %arg8[%c0_41, %c128] : memref<64x288xbf16, #tpu.memory_space<vmem>>, vector<64x32xbf16>
    tpu.vector_store %arg8[%c0_41, %c128], %46 {strides = array<i32>} : memref<64x288xbf16, #tpu.memory_space<vmem>>, vector<64x32xbf16>,
    %c1_42 = arith.constant 1 : index
    %c2_43 = arith.constant 2 : index
    %c0_44 = arith.constant 0 : index
    %48 = vector.load %arg7[%c1_42, %c2_43, %c0_44] : memref<10x10x32xf32, #tpu.memory_space<vmem>>, vector<8x8x32xf32>
    %49 = vector.shape_cast %48 : vector<8x8x32xf32> to vector<64x32xf32>
    %50 = arith.truncf %49 : vector<64x32xf32> to vector<64x32xbf16>
    %c0_45 = arith.constant 0 : index
    %c160 = arith.constant 160 : index
    %51 = vector.load %arg8[%c0_45, %c160] : memref<64x288xbf16, #tpu.memory_space<vmem>>, vector<64x32xbf16>
    tpu.vector_store %arg8[%c0_45, %c160], %50 {strides = array<i32>} : memref<64x288xbf16, #tpu.memory_space<vmem>>, vector<64x32xbf16>,
    %c2_46 = arith.constant 2 : index
    %c0_47 = arith.constant 0 : index
    %c0_48 = arith.constant 0 : index
    %52 = vector.load %arg7[%c2_46, %c0_47, %c0_48] : memref<10x10x32xf32, #tpu.memory_space<vmem>>, vector<8x8x32xf32>
    %53 = vector.shape_cast %52 : vector<8x8x32xf32> to vector<64x32xf32>
    %54 = arith.truncf %53 : vector<64x32xf32> to vector<64x32xbf16>
    %c0_49 = arith.constant 0 : index
    %c192 = arith.constant 192 : index
    %55 = vector.load %arg8[%c0_49, %c192] : memref<64x288xbf16, #tpu.memory_space<vmem>>, vector<64x32xbf16>
    tpu.vector_store %arg8[%c0_49, %c192], %54 {strides = array<i32>} : memref<64x288xbf16, #tpu.memory_space<vmem>>, vector<64x32xbf16>,
    %c2_50 = arith.constant 2 : index
    %c1_51 = arith.constant 1 : index
    %c0_52 = arith.constant 0 : index
    %56 = vector.load %arg7[%c2_50, %c1_51, %c0_52] : memref<10x10x32xf32, #tpu.memory_space<vmem>>, vector<8x8x32xf32>
    %57 = vector.shape_cast %56 : vector<8x8x32xf32> to vector<64x32xf32>
    %58 = arith.truncf %57 : vector<64x32xf32> to vector<64x32xbf16>
    %c0_53 = arith.constant 0 : index
    %c224 = arith.constant 224 : index
    %59 = vector.load %arg8[%c0_53, %c224] : memref<64x288xbf16, #tpu.memory_space<vmem>>, vector<64x32xbf16>
    tpu.vector_store %arg8[%c0_53, %c224], %58 {strides = array<i32>} : memref<64x288xbf16, #tpu.memory_space<vmem>>, vector<64x32xbf16>,
    %c2_54 = arith.constant 2 : index
    %c2_55 = arith.constant 2 : index
    %c0_56 = arith.constant 0 : index
    %60 = vector.load %arg7[%c2_54, %c2_55, %c0_56] : memref<10x10x32xf32, #tpu.memory_space<vmem>>, vector<8x8x32xf32>
    %61 = vector.shape_cast %60 : vector<8x8x32xf32> to vector<64x32xf32>
    %62 = arith.truncf %61 : vector<64x32xf32> to vector<64x32xbf16>
    %c0_57 = arith.constant 0 : index
    %c256 = arith.constant 256 : index
    %63 = vector.load %arg8[%c0_57, %c256] : memref<64x288xbf16, #tpu.memory_space<vmem>>, vector<64x32xbf16>
    tpu.vector_store %arg8[%c0_57, %c256], %62 {strides = array<i32>} : memref<64x288xbf16, #tpu.memory_space<vmem>>, vector<64x32xbf16>,
    %c0_58 = arith.constant 0 : index
    %c0_59 = arith.constant 0 : index
    %64 = vector.load %arg8[%c0_58, %c0_59] : memref<64x288xbf16, #tpu.memory_space<vmem>>, vector<64x288xbf16>
    %c0_60 = arith.constant 0 : index
    %c0_61 = arith.constant 0 : index
    %65 = vector.load %arg4[%c0_60, %c0_61] : memref<288x64xbf16, #tpu.memory_space<vmem>>, vector<288x64xbf16>
    %cst_62 = arith.constant dense<0.000000e+00> : vector<64x64xf32>
    %66 = tpu.matmul %64, %65, %cst_62 {dimension_numbers = #tpu.dot_dimension_numbers<[1], [0], [0], [1], [0, 0, 1, 1], [], []>} : vector<64x288xbf16>, vector<288x64xbf16>, vector<64x64xf32> -> vector<64x64xf32>
    %c0_63 = arith.constant 0 : index
    %c0_64 = arith.constant 0 : index
    %67 = vector.load %arg5[%c0_63, %c0_64] : memref<1x64xf32, #tpu.memory_space<vmem>>, vector<1x64xf32>
    %68 = vector.broadcast %67 : vector<1x64xf32> to vector<64x64xf32>
    %69 = arith.addf %66, %68 : vector<64x64xf32>
    %cst_65 = arith.constant 0.000000e+00 : f32
    %70 = vector.broadcast %cst_65 : f32 to vector<64x64xf32>
    %71 = arith.maximumf %69, %70 : vector<64x64xf32>
    %72 = vector.shape_cast %71 : vector<64x64xf32> to vector<4x2x8x64xf32>
    %73 = vector.extract_strided_slice %72 {offsets = [0, 0, 0, 0], sizes = [4, 1, 8, 64], strides = [1, 1, 1, 1]} : vector<4x2x8x64xf32> to vector<4x1x8x64xf32>
    %74 = vector.shape_cast %73 : vector<4x1x8x64xf32> to vector<4x8x64xf32>
    %75 = vector.extract_strided_slice %72 {offsets = [0, 1, 0, 0], sizes = [4, 1, 8, 64], strides = [1, 1, 1, 1]} : vector<4x2x8x64xf32> to vector<4x1x8x64xf32>
    %76 = vector.shape_cast %75 : vector<4x1x8x64xf32> to vector<4x8x64xf32>
    %77 = arith.maximumf %74, %76 : vector<4x8x64xf32>
    %78 = vector.shape_cast %77 : vector<4x8x64xf32> to vector<4x4x2x64xf32>
    %79 = vector.extract_strided_slice %78 {offsets = [0, 0, 0, 0], sizes = [4, 4, 1, 64], strides = [1, 1, 1, 1]} : vector<4x4x2x64xf32> to vector<4x4x1x64xf32>
    %80 = vector.shape_cast %79 : vector<4x4x1x64xf32> to vector<4x4x64xf32>
    %81 = vector.extract_strided_slice %78 {offsets = [0, 0, 1, 0], sizes = [4, 4, 1, 64], strides = [1, 1, 1, 1]} : vector<4x4x2x64xf32> to vector<4x4x1x64xf32>
    %82 = vector.shape_cast %81 : vector<4x4x1x64xf32> to vector<4x4x64xf32>
    %83 = arith.maximumf %80, %82 : vector<4x4x64xf32>
    %84 = vector.extract_strided_slice %83 {offsets = [0, 0, 0], sizes = [4, 1, 64], strides = [1, 1, 1]} : vector<4x4x64xf32> to vector<4x1x64xf32>
    %85 = vector.shape_cast %84 : vector<4x1x64xf32> to vector<4x64xf32>
    %86 = arith.truncf %85 : vector<4x64xf32> to vector<4x64xbf16>
    %c0_66 = arith.constant 0 : index
    %c0_67 = arith.constant 0 : index
    %c0_68 = arith.constant 0 : index
    %87 = vector.load %arg6[%c0_66, %c0_67, %c0_68] : memref<1x4x256xbf16, #tpu.memory_space<vmem>>, vector<1x4x64xbf16>
    %88 = vector.shape_cast %87 : vector<1x4x64xbf16> to vector<4x64xbf16>
    %89 = vector.shape_cast %86 : vector<4x64xbf16> to vector<1x4x64xbf16>
    tpu.vector_store %arg6[%c0_66, %c0_67, %c0_68], %89 {strides = array<i32>} : memref<1x4x256xbf16, #tpu.memory_space<vmem>>, vector<1x4x64xbf16>,
    %90 = vector.extract_strided_slice %83 {offsets = [0, 1, 0], sizes = [4, 1, 64], strides = [1, 1, 1]} : vector<4x4x64xf32> to vector<4x1x64xf32>
    %91 = vector.shape_cast %90 : vector<4x1x64xf32> to vector<4x64xf32>
    %92 = arith.truncf %91 : vector<4x64xf32> to vector<4x64xbf16>
    %c0_69 = arith.constant 0 : index
    %c0_70 = arith.constant 0 : index
    %c64_71 = arith.constant 64 : index
    %93 = vector.load %arg6[%c0_69, %c0_70, %c64_71] : memref<1x4x256xbf16, #tpu.memory_space<vmem>>, vector<1x4x64xbf16>
    %94 = vector.shape_cast %93 : vector<1x4x64xbf16> to vector<4x64xbf16>
    %95 = vector.shape_cast %92 : vector<4x64xbf16> to vector<1x4x64xbf16>
    tpu.vector_store %arg6[%c0_69, %c0_70, %c64_71], %95 {strides = array<i32>} : memref<1x4x256xbf16, #tpu.memory_space<vmem>>, vector<1x4x64xbf16>,
    %96 = vector.extract_strided_slice %83 {offsets = [0, 2, 0], sizes = [4, 1, 64], strides = [1, 1, 1]} : vector<4x4x64xf32> to vector<4x1x64xf32>
    %97 = vector.shape_cast %96 : vector<4x1x64xf32> to vector<4x64xf32>
    %98 = arith.truncf %97 : vector<4x64xf32> to vector<4x64xbf16>
    %c0_72 = arith.constant 0 : index
    %c0_73 = arith.constant 0 : index
    %c128_74 = arith.constant 128 : index
    %99 = vector.load %arg6[%c0_72, %c0_73, %c128_74] : memref<1x4x256xbf16, #tpu.memory_space<vmem>>, vector<1x4x64xbf16>
    %100 = vector.shape_cast %99 : vector<1x4x64xbf16> to vector<4x64xbf16>
    %101 = vector.shape_cast %98 : vector<4x64xbf16> to vector<1x4x64xbf16>
    tpu.vector_store %arg6[%c0_72, %c0_73, %c128_74], %101 {strides = array<i32>} : memref<1x4x256xbf16, #tpu.memory_space<vmem>>, vector<1x4x64xbf16>,
    %102 = vector.extract_strided_slice %83 {offsets = [0, 3, 0], sizes = [4, 1, 64], strides = [1, 1, 1]} : vector<4x4x64xf32> to vector<4x1x64xf32>
    %103 = vector.shape_cast %102 : vector<4x1x64xf32> to vector<4x64xf32>
    %104 = arith.truncf %103 : vector<4x64xf32> to vector<4x64xbf16>
    %c0_75 = arith.constant 0 : index
    %c0_76 = arith.constant 0 : index
    %c192_77 = arith.constant 192 : index
    %105 = vector.load %arg6[%c0_75, %c0_76, %c192_77] : memref<1x4x256xbf16, #tpu.memory_space<vmem>>, vector<1x4x64xbf16>
    %106 = vector.shape_cast %105 : vector<1x4x64xbf16> to vector<4x64xbf16>
    %107 = vector.shape_cast %104 : vector<4x64xbf16> to vector<1x4x64xbf16>
    tpu.vector_store %arg6[%c0_75, %c0_76, %c192_77], %107 {strides = array<i32>} : memref<1x4x256xbf16, #tpu.memory_space<vmem>>, vector<1x4x64xbf16>,
    return
  }
  func.func @transform_0(%arg0: i32) -> (i32, i32, i32) {
    %c0_i32 = arith.constant 0 : i32
    %c0_i32_0 = arith.constant 0 : i32
    %c0_i32_1 = arith.constant 0 : i32
    return %arg0, %c0_i32, %c0_i32_0 : i32, i32, i32
  }
  func.func @transform_1(%arg0: i32) -> (i32, i32) {
    %c0_i32 = arith.constant 0 : i32
    %c0_i32_0 = arith.constant 0 : i32
    %c0_i32_1 = arith.constant 0 : i32
    return %c0_i32, %c0_i32_0 : i32, i32
  }
  func.func @transform_2(%arg0: i32) -> (i32, i32) {
    %c0_i32 = arith.constant 0 : i32
    %c0_i32_0 = arith.constant 0 : i32
    %c0_i32_1 = arith.constant 0 : i32
    return %c0_i32, %c0_i32_0 : i32, i32
  }
  func.func @transform_3(%arg0: i32) -> (i32, i32) {
    %c0_i32 = arith.constant 0 : i32
    %c0_i32_0 = arith.constant 0 : i32
    %c0_i32_1 = arith.constant 0 : i32
    return %c0_i32, %c0_i32_0 : i32, i32
  }
  func.func @transform_4(%arg0: i32) -> (i32, i32) {
    %c0_i32 = arith.constant 0 : i32
    %c0_i32_0 = arith.constant 0 : i32
    %c0_i32_1 = arith.constant 0 : i32
    return %c0_i32, %c0_i32_0 : i32, i32
  }
  func.func @transform_5(%arg0: i32) -> (i32, i32, i32) {
    %c0_i32 = arith.constant 0 : i32
    %c0_i32_0 = arith.constant 0 : i32
    %c0_i32_1 = arith.constant 0 : i32
    return %arg0, %c0_i32, %c0_i32_0 : i32, i32, i32
  }
}

</mosaic_0001>

<llo_original>
// kernel: brain_tumor_cnn_forward.3
$region0: #{brain_tumor_cnn_forward.3}
  #allocation0 [shape = 'u32[]', space=smem, size = 0x4, offset = 0x4, fixed_abs, tag = 'smem constant byte address 0x4 - core index']
  #allocation1 [shape = 'u32[144,128]{1,0:T(1,128)}', space=vmem, size = 0x12000, scoped, tag = 'internal scratch']
  #allocation2 [shape = 'f32[2,128]{1,0:T(2,128)}', space=vmem, size = 0x400, scoped, tag = 'scratch operand']
  %s0 = inlined_call_operand.vmem [shape: bf16[2,1024], index: 0, kind: input, shape index: {}]
  %s1 = inlined_call_operand.vmem [shape: bf16[1024,128], index: 1, kind: input, shape index: {}]
  %s2 = inlined_call_operand.vmem [shape: f32[1,128], index: 2, kind: input, shape index: {}]
  %s3 = inlined_call_operand.vmem [shape: bf16[128,128], index: 3, kind: input, shape index: {}]
  %s4 = inlined_call_operand.vmem [shape: f32[1,128], index: 4, kind: input, shape index: {}]
  %s5 = inlined_call_operand.hbm [shape: f32[2,128], index: 5, kind: output, shape index: {}]
  %s6 = sld [smem:[#allocation0]]
  $region61: #{brain_tumor_cnn_forward.3} parent=0
    _
  %s8 = ssub.s32 1, %s6
  %s9 = scalar_select 0, %s8, %s6
  $region1: #{brain_tumor_cnn_forward.3} parent=0
    #allocation3 [shape = 'u8[1024]{0}', space=vmem, size = 0x400, scoped, tag = 'output window, operand 0, single buffered']
    #allocation4 [shape = 's32[2]{0}', space=sflag, size = 0x8, scoped, tag = 'scoped memory for brain_tumor_cnn_forward.3']
    %10 = vsyncpa [#allocation4], 0
    loop: start=0, step=1, limit=4
    $region2: #{brain_tumor_cnn_forward.3} parent=1 // loop_pre_header
      _
    $region3: #{brain_tumor_cnn_forward.3} parent=1 // loop_header
      %s12 = sphi 0, %s16
      %p13 = scmp.ge.s32.totalorder %s12, 4
      %s22 = sphi 0, %s24
      %s25 = sphi 0, %s22
      %s26 = sphi 0, %s25
      %s42 = sphi 0, %s26
      %s48 = sphi 0, %s50
      %s51 = sphi 0, %s48
      %s52 = sphi 0, %s51
      %s68 = sphi 0, %s52
      %s72 = sphi 0, %s72
      %s74 = sphi 0, %s72
      %s75 = sphi 0, %s74
      %s89 = sphi 0, %s75
      %s93 = sphi 0, %s93
      %s95 = sphi 0, %s93
      %s96 = sphi 0, %s95
      %s110 = sphi 0, %s96
      %s114 = sphi 0, %s114
      %s116 = sphi 0, %s114
      %s117 = sphi 0, %s116
      %s131 = sphi 0, %s117
      %s135 = sphi 0, %s135
      %s137 = sphi 0, %s135
      %s138 = sphi 0, %s137
      %s152 = sphi 0, %s138
    $region4: #{brain_tumor_cnn_forward.3} parent=1 // loop_header_branch
      %15 = sbr.rel (%p13) target = $region8
    $region5: #{brain_tumor_cnn_forward.3} parent=1 // loop_body
      %s17 = ssub.s32 %s12, 1
      %s18 = ssub.s32 %s12, 2
      %s19 = sadd.s32 %s12, 1
      %s20 = ssub.s32 %s12, %s19
      %p21 = scmp.eq.s32.totalorder %s20, 0
      %s23 = sadd.s32 %s22, 1
      %s24 = scalar_select %p21, %s22, %s23
      %p27 = pneg %p21
      %p28 = scmp.eq.s32.totalorder %s12, 1
      %p29 = por %p27, %p28
      %p30 = scmp.ne.s32.totalorder %s22, %s25
      %p31 = scmp.eq.s32.totalorder %s12, 0
      %p32 = por %p30, %p31
      %p33 = scmp.ne.s32.totalorder %s22, %s25
      %p34 = scmp.eq.s32.totalorder %s17, 1
      %p35 = por %p33, %p34
      %p36 = scmp.ne.s32.totalorder %s25, %s26
      %p37 = scmp.eq.s32.totalorder %s17, 0
      %p38 = por %p36, %p37
      %p39 = scmp.ne.s32.totalorder %s25, %s26
      %p40 = scmp.eq.s32.totalorder %s18, 1
      %p41 = por %p39, %p40
      %p43 = scmp.ne.s32.totalorder %s26, %s42
      %p44 = scmp.eq.s32.totalorder %s18, 0
      %p45 = por %p43, %p44
      %s46 = ssub.s32 %s12, %s19
      %p47 = scmp.eq.s32.totalorder %s46, 0
      %s49 = sadd.s32 %s48, 1
      %s50 = scalar_select %p47, %s48, %s49
      %p53 = pneg %p47
      %p54 = scmp.eq.s32.totalorder %s12, 1
      %p55 = por %p53, %p54
      %p56 = scmp.ne.s32.totalorder %s48, %s51
      %p57 = scmp.eq.s32.totalorder %s12, 0
      %p58 = por %p56, %p57
      %p59 = scmp.ne.s32.totalorder %s48, %s51
      %p60 = scmp.eq.s32.totalorder %s17, 1
      %p61 = por %p59, %p60
      %p62 = scmp.ne.s32.totalorder %s51, %s52
      %p63 = scmp.eq.s32.totalorder %s17, 0
      %p64 = por %p62, %p63
      %p65 = scmp.ne.s32.totalorder %s51, %s52
      %p66 = scmp.eq.s32.totalorder %s18, 1
      %p67 = por %p65, %p66
      %p69 = scmp.ne.s32.totalorder %s52, %s68
      %p70 = scmp.eq.s32.totalorder %s18, 0
      %p71 = por %p69, %p70
      %s73 = sadd.s32 %s72, 1
      %p76 = scmp.eq.s32.totalorder %s12, 1
      %p77 = scmp.ne.s32.totalorder %s72, %s74
      %p78 = scmp.eq.s32.totalorder %s12, 0
      %p79 = por %p77, %p78
      %p80 = scmp.ne.s32.totalorder %s72, %s74
      %p81 = scmp.eq.s32.totalorder %s17, 1
      %p82 = por %p80, %p81
      %p83 = scmp.ne.s32.totalorder %s74, %s75
      %p84 = scmp.eq.s32.totalorder %s17, 0
      %p85 = por %p83, %p84
      %p86 = scmp.ne.s32.totalorder %s74, %s75
      %p87 = scmp.eq.s32.totalorder %s18, 1
      %p88 = por %p86, %p87
      %p90 = scmp.ne.s32.totalorder %s75, %s89
      %p91 = scmp.eq.s32.totalorder %s18, 0
      %p92 = por %p90, %p91
      %s94 = sadd.s32 %s93, 1
      %p97 = scmp.eq.s32.totalorder %s12, 1
      %p98 = scmp.ne.s32.totalorder %s93, %s95
      %p99 = scmp.eq.s32.totalorder %s12, 0
      %p100 = por %p98, %p99
      %p101 = scmp.ne.s32.totalorder %s93, %s95
      %p102 = scmp.eq.s32.totalorder %s17, 1
      %p103 = por %p101, %p102
      %p104 = scmp.ne.s32.totalorder %s95, %s96
      %p105 = scmp.eq.s32.totalorder %s17, 0
      %p106 = por %p104, %p105
      %p107 = scmp.ne.s32.totalorder %s95, %s96
      %p108 = scmp.eq.s32.totalorder %s18, 1
      %p109 = por %p107, %p108
      %p111 = scmp.ne.s32.totalorder %s96, %s110
      %p112 = scmp.eq.s32.totalorder %s18, 0
      %p113 = por %p111, %p112
      %s115 = sadd.s32 %s114, 1
      %p118 = scmp.eq.s32.totalorder %s12, 1
      %p119 = scmp.ne.s32.totalorder %s114, %s116
      %p120 = scmp.eq.s32.totalorder %s12, 0
      %p121 = por %p119, %p120
      %p122 = scmp.ne.s32.totalorder %s114, %s116
      %p123 = scmp.eq.s32.totalorder %s17, 1
      %p124 = por %p122, %p123
      %p125 = scmp.ne.s32.totalorder %s116, %s117
      %p126 = scmp.eq.s32.totalorder %s17, 0
      %p127 = por %p125, %p126
      %p128 = scmp.ne.s32.totalorder %s116, %s117
      %p129 = scmp.eq.s32.totalorder %s18, 1
      %p130 = por %p128, %p129
      %p132 = scmp.ne.s32.totalorder %s117, %s131
      %p133 = scmp.eq.s32.totalorder %s18, 0
      %p134 = por %p132, %p133
      %s136 = sadd.s32 %s135, 1
      %p139 = scmp.eq.s32.totalorder %s12, 1
      %p140 = scmp.ne.s32.totalorder %s135, %s137
      %p141 = scmp.eq.s32.totalorder %s12, 0
      %p142 = por %p140, %p141
      %p143 = scmp.ne.s32.totalorder %s135, %s137
      %p144 = scmp.eq.s32.totalorder %s17, 1
      %p145 = por %p143, %p144
      %p146 = scmp.ne.s32.totalorder %s137, %s138
      %p147 = scmp.eq.s32.totalorder %s17, 0
      %p148 = por %p146, %p147
      %p149 = scmp.ne.s32.totalorder %s137, %s138
      %p150 = scmp.eq.s32.totalorder %s18, 1
      %p151 = por %p149, %p150
      %p153 = scmp.ne.s32.totalorder %s138, %s152
      %p154 = scmp.eq.s32.totalorder %s18, 0
      %p155 = por %p153, %p154
      %p156 = scmp.le.s32.totalorder 1, %s12
      %p157 = scmp.lt.s32.totalorder %s12, 3
      %p158 = pnand %p156, %p157
      %p159 = pneg %p158
      // Predicated region
      $region9: #{brain_tumor_cnn_forward.3} parent=5 // pred_check
        _
      $region10: #{brain_tumor_cnn_forward.3} parent=5 // pred_check_branch
        %161 = sbr.rel (%p158) target = $region12
      $region11: #{brain_tumor_cnn_forward.3} parent=5 // pred_region
        %s162 = ssub.s32 %s12, 1
        // Predicated region
        $region13: #{brain_tumor_cnn_forward.3} parent=11 // pred_check
          %p163 = pneg %p85
        $region14: #{brain_tumor_cnn_forward.3} parent=11 // pred_check_branch
          %165 = sbr.rel (%p163) target = $region16
        $region15: #{brain_tumor_cnn_forward.3} parent=11 // pred_region
          _
        $region16: #{brain_tumor_cnn_forward.3} parent=11 // pred_fallthru
          _
        // Predicated region
        $region17: #{brain_tumor_cnn_forward.3} parent=11 // pred_check
          %p166 = pneg %p106
        $region18: #{brain_tumor_cnn_forward.3} parent=11 // pred_check_branch
          %168 = sbr.rel (%p166) target = $region20
        $region19: #{brain_tumor_cnn_forward.3} parent=11 // pred_region
          _
        $region20: #{brain_tumor_cnn_forward.3} parent=11 // pred_fallthru
          _
        // Predicated region
        $region21: #{brain_tumor_cnn_forward.3} parent=11 // pred_check
          %p169 = pneg %p127
        $region22: #{brain_tumor_cnn_forward.3} parent=11 // pred_check_branch
          %171 = sbr.rel (%p169) target = $region24
        $region23: #{brain_tumor_cnn_forward.3} parent=11 // pred_region
          _
        $region24: #{brain_tumor_cnn_forward.3} parent=11 // pred_fallthru
          _
      $region12: #{brain_tumor_cnn_forward.3} parent=5 // pred_fallthru
        _
      %p172 = scmp.lt.s32.totalorder %s12, 2
      // Predicated region
      $region25: #{brain_tumor_cnn_forward.3} parent=5 // pred_check
        %p173 = pneg %p172
      $region26: #{brain_tumor_cnn_forward.3} parent=5 // pred_check_branch
        %175 = sbr.rel (%p173) target = $region28
      $region27: #{brain_tumor_cnn_forward.3} parent=5 // pred_region
        // Predicated region
        $region29: #{brain_tumor_cnn_forward.3} parent=27 // pred_check
          %p176 = pneg %p32
        $region30: #{brain_tumor_cnn_forward.3} parent=27 // pred_check_branch
          %178 = sbr.rel (%p176) target = $region32
        $region31: #{brain_tumor_cnn_forward.3} parent=27 // pred_region
          %s179 = smul.u32 4, %s12
          %p180 = scmp.lt.s32.totalorder %s179, 7
          %s181 = scalar_select %p180, %s179, 7
          %s182 = scalar_lea.vmem %s0, %s181
          %s183 = smul.u32 4, %s12
        $region32: #{brain_tumor_cnn_forward.3} parent=27 // pred_fallthru
          _
        // Predicated region
        $region33: #{brain_tumor_cnn_forward.3} parent=27 // pred_check
          %p184 = pneg %p58
        $region34: #{brain_tumor_cnn_forward.3} parent=27 // pred_check_branch
          %186 = sbr.rel (%p184) target = $region36
        $region35: #{brain_tumor_cnn_forward.3} parent=27 // pred_region
          %s187 = smul.u32 64, %s12
          %p188 = scmp.lt.s32.totalorder %s187, 127
          %s189 = scalar_select %p188, %s187, 127
          %s190 = smul.addr %s189, 4
          %s191 = scalar_lea.vmem %s1, %s190
          %s192 = smul.u32 64, %s12
        $region36: #{brain_tumor_cnn_forward.3} parent=27 // pred_fallthru
          _
      $region28: #{brain_tumor_cnn_forward.3} parent=5 // pred_fallthru
        _
      %p193 = scmp.le.s32.totalorder 1, %s12
      %p194 = scmp.lt.s32.totalorder %s12, 3
      %p195 = pnand %p193, %p194
      %p196 = pneg %p195
      // Predicated region
      $region37: #{brain_tumor_cnn_forward.3} parent=5 // pred_check
        _
      $region38: #{brain_tumor_cnn_forward.3} parent=5 // pred_check_branch
        %198 = sbr.rel (%p195) target = $region40
      $region39: #{brain_tumor_cnn_forward.3} parent=5 // pred_region
        %s199 = ssub.s32 %s12, 1
        %s200 = smul.u32 4, %s17
        %p201 = scmp.lt.s32.totalorder %s200, 7
        %s202 = scalar_select %p201, %s200, 7
        %s203 = scalar_lea.vmem %s0, %s202
        %p204 = pneg %p38
        %p205 = pneg %p35
        %s206 = smul.u32 64, %s17
        %p207 = scmp.lt.s32.totalorder %s206, 127
        %s208 = scalar_select %p207, %s206, 127
        %s209 = smul.addr %s208, 4
        %s210 = scalar_lea.vmem %s1, %s209
        %p211 = pneg %p64
        %p212 = pneg %p61
        %p213 = pneg %p85
        %p214 = pneg %p82
        %p215 = pneg %p106
        %p216 = pneg %p103
        %p217 = pneg %p127
        %p218 = pneg %p124
        %p219 = pneg %p148
        %p220 = pneg %p145
        %s221 = smul.u32 4, %s17
        %p222 = scmp.lt.s32.totalorder %s221, 7
        %s223 = scalar_select %p222, %s221, 7
        %s224 = scalar_lea.vmem %s0, %s223
        %s225 = smul.u32 4, %s17
        %s226 = smul.u32 64, %s17
        %p227 = scmp.lt.s32.totalorder %s226, 127
        %s228 = scalar_select %p227, %s226, 127
        %s229 = smul.addr %s228, 4
        %s230 = scalar_lea.vmem %s1, %s229
        %s231 = smul.u32 64, %s17
        %p233 = scmp.eq.s32.totalorder %s17, 0
        // Predicated region
        $region41: #{brain_tumor_cnn_forward.3} parent=39 // pred_check
          %p234 = pneg %p233
        $region42: #{brain_tumor_cnn_forward.3} parent=39 // pred_check_branch
          %236 = sbr.rel (%p234) target = $region44
        $region43: #{brain_tumor_cnn_forward.3} parent=39 // pred_region
          %237 = vst [vmem:[#allocation2] sm:$0x3] 0.0
        $region44: #{brain_tumor_cnn_forward.3} parent=39 // pred_fallthru
          _
        %v238 = vld [vmem:[#allocation2] sm:$0x3]
        %v239 = vld [vmem:[%s224] sm:$0xf]
        %v240 = vld [vmem:[%s230] sm:$0xf]
        %v241 = vld [vmem:[%s230 + $0x4] sm:$0xf]
        %v242 = vld [vmem:[%s230 + $0x8] sm:$0xf]
        %v243 = vld [vmem:[%s230 + $0xc] sm:$0xf]
        %v244 = vld [vmem:[%s230 + $0x10] sm:$0xf]
        %v245 = vld [vmem:[%s230 + $0x14] sm:$0xf]
        %v246 = vld [vmem:[%s230 + $0x18] sm:$0xf]
        %v247 = vld [vmem:[%s230 + $0x1c] sm:$0xf]
        %v248 = vld [vmem:[%s230 + $0x20] sm:$0xf]
        %v249 = vld [vmem:[%s230 + $0x24] sm:$0xf]
        %v250 = vld [vmem:[%s230 + $0x28] sm:$0xf]
        %v251 = vld [vmem:[%s230 + $0x2c] sm:$0xf]
        %v252 = vld [vmem:[%s230 + $0x30] sm:$0xf]
        %v253 = vld [vmem:[%s230 + $0x34] sm:$0xf]
        %v254 = vld [vmem:[%s230 + $0x38] sm:$0xf]
        %v255 = vld [vmem:[%s230 + $0x3c] sm:$0xf]
        %v256 = vld [vmem:[%s230 + $0x40] sm:$0xf]
        %v257 = vld [vmem:[%s230 + $0x44] sm:$0xf]
        %v258 = vld [vmem:[%s230 + $0x48] sm:$0xf]
        %v259 = vld [vmem:[%s230 + $0x4c] sm:$0xf]
        %v260 = vld [vmem:[%s230 + $0x50] sm:$0xf]
        %v261 = vld [vmem:[%s230 + $0x54] sm:$0xf]
        %v262 = vld [vmem:[%s230 + $0x58] sm:$0xf]
        %v263 = vld [vmem:[%s230 + $0x5c] sm:$0xf]
        %v264 = vld [vmem:[%s230 + $0x60] sm:$0xf]
        %v265 = vld [vmem:[%s230 + $0x64] sm:$0xf]
        %v266 = vld [vmem:[%s230 + $0x68] sm:$0xf]
        %v267 = vld [vmem:[%s230 + $0x6c] sm:$0xf]
        %v268 = vld [vmem:[%s230 + $0x70] sm:$0xf]
        %v269 = vld [vmem:[%s230 + $0x74] sm:$0xf]
        %v270 = vld [vmem:[%s230 + $0x78] sm:$0xf]
        %v271 = vld [vmem:[%s230 + $0x7c] sm:$0xf]
        %v272 = vld [vmem:[%s230 + $0x80] sm:$0xf]
        %v273 = vld [vmem:[%s230 + $0x84] sm:$0xf]
        %v274 = vld [vmem:[%s230 + $0x88] sm:$0xf]
        %v275 = vld [vmem:[%s230 + $0x8c] sm:$0xf]
        %v276 = vld [vmem:[%s230 + $0x90] sm:$0xf]
        %v277 = vld [vmem:[%s230 + $0x94] sm:$0xf]
        %v278 = vld [vmem:[%s230 + $0x98] sm:$0xf]
        %v279 = vld [vmem:[%s230 + $0x9c] sm:$0xf]
        %v280 = vld [vmem:[%s230 + $0xa0] sm:$0xf]
        %v281 = vld [vmem:[%s230 + $0xa4] sm:$0xf]
        %v282 = vld [vmem:[%s230 + $0xa8] sm:$0xf]
        %v283 = vld [vmem:[%s230 + $0xac] sm:$0xf]
        %v284 = vld [vmem:[%s230 + $0xb0] sm:$0xf]
        %v285 = vld [vmem:[%s230 + $0xb4] sm:$0xf]
        %v286 = vld [vmem:[%s230 + $0xb8] sm:$0xf]
        %v287 = vld [vmem:[%s230 + $0xbc] sm:$0xf]
        %v288 = vld [vmem:[%s230 + $0xc0] sm:$0xf]
        %v289 = vld [vmem:[%s230 + $0xc4] sm:$0xf]
        %v290 = vld [vmem:[%s230 + $0xc8] sm:$0xf]
        %v291 = vld [vmem:[%s230 + $0xcc] sm:$0xf]
        %v292 = vld [vmem:[%s230 + $0xd0] sm:$0xf]
        %v293 = vld [vmem:[%s230 + $0xd4] sm:$0xf]
        %v294 = vld [vmem:[%s230 + $0xd8] sm:$0xf]
        %v295 = vld [vmem:[%s230 + $0xdc] sm:$0xf]
        %v296 = vld [vmem:[%s230 + $0xe0] sm:$0xf]
        %v297 = vld [vmem:[%s230 + $0xe4] sm:$0xf]
        %v298 = vld [vmem:[%s230 + $0xe8] sm:$0xf]
        %v299 = vld [vmem:[%s230 + $0xec] sm:$0xf]
        %v300 = vld [vmem:[%s230 + $0xf0] sm:$0xf]
        %v301 = vld [vmem:[%s230 + $0xf4] sm:$0xf]
        %v302 = vld [vmem:[%s230 + $0xf8] sm:$0xf]
        %v303 = vld [vmem:[%s230 + $0xfc] sm:$0xf]
        %v306 = vunpack.c.l.s4 1966171168
        %v307 = vunpack.c.0.s8 %v306
        %v308 = vlaneseq
        %v309 = vshrl.u32 %v308, 7
        %v310 = vsub.s32 %v307, %v309
        %v311 = vrot.slane %v239, %v310
        %v312 = vcombine.high %v311, %v311
        %v314 = vunpack.c.l.s4 1966171168
        %v315 = vunpack.c.0.s8 %v314
        %v316 = vlaneseq
        %v317 = vshrl.u32 %v316, 7
        %v318 = vsub.s32 %v315, %v317
        %v319 = vrot.slane %v311, %v318
        %v321 = vunpack.c.l.s4 1966171168
        %v322 = vunpack.c.0.s8 %v321
        %v323 = vlaneseq
        %v324 = vshrl.u32 %v323, 7
        %v325 = vsub.s32 %v322, %v324
        %v326 = vrot.slane %v312, %v325
        %v327 = vcombine.high %v319, %v319
        %v328 = vcombine.high %v326, %v326
        %v397 = vunpack.c.l.b16 %v240
        %v398 = vunpack.c.l.b16 %v241
        %v399 = vunpack.c.l.b16 %v242
        %v400 = vunpack.c.l.b16 %v243
        %v401 = vunpack.c.l.b16 %v244
        %v402 = vunpack.c.l.b16 %v245
        %v403 = vunpack.c.l.b16 %v246
        %v404 = vunpack.c.l.b16 %v247
        %v405 = vunpack.c.l.b16 %v248
        %v406 = vunpack.c.l.b16 %v249
        %v407 = vunpack.c.l.b16 %v250
        %v408 = vunpack.c.l.b16 %v251
        %v409 = vunpack.c.l.b16 %v252
        %v410 = vunpack.c.l.b16 %v253
        %v411 = vunpack.c.l.b16 %v254
        %v412 = vunpack.c.l.b16 %v255
        %v413 = vunpack.c.l.b16 %v256
        %v414 = vunpack.c.l.b16 %v257
        %v415 = vunpack.c.l.b16 %v258
        %v416 = vunpack.c.l.b16 %v259
        %v417 = vunpack.c.l.b16 %v260
        %v418 = vunpack.c.l.b16 %v261
        %v419 = vunpack.c.l.b16 %v262
        %v420 = vunpack.c.l.b16 %v263
        %v421 = vunpack.c.l.b16 %v264
        %v422 = vunpack.c.l.b16 %v265
        %v423 = vunpack.c.l.b16 %v266
        %v424 = vunpack.c.l.b16 %v267
        %v425 = vunpack.c.l.b16 %v268
        %v426 = vunpack.c.l.b16 %v269
        %v427 = vunpack.c.l.b16 %v270
        %v428 = vunpack.c.l.b16 %v271
        %v429 = vunpack.c.l.b16 %v272
        %v430 = vunpack.c.l.b16 %v273
        %v431 = vunpack.c.l.b16 %v274
        %v432 = vunpack.c.l.b16 %v275
        %v433 = vunpack.c.l.b16 %v276
        %v434 = vunpack.c.l.b16 %v277
        %v435 = vunpack.c.l.b16 %v278
        %v436 = vunpack.c.l.b16 %v279
        %v437 = vunpack.c.l.b16 %v280
        %v438 = vunpack.c.l.b16 %v281
        %v439 = vunpack.c.l.b16 %v282
        %v440 = vunpack.c.l.b16 %v283
        %v441 = vunpack.c.l.b16 %v284
        %v442 = vunpack.c.l.b16 %v285
        %v443 = vunpack.c.l.b16 %v286
        %v444 = vunpack.c.l.b16 %v287
        %v445 = vunpack.c.l.b16 %v288
        %v446 = vunpack.c.l.b16 %v289
        %v447 = vunpack.c.l.b16 %v290
        %v448 = vunpack.c.l.b16 %v291
        %v449 = vunpack.c.l.b16 %v292
        %v450 = vunpack.c.l.b16 %v293
        %v451 = vunpack.c.l.b16 %v294
        %v452 = vunpack.c.l.b16 %v295
        %v453 = vunpack.c.l.b16 %v296
        %v454 = vunpack.c.l.b16 %v297
        %v455 = vunpack.c.l.b16 %v298
        %v456 = vunpack.c.l.b16 %v299
        %v457 = vunpack.c.l.b16 %v300
        %v458 = vunpack.c.l.b16 %v301
        %v459 = vunpack.c.l.b16 %v302
        %v460 = vunpack.c.l.b16 %v303
        %v461 = vpack.c.b16 %v398, %v397
        %v462 = vpack.c.b16 %v400, %v399
        %v463 = vpack.c.b16 %v402, %v401
        %v464 = vpack.c.b16 %v404, %v403
        %v465 = vpack.c.b16 %v406, %v405
        %v466 = vpack.c.b16 %v408, %v407
        %v467 = vpack.c.b16 %v410, %v409
        %v468 = vpack.c.b16 %v412, %v411
        %v469 = vpack.c.b16 %v414, %v413
        %v470 = vpack.c.b16 %v416, %v415
        %v471 = vpack.c.b16 %v418, %v417
        %v472 = vpack.c.b16 %v420, %v419
        %v473 = vpack.c.b16 %v422, %v421
        %v474 = vpack.c.b16 %v424, %v423
        %v475 = vpack.c.b16 %v426, %v425
        %v476 = vpack.c.b16 %v428, %v427
        %v477 = vpack.c.b16 %v430, %v429
        %v478 = vpack.c.b16 %v432, %v431
        %v479 = vpack.c.b16 %v434, %v433
        %v480 = vpack.c.b16 %v436, %v435
        %v481 = vpack.c.b16 %v438, %v437
        %v482 = vpack.c.b16 %v440, %v439
        %v483 = vpack.c.b16 %v442, %v441
        %v484 = vpack.c.b16 %v444, %v443
        %v485 = vpack.c.b16 %v446, %v445
        %v486 = vpack.c.b16 %v448, %v447
        %v487 = vpack.c.b16 %v450, %v449
        %v488 = vpack.c.b16 %v452, %v451
        %v489 = vpack.c.b16 %v454, %v453
        %v490 = vpack.c.b16 %v456, %v455
        %v491 = vpack.c.b16 %v458, %v457
        %v492 = vpack.c.b16 %v460, %v459
        %525 = vmatprep.subr.bf16.mxu0 0
        %526 = vmatpush1.bf16.msra.mxu0 %v468
        %527 = vmatprep.subr.bf16.mxu0 0
        %528 = vmatpush1.bf16.msra.mxu0 %v467
        %529 = vmatprep.subr.bf16.mxu0 0
        %530 = vmatpush1.bf16.msra.mxu0 %v466
        %531 = vmatprep.subr.bf16.mxu0 0
        %532 = vmatpush1.bf16.msra.mxu0 %v465
        %533 = vmatprep.subr.bf16.mxu0 0
        %534 = vmatpush1.bf16.msra.mxu0 %v464
        %535 = vmatprep.subr.bf16.mxu0 0
        %536 = vmatpush1.bf16.msra.mxu0 %v463
        %537 = vmatprep.subr.bf16.mxu0 0
        %538 = vmatpush1.bf16.msra.mxu0 %v462
        %539 = vmatprep.subr.bf16.mxu0 0
        %540 = vmatpush1.bf16.msra.mxu0 %v461
        %541 = vmatprep.subr.bf16.mxu0 0
        %542 = vmatpush2.bf16.msra.mxu0 %v476
        %543 = vmatprep.subr.bf16.mxu0 0
        %544 = vmatpush2.bf16.msra.mxu0 %v475
        %545 = vmatprep.subr.bf16.mxu0 0
        %546 = vmatpush2.bf16.msra.mxu0 %v474
        %547 = vmatprep.subr.bf16.mxu0 0
        %548 = vmatpush2.bf16.msra.mxu0 %v473
        %549 = vmatprep.subr.bf16.mxu0 0
        %550 = vmatpush2.bf16.msra.mxu0 %v472
        %551 = vmatprep.subr.bf16.mxu0 0
        %552 = vmatpush2.bf16.msra.mxu0 %v471
        %553 = vmatprep.subr.bf16.mxu0 0
        %554 = vmatpush2.bf16.msra.mxu0 %v470
        %555 = vmatprep.subr.bf16.mxu0 0
        %556 = vmatpush2.bf16.msra.mxu0 %v469
        %557 = vmatprep.mubr.bf16.mxu0 %v326
        %558 = vmatmul.mubr.bf16.gmra.mxu0 %v319
        %v559 = vpop.f32.mrf.mxu0
        %v560 = vadd.f32 0.0, %v559
        %v561 = vpop.f32.mrf.mxu0
        %v562 = vpop.f32.mrf.mxu0
        %v563 = vpop.f32.mrf.mxu0
        %564 = vdwg.mxu0
        %565 = vmatprep.subr.bf16.mxu0 0
        %566 = vmatpush1.bf16.msra.mxu0 %v484
        %567 = vmatprep.subr.bf16.mxu0 0
        %568 = vmatpush1.bf16.msra.mxu0 %v483
        %569 = vmatprep.subr.bf16.mxu0 0
        %570 = vmatpush1.bf16.msra.mxu0 %v482
        %571 = vmatprep.subr.bf16.mxu0 0
        %572 = vmatpush1.bf16.msra.mxu0 %v481
        %573 = vmatprep.subr.bf16.mxu0 0
        %574 = vmatpush1.bf16.msra.mxu0 %v480
        %575 = vmatprep.subr.bf16.mxu0 0
        %576 = vmatpush1.bf16.msra.mxu0 %v479
        %577 = vmatprep.subr.bf16.mxu0 0
        %578 = vmatpush1.bf16.msra.mxu0 %v478
        %579 = vmatprep.subr.bf16.mxu0 0
        %580 = vmatpush1.bf16.msra.mxu0 %v477
        %581 = vmatprep.subr.bf16.mxu0 0
        %582 = vmatpush2.bf16.msra.mxu0 %v492
        %583 = vmatprep.subr.bf16.mxu0 0
        %584 = vmatpush2.bf16.msra.mxu0 %v491
        %585 = vmatprep.subr.bf16.mxu0 0
        %586 = vmatpush2.bf16.msra.mxu0 %v490
        %587 = vmatprep.subr.bf16.mxu0 0
        %588 = vmatpush2.bf16.msra.mxu0 %v489
        %589 = vmatprep.subr.bf16.mxu0 0
        %590 = vmatpush2.bf16.msra.mxu0 %v488
        %591 = vmatprep.subr.bf16.mxu0 0
        %592 = vmatpush2.bf16.msra.mxu0 %v487
        %593 = vmatprep.subr.bf16.mxu0 0
        %594 = vmatpush2.bf16.msra.mxu0 %v486
        %595 = vmatprep.subr.bf16.mxu0 0
        %596 = vmatpush2.bf16.msra.mxu0 %v485
        %597 = vmatprep.mubr.bf16.mxu0 %v328
        %598 = vmatmul.mubr.bf16.gmra.mxu0 %v327
        %v599 = vpop.f32.mrf.mxu0
        %v600 = vadd.f32 %v560, %v599
        %v601 = vpop.f32.mrf.mxu0
        %v602 = vpop.f32.mrf.mxu0
        %v603 = vpop.f32.mrf.mxu0
        %604 = vdwg.mxu0
        %v605 = vadd.f32 %v238, %v600
        %606 = vst [vmem:[#allocation2] sm:$0x3] %v605
        %p607 = scmp.eq.s32.totalorder %s17, 1
        // Predicated region
        $region45: #{brain_tumor_cnn_forward.3} parent=39 // pred_check
          %p608 = pneg %p607
        $region46: #{brain_tumor_cnn_forward.3} parent=39 // pred_check_branch
          %610 = sbr.rel (%p608) target = $region48
        $region47: #{brain_tumor_cnn_forward.3} parent=39 // pred_region
          %v611 = vld [vmem:[#allocation2] sm:$0x3]
          %v612 = vld [vmem:[%s2] sm:$0x1]
          %v614 = vlaneseq
          %v615 = vshrl.u32 %v614, 7
          %v616 = vsub.s32 0, %v615
          %v617 = vrot.slane %v612, %v616
          %v619 = vadd.f32 %v611, %v617
          %v620 = vmax.f32 %v619, 0.0
          %v621 = vpack.c.bf16 %v620, %v620
          %v622 = vld [vmem:[%s3] sm:$0xf]
          %v623 = vld [vmem:[%s3 + $0x4] sm:$0xf]
          %v624 = vld [vmem:[%s3 + $0x8] sm:$0xf]
          %v625 = vld [vmem:[%s3 + $0xc] sm:$0xf]
          %v626 = vld [vmem:[%s3 + $0x10] sm:$0xf]
          %v627 = vld [vmem:[%s3 + $0x14] sm:$0xf]
          %v628 = vld [vmem:[%s3 + $0x18] sm:$0xf]
          %v629 = vld [vmem:[%s3 + $0x1c] sm:$0xf]
          %v630 = vld [vmem:[%s3 + $0x20] sm:$0xf]
          %v631 = vld [vmem:[%s3 + $0x24] sm:$0xf]
          %v632 = vld [vmem:[%s3 + $0x28] sm:$0xf]
          %v633 = vld [vmem:[%s3 + $0x2c] sm:$0xf]
          %v634 = vld [vmem:[%s3 + $0x30] sm:$0xf]
          %v635 = vld [vmem:[%s3 + $0x34] sm:$0xf]
          %v636 = vld [vmem:[%s3 + $0x38] sm:$0xf]
          %v637 = vld [vmem:[%s3 + $0x3c] sm:$0xf]
          %v638 = vld [vmem:[%s4] sm:$0x1]
          %v640 = vlaneseq
          %v641 = vshrl.u32 %v640, 7
          %v642 = vsub.s32 0, %v641
          %v643 = vrot.slane %v638, %v642
          %v661 = vunpack.c.l.b16 %v622
          %v662 = vunpack.c.l.b16 %v623
          %v663 = vunpack.c.l.b16 %v624
          %v664 = vunpack.c.l.b16 %v625
          %v665 = vunpack.c.l.b16 %v626
          %v666 = vunpack.c.l.b16 %v627
          %v667 = vunpack.c.l.b16 %v628
          %v668 = vunpack.c.l.b16 %v629
          %v669 = vunpack.c.l.b16 %v630
          %v670 = vunpack.c.l.b16 %v631
          %v671 = vunpack.c.l.b16 %v632
          %v672 = vunpack.c.l.b16 %v633
          %v673 = vunpack.c.l.b16 %v634
          %v674 = vunpack.c.l.b16 %v635
          %v675 = vunpack.c.l.b16 %v636
          %v676 = vunpack.c.l.b16 %v637
          %v677 = vpack.c.b16 %v662, %v661
          %v678 = vpack.c.b16 %v664, %v663
          %v679 = vpack.c.b16 %v666, %v665
          %v680 = vpack.c.b16 %v668, %v667
          %v681 = vpack.c.b16 %v670, %v669
          %v682 = vpack.c.b16 %v672, %v671
          %v683 = vpack.c.b16 %v674, %v673
          %v684 = vpack.c.b16 %v676, %v675
          %693 = vmatprep.subr.bf16.mxu0 0
          %694 = vmatpush1.bf16.msra.mxu0 %v684
          %695 = vmatprep.subr.bf16.mxu0 0
          %696 = vmatpush1.bf16.msra.mxu0 %v683
          %697 = vmatprep.subr.bf16.mxu0 0
          %698 = vmatpush1.bf16.msra.mxu0 %v682
          %699 = vmatprep.subr.bf16.mxu0 0
          %700 = vmatpush1.bf16.msra.mxu0 %v681
          %701 = vmatprep.subr.bf16.mxu0 0
          %702 = vmatpush1.bf16.msra.mxu0 %v680
          %703 = vmatprep.subr.bf16.mxu0 0
          %704 = vmatpush1.bf16.msra.mxu0 %v679
          %705 = vmatprep.subr.bf16.mxu0 0
          %706 = vmatpush1.bf16.msra.mxu0 %v678
          %707 = vmatprep.subr.bf16.mxu0 0
          %708 = vmatpush1.bf16.msra.mxu0 %v677
          %709 = vmatprep.subr.bf16.mxu0 0
          %710 = vmatpush2.bf16.msra.mxu0 0
          %711 = vmatprep.subr.bf16.mxu0 0
          %712 = vmatpush2.bf16.msra.mxu0 0
          %713 = vmatprep.subr.bf16.mxu0 0
          %714 = vmatpush2.bf16.msra.mxu0 0
          %715 = vmatprep.subr.bf16.mxu0 0
          %716 = vmatpush2.bf16.msra.mxu0 0
          %717 = vmatprep.subr.bf16.mxu0 0
          %718 = vmatpush2.bf16.msra.mxu0 0
          %719 = vmatprep.subr.bf16.mxu0 0
          %720 = vmatpush2.bf16.msra.mxu0 0
          %721 = vmatprep.subr.bf16.mxu0 0
          %722 = vmatpush2.bf16.msra.mxu0 0
          %723 = vmatprep.subr.bf16.mxu0 0
          %724 = vmatpush2.bf16.msra.mxu0 0
          %725 = vmatprep.mubr.bf16.mxu0 0
          %726 = vmatmul.mubr.bf16.gmra.mxu0 %v621
          %v727 = vpop.f32.mrf.mxu0
          %v728 = vadd.f32 %v643, %v727
          %v729 = vpop.f32.mrf.mxu0
          %v730 = vpop.f32.mrf.mxu0
          %v731 = vpop.f32.mrf.mxu0
          %732 = vdwg.mxu0
          %733 = vst [vmem:[#allocation3] sm:$0x3] %v728
        $region48: #{brain_tumor_cnn_forward.3} parent=39 // pred_fallthru
          _
        // Predicated region
        $region49: #{brain_tumor_cnn_forward.3} parent=39 // pred_check
          %p734 = pneg %p145
        $region50: #{brain_tumor_cnn_forward.3} parent=39 // pred_check_branch
          %736 = sbr.rel (%p734) target = $region52
        $region51: #{brain_tumor_cnn_forward.3} parent=39 // pred_region
          %s738 = ssub.s32 32, 32
          %739 = vsyncadd [#allocation4], %s738
          %s741 = sshll.u32 [#allocation3], 4
          %s742 = int_to_ptr.vmem [resolvable:$true] %s741
          %744 = dma.vmem_to_hbm [thread:$0]  %s742, 32, %s5, [#allocation4]
        $region52: #{brain_tumor_cnn_forward.3} parent=39 // pred_fallthru
          _
        // Predicated region
        $region53: #{brain_tumor_cnn_forward.3} parent=39 // pred_check
          %p745 = pneg %p145
        $region54: #{brain_tumor_cnn_forward.3} parent=39 // pred_check_branch
          %747 = sbr.rel (%p745) target = $region56
        $region55: #{brain_tumor_cnn_forward.3} parent=39 // pred_region
          %748 = dma.done [#allocation4], 32
        $region56: #{brain_tumor_cnn_forward.3} parent=39 // pred_fallthru
          _
      $region40: #{brain_tumor_cnn_forward.3} parent=5 // pred_fallthru
        _
      %p749 = scmp.le.s32.totalorder 2, %s12
      // Predicated region
      $region57: #{brain_tumor_cnn_forward.3} parent=5 // pred_check
        %p750 = pneg %p749
      $region58: #{brain_tumor_cnn_forward.3} parent=5 // pred_check_branch
        %752 = sbr.rel (%p750) target = $region60
      $region59: #{brain_tumor_cnn_forward.3} parent=5 // pred_region
        %s753 = ssub.s32 %s12, 2
      $region60: #{brain_tumor_cnn_forward.3} parent=5 // pred_fallthru
        _
    $region6: #{brain_tumor_cnn_forward.3} parent=1 // loop_footer
      %s16 = sadd.s32 1, %s12
    $region7: #{brain_tumor_cnn_forward.3} parent=1 // loop_footer_branch
      %11 = sbr.rel target = $region3
    $region8: #{brain_tumor_cnn_forward.3} parent=1 // loop_exit
      _
    %754 = vsyncpa [#allocation4], 1
    %s755 = scalar_lea.sflag [#allocation4], 1
    %756 = vsyncpa %s755, 1

// kernel: brain_tumor_cnn_forward.2
$region0: #{brain_tumor_cnn_forward.2}
  #allocation0 [shape = 'u32[]', space=smem, size = 0x4, offset = 0x4, fixed_abs, tag = 'smem constant byte address 0x4 - core index']
  #allocation1 [shape = 'u32[144,128]{1,0:T(1,128)}', space=vmem, size = 0x12000, scoped, tag = 'internal scratch']
  #allocation2 [shape = 'f32[10,10,32]{2,1,0:T(8,128)}', space=vmem, size = 0x14000, scoped, tag = 'scratch operand']
  #allocation3 [shape = 'bf16[64,288]{1,0:T(8,128)(2,1)}', space=vmem, size = 0xc000, scoped, tag = 'scratch operand']
  %s0 = inlined_call_operand.vmem [shape: bf16[2,256,32], index: 0, kind: input, shape index: {}]
  %s1 = inlined_call_operand.vmem [shape: bf16[32,32], index: 1, kind: input, shape index: {}]
  %s2 = inlined_call_operand.vmem [shape: f32[1,32], index: 2, kind: input, shape index: {}]
  %s3 = inlined_call_operand.vmem [shape: bf16[288,64], index: 3, kind: input, shape index: {}]
  %s4 = inlined_call_operand.vmem [shape: f32[1,64], index: 4, kind: input, shape index: {}]
  %s5 = inlined_call_operand.vmem [shape: bf16[2,4,256], index: 5, kind: output, shape index: {}]
  %s6 = sld [smem:[#allocation0]]
  $region53: #{brain_tumor_cnn_forward.2} parent=0
    _
  %s8 = ssub.s32 1, %s6
  %s9 = scalar_select 0, %s8, %s6
  loop: start=0, step=1, limit=4
  $region2: #{brain_tumor_cnn_forward.2} parent=0 // loop_pre_header
    _
  $region3: #{brain_tumor_cnn_forward.2} parent=0 // loop_header
    %s11 = sphi 0, %s15
    %p12 = scmp.ge.s32.totalorder %s11, 4
    %s21 = sphi 0, %s23
    %s24 = sphi 0, %s21
    %s25 = sphi 0, %s24
    %s41 = sphi 0, %s25
    %s45 = sphi 0, %s45
    %s47 = sphi 0, %s45
    %s48 = sphi 0, %s47
    %s62 = sphi 0, %s48
    %s66 = sphi 0, %s66
    %s68 = sphi 0, %s66
    %s69 = sphi 0, %s68
    %s83 = sphi 0, %s69
    %s87 = sphi 0, %s87
    %s89 = sphi 0, %s87
    %s90 = sphi 0, %s89
    %s104 = sphi 0, %s90
    %s108 = sphi 0, %s108
    %s110 = sphi 0, %s108
    %s111 = sphi 0, %s110
    %s125 = sphi 0, %s111
    %s131 = sphi 0, %s133
    %s134 = sphi 0, %s131
    %s135 = sphi 0, %s134
    %s151 = sphi 0, %s135
  $region4: #{brain_tumor_cnn_forward.2} parent=0 // loop_header_branch
    %14 = sbr.rel (%p12) target = $region8
  $region5: #{brain_tumor_cnn_forward.2} parent=0 // loop_body
    %s16 = ssub.s32 %s11, 1
    %s17 = ssub.s32 %s11, 2
    %s18 = sadd.s32 %s11, 1
    %s19 = ssub.s32 %s11, %s18
    %p20 = scmp.eq.s32.totalorder %s19, 0
    %s22 = sadd.s32 %s21, 1
    %s23 = scalar_select %p20, %s21, %s22
    %p26 = pneg %p20
    %p27 = scmp.eq.s32.totalorder %s11, 1
    %p28 = por %p26, %p27
    %p29 = scmp.ne.s32.totalorder %s21, %s24
    %p30 = scmp.eq.s32.totalorder %s11, 0
    %p31 = por %p29, %p30
    %p32 = scmp.ne.s32.totalorder %s21, %s24
    %p33 = scmp.eq.s32.totalorder %s16, 1
    %p34 = por %p32, %p33
    %p35 = scmp.ne.s32.totalorder %s24, %s25
    %p36 = scmp.eq.s32.totalorder %s16, 0
    %p37 = por %p35, %p36
    %p38 = scmp.ne.s32.totalorder %s24, %s25
    %p39 = scmp.eq.s32.totalorder %s17, 1
    %p40 = por %p38, %p39
    %p42 = scmp.ne.s32.totalorder %s25, %s41
    %p43 = scmp.eq.s32.totalorder %s17, 0
    %p44 = por %p42, %p43
    %s46 = sadd.s32 %s45, 1
    %p49 = scmp.eq.s32.totalorder %s11, 1
    %p50 = scmp.ne.s32.totalorder %s45, %s47
    %p51 = scmp.eq.s32.totalorder %s11, 0
    %p52 = por %p50, %p51
    %p53 = scmp.ne.s32.totalorder %s45, %s47
    %p54 = scmp.eq.s32.totalorder %s16, 1
    %p55 = por %p53, %p54
    %p56 = scmp.ne.s32.totalorder %s47, %s48
    %p57 = scmp.eq.s32.totalorder %s16, 0
    %p58 = por %p56, %p57
    %p59 = scmp.ne.s32.totalorder %s47, %s48
    %p60 = scmp.eq.s32.totalorder %s17, 1
    %p61 = por %p59, %p60
    %p63 = scmp.ne.s32.totalorder %s48, %s62
    %p64 = scmp.eq.s32.totalorder %s17, 0
    %p65 = por %p63, %p64
    %s67 = sadd.s32 %s66, 1
    %p70 = scmp.eq.s32.totalorder %s11, 1
    %p71 = scmp.ne.s32.totalorder %s66, %s68
    %p72 = scmp.eq.s32.totalorder %s11, 0
    %p73 = por %p71, %p72
    %p74 = scmp.ne.s32.totalorder %s66, %s68
    %p75 = scmp.eq.s32.totalorder %s16, 1
    %p76 = por %p74, %p75
    %p77 = scmp.ne.s32.totalorder %s68, %s69
    %p78 = scmp.eq.s32.totalorder %s16, 0
    %p79 = por %p77, %p78
    %p80 = scmp.ne.s32.totalorder %s68, %s69
    %p81 = scmp.eq.s32.totalorder %s17, 1
    %p82 = por %p80, %p81
    %p84 = scmp.ne.s32.totalorder %s69, %s83
    %p85 = scmp.eq.s32.totalorder %s17, 0
    %p86 = por %p84, %p85
    %s88 = sadd.s32 %s87, 1
    %p91 = scmp.eq.s32.totalorder %s11, 1
    %p92 = scmp.ne.s32.totalorder %s87, %s89
    %p93 = scmp.eq.s32.totalorder %s11, 0
    %p94 = por %p92, %p93
    %p95 = scmp.ne.s32.totalorder %s87, %s89
    %p96 = scmp.eq.s32.totalorder %s16, 1
    %p97 = por %p95, %p96
    %p98 = scmp.ne.s32.totalorder %s89, %s90
    %p99 = scmp.eq.s32.totalorder %s16, 0
    %p100 = por %p98, %p99
    %p101 = scmp.ne.s32.totalorder %s89, %s90
    %p102 = scmp.eq.s32.totalorder %s17, 1
    %p103 = por %p101, %p102
    %p105 = scmp.ne.s32.totalorder %s90, %s104
    %p106 = scmp.eq.s32.totalorder %s17, 0
    %p107 = por %p105, %p106
    %s109 = sadd.s32 %s108, 1
    %p112 = scmp.eq.s32.totalorder %s11, 1
    %p113 = scmp.ne.s32.totalorder %s108, %s110
    %p114 = scmp.eq.s32.totalorder %s11, 0
    %p115 = por %p113, %p114
    %p116 = scmp.ne.s32.totalorder %s108, %s110
    %p117 = scmp.eq.s32.totalorder %s16, 1
    %p118 = por %p116, %p117
    %p119 = scmp.ne.s32.totalorder %s110, %s111
    %p120 = scmp.eq.s32.totalorder %s16, 0
    %p121 = por %p119, %p120
    %p122 = scmp.ne.s32.totalorder %s110, %s111
    %p123 = scmp.eq.s32.totalorder %s17, 1
    %p124 = por %p122, %p123
    %p126 = scmp.ne.s32.totalorder %s111, %s125
    %p127 = scmp.eq.s32.totalorder %s17, 0
    %p128 = por %p126, %p127
    %s129 = ssub.s32 %s11, %s18
    %p130 = scmp.eq.s32.totalorder %s129, 0
    %s132 = sadd.s32 %s131, 1
    %s133 = scalar_select %p130, %s131, %s132
    %p136 = pneg %p130
    %p137 = scmp.eq.s32.totalorder %s11, 1
    %p138 = por %p136, %p137
    %p139 = scmp.ne.s32.totalorder %s131, %s134
    %p140 = scmp.eq.s32.totalorder %s11, 0
    %p141 = por %p139, %p140
    %p142 = scmp.ne.s32.totalorder %s131, %s134
    %p143 = scmp.eq.s32.totalorder %s16, 1
    %p144 = por %p142, %p143
    %p145 = scmp.ne.s32.totalorder %s134, %s135
    %p146 = scmp.eq.s32.totalorder %s16, 0
    %p147 = por %p145, %p146
    %p148 = scmp.ne.s32.totalorder %s134, %s135
    %p149 = scmp.eq.s32.totalorder %s17, 1
    %p150 = por %p148, %p149
    %p152 = scmp.ne.s32.totalorder %s135, %s151
    %p153 = scmp.eq.s32.totalorder %s17, 0
    %p154 = por %p152, %p153
    %p155 = scmp.le.s32.totalorder 1, %s11
    %p156 = scmp.lt.s32.totalorder %s11, 3
    %p157 = pnand %p155, %p156
    %p158 = pneg %p157
    // Predicated region
    $region9: #{brain_tumor_cnn_forward.2} parent=5 // pred_check
      _
    $region10: #{brain_tumor_cnn_forward.2} parent=5 // pred_check_branch
      %160 = sbr.rel (%p157) target = $region12
    $region11: #{brain_tumor_cnn_forward.2} parent=5 // pred_region
      %s161 = ssub.s32 %s11, 1
      // Predicated region
      $region13: #{brain_tumor_cnn_forward.2} parent=11 // pred_check
        %p162 = pneg %p58
      $region14: #{brain_tumor_cnn_forward.2} parent=11 // pred_check_branch
        %164 = sbr.rel (%p162) target = $region16
      $region15: #{brain_tumor_cnn_forward.2} parent=11 // pred_region
        _
      $region16: #{brain_tumor_cnn_forward.2} parent=11 // pred_fallthru
        _
      // Predicated region
      $region17: #{brain_tumor_cnn_forward.2} parent=11 // pred_check
        %p165 = pneg %p79
      $region18: #{brain_tumor_cnn_forward.2} parent=11 // pred_check_branch
        %167 = sbr.rel (%p165) target = $region20
      $region19: #{brain_tumor_cnn_forward.2} parent=11 // pred_region
        _
      $region20: #{brain_tumor_cnn_forward.2} parent=11 // pred_fallthru
        _
      // Predicated region
      $region21: #{brain_tumor_cnn_forward.2} parent=11 // pred_check
        %p168 = pneg %p100
      $region22: #{brain_tumor_cnn_forward.2} parent=11 // pred_check_branch
        %170 = sbr.rel (%p168) target = $region24
      $region23: #{brain_tumor_cnn_forward.2} parent=11 // pred_region
        _
      $region24: #{brain_tumor_cnn_forward.2} parent=11 // pred_fallthru
        _
      // Predicated region
      $region25: #{brain_tumor_cnn_forward.2} parent=11 // pred_check
        %p171 = pneg %p121
      $region26: #{brain_tumor_cnn_forward.2} parent=11 // pred_check_branch
        %173 = sbr.rel (%p171) target = $region28
      $region27: #{brain_tumor_cnn_forward.2} parent=11 // pred_region
        _
      $region28: #{brain_tumor_cnn_forward.2} parent=11 // pred_fallthru
        _
    $region12: #{brain_tumor_cnn_forward.2} parent=5 // pred_fallthru
      _
    %p174 = scmp.lt.s32.totalorder %s11, 2
    // Predicated region
    $region29: #{brain_tumor_cnn_forward.2} parent=5 // pred_check
      %p175 = pneg %p174
    $region30: #{brain_tumor_cnn_forward.2} parent=5 // pred_check_branch
      %177 = sbr.rel (%p175) target = $region32
    $region31: #{brain_tumor_cnn_forward.2} parent=5 // pred_region
      // Predicated region
      $region33: #{brain_tumor_cnn_forward.2} parent=31 // pred_check
        %p178 = pneg %p31
      $region34: #{brain_tumor_cnn_forward.2} parent=31 // pred_check_branch
        %180 = sbr.rel (%p178) target = $region36
      $region35: #{brain_tumor_cnn_forward.2} parent=31 // pred_region
        %p181 = scmp.lt.s32.totalorder %s11, 1
        %s182 = scalar_select %p181, %s11, 1
        %s183 = smul.addr %s182, 32
        %s184 = smul.addr %s183, 4
        %s185 = scalar_lea.vmem %s0, %s184
      $region36: #{brain_tumor_cnn_forward.2} parent=31 // pred_fallthru
        _
    $region32: #{brain_tumor_cnn_forward.2} parent=5 // pred_fallthru
      _
    %p186 = scmp.le.s32.totalorder 1, %s11
    %p187 = scmp.lt.s32.totalorder %s11, 3
    %p188 = pnand %p186, %p187
    %p189 = pneg %p188
    // Predicated region
    $region37: #{brain_tumor_cnn_forward.2} parent=5 // pred_check
      _
    $region38: #{brain_tumor_cnn_forward.2} parent=5 // pred_check_branch
      %191 = sbr.rel (%p188) target = $region40
    $region39: #{brain_tumor_cnn_forward.2} parent=5 // pred_region
      %s192 = ssub.s32 %s11, 1
      %p193 = scmp.lt.s32.totalorder %s16, 1
      %s194 = scalar_select %p193, %s16, 1
      %s195 = smul.addr %s194, 32
      %s196 = smul.addr %s195, 4
      %s197 = scalar_lea.vmem %s0, %s196
      %p198 = pneg %p37
      %p199 = pneg %p34
      %p200 = pneg %p58
      %p201 = pneg %p55
      %p202 = pneg %p79
      %p203 = pneg %p76
      %p204 = pneg %p100
      %p205 = pneg %p97
      %p206 = pneg %p121
      %p207 = pneg %p118
      %p208 = pneg %p147
      %p209 = pneg %p144
      %p210 = scmp.lt.s32.totalorder %s16, 1
      %s211 = scalar_select %p210, %s16, 1
      %s212 = smul.addr %s211, 2
      %s213 = smul.addr %s212, 2
      %s214 = scalar_lea.vmem %s5, %s213
      %p215 = scmp.lt.s32.totalorder %s16, 1
      %s216 = scalar_select %p215, %s16, 1
      %s217 = smul.addr %s216, 32
      %s218 = smul.addr %s217, 4
      %s219 = scalar_lea.vmem %s0, %s218
      %p220 = scmp.lt.s32.totalorder %s16, 1
      %s221 = scalar_select %p220, %s16, 1
      %s222 = smul.addr %s221, 2
      %s223 = smul.addr %s222, 2
      %s224 = scalar_lea.vmem %s5, %s223
      %v226 = vld [vmem:[%s219] sm:$0xf]
      %v227 = vld [vmem:[%s219 + $0x4] sm:$0xf]
      %v228 = vld [vmem:[%s219 + $0x8] sm:$0xf]
      %v229 = vld [vmem:[%s219 + $0xc] sm:$0xf]
      %v230 = vld [vmem:[%s219 + $0x10] sm:$0xf]
      %v231 = vld [vmem:[%s219 + $0x14] sm:$0xf]
      %v232 = vld [vmem:[%s219 + $0x18] sm:$0xf]
      %v233 = vld [vmem:[%s219 + $0x1c] sm:$0xf]
      %v234 = vld [vmem:[%s219 + $0x20] sm:$0xf]
      %v235 = vld [vmem:[%s219 + $0x24] sm:$0xf]
      %v236 = vld [vmem:[%s219 + $0x28] sm:$0xf]
      %v237 = vld [vmem:[%s219 + $0x2c] sm:$0xf]
      %v238 = vld [vmem:[%s219 + $0x30] sm:$0xf]
      %v239 = vld [vmem:[%s219 + $0x34] sm:$0xf]
      %v240 = vld [vmem:[%s219 + $0x38] sm:$0xf]
      %v241 = vld [vmem:[%s219 + $0x3c] sm:$0xf]
      %v242 = vld [vmem:[%s219 + $0x40] sm:$0xf]
      %v243 = vld [vmem:[%s219 + $0x44] sm:$0xf]
      %v244 = vld [vmem:[%s219 + $0x48] sm:$0xf]
      %v245 = vld [vmem:[%s219 + $0x4c] sm:$0xf]
      %v246 = vld [vmem:[%s219 + $0x50] sm:$0xf]
      %v247 = vld [vmem:[%s219 + $0x54] sm:$0xf]
      %v248 = vld [vmem:[%s219 + $0x58] sm:$0xf]
      %v249 = vld [vmem:[%s219 + $0x5c] sm:$0xf]
      %v250 = vld [vmem:[%s219 + $0x60] sm:$0xf]
      %v251 = vld [vmem:[%s219 + $0x64] sm:$0xf]
      %v252 = vld [vmem:[%s219 + $0x68] sm:$0xf]
      %v253 = vld [vmem:[%s219 + $0x6c] sm:$0xf]
      %v254 = vld [vmem:[%s219 + $0x70] sm:$0xf]
      %v255 = vld [vmem:[%s219 + $0x74] sm:$0xf]
      %v256 = vld [vmem:[%s219 + $0x78] sm:$0xf]
      %v257 = vld [vmem:[%s219 + $0x7c] sm:$0xf]
      %v258 = vld [vmem:[%s1] sm:$0xf]
      %v259 = vld [vmem:[%s1 + $0x4] sm:$0xf]
      %v260 = vld [vmem:[%s1 + $0x8] sm:$0xf]
      %v261 = vld [vmem:[%s1 + $0xc] sm:$0xf]
      %v262 = vld [vmem:[%s2] sm:$0x1]
      %v264 = vlaneseq
      %v265 = vshrl.u32 %v264, 7
      %v266 = vsub.s32 0, %v265
      %v267 = vrot.slane %v262, %v266
      %v301 = vunpack.c.l.b16 %v226
      %v302 = vunpack.c.l.b16 %v227
      %v303 = vunpack.c.l.b16 %v228
      %v304 = vunpack.c.l.b16 %v229
      %v305 = vunpack.c.l.b16 %v230
      %v306 = vunpack.c.l.b16 %v231
      %v307 = vunpack.c.l.b16 %v232
      %v308 = vunpack.c.l.b16 %v233
      %v309 = vunpack.c.l.b16 %v234
      %v310 = vunpack.c.l.b16 %v235
      %v311 = vunpack.c.l.b16 %v236
      %v312 = vunpack.c.l.b16 %v237
      %v313 = vunpack.c.l.b16 %v238
      %v314 = vunpack.c.l.b16 %v239
      %v315 = vunpack.c.l.b16 %v240
      %v316 = vunpack.c.l.b16 %v241
      %v317 = vunpack.c.l.b16 %v242
      %v318 = vunpack.c.l.b16 %v243
      %v319 = vunpack.c.l.b16 %v244
      %v320 = vunpack.c.l.b16 %v245
      %v321 = vunpack.c.l.b16 %v246
      %v322 = vunpack.c.l.b16 %v247
      %v323 = vunpack.c.l.b16 %v248
      %v324 = vunpack.c.l.b16 %v249
      %v325 = vunpack.c.l.b16 %v250
      %v326 = vunpack.c.l.b16 %v251
      %v327 = vunpack.c.l.b16 %v252
      %v328 = vunpack.c.l.b16 %v253
      %v329 = vunpack.c.l.b16 %v254
      %v330 = vunpack.c.l.b16 %v255
      %v331 = vunpack.c.l.b16 %v256
      %v332 = vunpack.c.l.b16 %v257
      %v333 = vpack.c.b16 %v302, %v301
      %v334 = vpack.c.b16 %v304, %v303
      %v335 = vpack.c.b16 %v306, %v305
      %v336 = vpack.c.b16 %v308, %v307
      %v337 = vpack.c.b16 %v310, %v309
      %v338 = vpack.c.b16 %v312, %v311
      %v339 = vpack.c.b16 %v314, %v313
      %v340 = vpack.c.b16 %v316, %v315
      %v341 = vpack.c.b16 %v318, %v317
      %v342 = vpack.c.b16 %v320, %v319
      %v343 = vpack.c.b16 %v322, %v321
      %v344 = vpack.c.b16 %v324, %v323
      %v345 = vpack.c.b16 %v326, %v325
      %v346 = vpack.c.b16 %v328, %v327
      %v347 = vpack.c.b16 %v330, %v329
      %v348 = vpack.c.b16 %v332, %v331
      %v353 = vunpack.c.l.b16 %v258
      %v354 = vunpack.c.l.b16 %v259
      %v355 = vunpack.c.l.b16 %v260
      %v356 = vunpack.c.l.b16 %v261
      %v357 = vpack.c.b16 %v354, %v353
      %v358 = vpack.c.b16 %v356, %v355
      %vm361 = vcmask 261120
      %v363 = vsel %vm361, %v333, 0
      %v366 = vsel %vm361, %v334, 0
      %v369 = vsel %vm361, %v335, 0
      %v372 = vsel %vm361, %v336, 0
      %v375 = vsel %vm361, %v337, 0
      %v378 = vsel %vm361, %v338, 0
      %v381 = vsel %vm361, %v339, 0
      %v384 = vsel %vm361, %v340, 0
      %v387 = vsel %vm361, %v341, 0
      %v390 = vsel %vm361, %v342, 0
      %v393 = vsel %vm361, %v343, 0
      %v396 = vsel %vm361, %v344, 0
      %v399 = vsel %vm361, %v345, 0
      %v402 = vsel %vm361, %v346, 0
      %v405 = vsel %vm361, %v347, 0
      %v408 = vsel %vm361, %v348, 0
      %410 = vmatprep.subr.bf16.mxu0 0
      %411 = vmatpush1.bf16.msra.mxu0 0
      %412 = vmatprep.subr.bf16.mxu0 0
      %413 = vmatpush1.bf16.msra.mxu0 0
      %414 = vmatprep.subr.bf16.mxu0 0
      %415 = vmatpush1.bf16.msra.mxu0 0
      %416 = vmatprep.subr.bf16.mxu0 0
      %417 = vmatpush1.bf16.msra.mxu0 0
      %418 = vmatprep.subr.bf16.mxu0 0
      %419 = vmatpush1.bf16.msra.mxu0 0
      %420 = vmatprep.subr.bf16.mxu0 0
      %421 = vmatpush1.bf16.msra.mxu0 0
      %422 = vmatprep.subr.bf16.mxu0 0
      %423 = vmatpush1.bf16.msra.mxu0 %v358
      %424 = vmatprep.subr.bf16.mxu0 0
      %425 = vmatpush1.bf16.msra.mxu0 %v357
      %426 = vmatprep.subr.bf16.mxu0 0
      %427 = vmatpush2.bf16.msra.mxu0 0
      %428 = vmatprep.subr.bf16.mxu0 0
      %429 = vmatpush2.bf16.msra.mxu0 0
      %430 = vmatprep.subr.bf16.mxu0 0
      %431 = vmatpush2.bf16.msra.mxu0 0
      %432 = vmatprep.subr.bf16.mxu0 0
      %433 = vmatpush2.bf16.msra.mxu0 0
      %434 = vmatprep.subr.bf16.mxu0 0
      %435 = vmatpush2.bf16.msra.mxu0 0
      %436 = vmatprep.subr.bf16.mxu0 0
      %437 = vmatpush2.bf16.msra.mxu0 0
      %438 = vmatprep.subr.bf16.mxu0 0
      %439 = vmatpush2.bf16.msra.mxu0 0
      %440 = vmatprep.subr.bf16.mxu0 0
      %441 = vmatpush2.bf16.msra.mxu0 0
      %442 = vmatprep.mubr.bf16.mxu0 0
      %443 = vmatmul.mubr.bf16.gmra.mxu0 %v363
      %v444 = vpop.f32.mrf.mxu0
      %v445 = vadd.f32 %v267, %v444
      %v446 = vpop.f32.mrf.mxu0
      %v447 = vpop.f32.mrf.mxu0
      %v448 = vadd.f32 %v267, %v447
      %v449 = vpop.f32.mrf.mxu0
      %450 = vmatprep.mubr.bf16.mxu0 0
      %451 = vmatmul.mubr.bf16.gmra.mxu0 %v366
      %v452 = vpop.f32.mrf.mxu0
      %v453 = vadd.f32 %v267, %v452
      %v454 = vpop.f32.mrf.mxu0
      %v455 = vpop.f32.mrf.mxu0
      %v456 = vadd.f32 %v267, %v455
      %v457 = vpop.f32.mrf.mxu0
      %458 = vmatprep.mubr.bf16.mxu0 0
      %459 = vmatmul.mubr.bf16.gmra.mxu0 %v369
      %v460 = vpop.f32.mrf.mxu0
      %v461 = vadd.f32 %v267, %v460
      %v462 = vpop.f32.mrf.mxu0
      %v463 = vpop.f32.mrf.mxu0
      %v464 = vadd.f32 %v267, %v463
      %v465 = vpop.f32.mrf.mxu0
      %466 = vmatprep.mubr.bf16.mxu0 0
      %467 = vmatmul.mubr.bf16.gmra.mxu0 %v372
      %v468 = vpop.f32.mrf.mxu0
      %v469 = vadd.f32 %v267, %v468
      %v470 = vpop.f32.mrf.mxu0
      %v471 = vpop.f32.mrf.mxu0
      %v472 = vadd.f32 %v267, %v471
      %v473 = vpop.f32.mrf.mxu0
      %474 = vmatprep.mubr.bf16.mxu0 0
      %475 = vmatmul.mubr.bf16.gmra.mxu0 %v375
      %v476 = vpop.f32.mrf.mxu0
      %v477 = vadd.f32 %v267, %v476
      %v478 = vpop.f32.mrf.mxu0
      %v479 = vpop.f32.mrf.mxu0
      %v480 = vadd.f32 %v267, %v479
      %v481 = vpop.f32.mrf.mxu0
      %482 = vmatprep.mubr.bf16.mxu0 0
      %483 = vmatmul.mubr.bf16.gmra.mxu0 %v378
      %v484 = vpop.f32.mrf.mxu0
      %v485 = vadd.f32 %v267, %v484
      %v486 = vpop.f32.mrf.mxu0
      %v487 = vpop.f32.mrf.mxu0
      %v488 = vadd.f32 %v267, %v487
      %v489 = vpop.f32.mrf.mxu0
      %490 = vmatprep.mubr.bf16.mxu0 0
      %491 = vmatmul.mubr.bf16.gmra.mxu0 %v381
      %v492 = vpop.f32.mrf.mxu0
      %v493 = vadd.f32 %v267, %v492
      %v494 = vpop.f32.mrf.mxu0
      %v495 = vpop.f32.mrf.mxu0
      %v496 = vadd.f32 %v267, %v495
      %v497 = vpop.f32.mrf.mxu0
      %498 = vmatprep.mubr.bf16.mxu0 0
      %499 = vmatmul.mubr.bf16.gmra.mxu0 %v384
      %v500 = vpop.f32.mrf.mxu0
      %v501 = vadd.f32 %v267, %v500
      %v502 = vpop.f32.mrf.mxu0
      %v503 = vpop.f32.mrf.mxu0
      %v504 = vadd.f32 %v267, %v503
      %v505 = vpop.f32.mrf.mxu0
      %506 = vmatprep.mubr.bf16.mxu0 0
      %507 = vmatmul.mubr.bf16.gmra.mxu0 %v387
      %v508 = vpop.f32.mrf.mxu0
      %v509 = vadd.f32 %v267, %v508
      %v510 = vpop.f32.mrf.mxu0
      %v511 = vpop.f32.mrf.mxu0
      %v512 = vadd.f32 %v267, %v511
      %v513 = vpop.f32.mrf.mxu0
      %514 = vmatprep.mubr.bf16.mxu0 0
      %515 = vmatmul.mubr.bf16.gmra.mxu0 %v390
      %v516 = vpop.f32.mrf.mxu0
      %v517 = vadd.f32 %v267, %v516
      %v518 = vpop.f32.mrf.mxu0
      %v519 = vpop.f32.mrf.mxu0
      %v520 = vadd.f32 %v267, %v519
      %v521 = vpop.f32.mrf.mxu0
      %522 = vmatprep.mubr.bf16.mxu0 0
      %523 = vmatmul.mubr.bf16.gmra.mxu0 %v393
      %v524 = vpop.f32.mrf.mxu0
      %v525 = vadd.f32 %v267, %v524
      %v526 = vpop.f32.mrf.mxu0
      %v527 = vpop.f32.mrf.mxu0
      %v528 = vadd.f32 %v267, %v527
      %v529 = vpop.f32.mrf.mxu0
      %530 = vmatprep.mubr.bf16.mxu0 0
      %531 = vmatmul.mubr.bf16.gmra.mxu0 %v396
      %v532 = vpop.f32.mrf.mxu0
      %v533 = vadd.f32 %v267, %v532
      %v534 = vpop.f32.mrf.mxu0
      %v535 = vpop.f32.mrf.mxu0
      %v536 = vadd.f32 %v267, %v535
      %v537 = vpop.f32.mrf.mxu0
      %538 = vmatprep.mubr.bf16.mxu0 0
      %539 = vmatmul.mubr.bf16.gmra.mxu0 %v399
      %v540 = vpop.f32.mrf.mxu0
      %v541 = vadd.f32 %v267, %v540
      %v542 = vpop.f32.mrf.mxu0
      %v543 = vpop.f32.mrf.mxu0
      %v544 = vadd.f32 %v267, %v543
      %v545 = vpop.f32.mrf.mxu0
      %546 = vmatprep.mubr.bf16.mxu0 0
      %547 = vmatmul.mubr.bf16.gmra.mxu0 %v402
      %v548 = vpop.f32.mrf.mxu0
      %v549 = vadd.f32 %v267, %v548
      %v550 = vpop.f32.mrf.mxu0
      %v551 = vpop.f32.mrf.mxu0
      %v552 = vadd.f32 %v267, %v551
      %v553 = vpop.f32.mrf.mxu0
      %554 = vmatprep.mubr.bf16.mxu0 0
      %555 = vmatmul.mubr.bf16.gmra.mxu0 %v405
      %v556 = vpop.f32.mrf.mxu0
      %v557 = vadd.f32 %v267, %v556
      %v558 = vpop.f32.mrf.mxu0
      %v559 = vpop.f32.mrf.mxu0
      %v560 = vadd.f32 %v267, %v559
      %v561 = vpop.f32.mrf.mxu0
      %562 = vmatprep.mubr.bf16.mxu0 0
      %563 = vmatmul.mubr.bf16.gmra.mxu0 %v408
      %v564 = vpop.f32.mrf.mxu0
      %v565 = vadd.f32 %v267, %v564
      %v566 = vpop.f32.mrf.mxu0
      %v567 = vpop.f32.mrf.mxu0
      %v568 = vadd.f32 %v267, %v567
      %v569 = vpop.f32.mrf.mxu0
      %570 = vdwg.mxu0
      %v571 = vmax.f32 %v445, 0.0
      %v572 = vmax.f32 %v448, 0.0
      %v573 = vmax.f32 %v453, 0.0
      %v574 = vmax.f32 %v456, 0.0
      %v575 = vmax.f32 %v461, 0.0
      %v576 = vmax.f32 %v464, 0.0
      %v577 = vmax.f32 %v469, 0.0
      %v578 = vmax.f32 %v472, 0.0
      %v579 = vmax.f32 %v477, 0.0
      %v580 = vmax.f32 %v480, 0.0
      %v581 = vmax.f32 %v485, 0.0
      %v582 = vmax.f32 %v488, 0.0
      %v583 = vmax.f32 %v493, 0.0
      %v584 = vmax.f32 %v496, 0.0
      %v585 = vmax.f32 %v501, 0.0
      %v586 = vmax.f32 %v504, 0.0
      %v587 = vmax.f32 %v509, 0.0
      %v588 = vmax.f32 %v512, 0.0
      %v589 = vmax.f32 %v517, 0.0
      %v590 = vmax.f32 %v520, 0.0
      %v591 = vmax.f32 %v525, 0.0
      %v592 = vmax.f32 %v528, 0.0
      %v593 = vmax.f32 %v533, 0.0
      %v594 = vmax.f32 %v536, 0.0
      %v595 = vmax.f32 %v541, 0.0
      %v596 = vmax.f32 %v544, 0.0
      %v597 = vmax.f32 %v549, 0.0
      %v598 = vmax.f32 %v552, 0.0
      %v599 = vmax.f32 %v557, 0.0
      %v600 = vmax.f32 %v560, 0.0
      %v601 = vmax.f32 %v565, 0.0
      %v602 = vmax.f32 %v568, 0.0
      %v603 = vmax.f32 %v571, %v573
      %v604 = vmax.f32 %v572, %v574
      %v605 = vmax.f32 %v575, %v577
      %v606 = vmax.f32 %v576, %v578
      %v607 = vmax.f32 %v579, %v581
      %v608 = vmax.f32 %v580, %v582
      %v609 = vmax.f32 %v583, %v585
      %v610 = vmax.f32 %v584, %v586
      %v611 = vmax.f32 %v587, %v589
      %v612 = vmax.f32 %v588, %v590
      %v613 = vmax.f32 %v591, %v593
      %v614 = vmax.f32 %v592, %v594
      %v615 = vmax.f32 %v595, %v597
      %v616 = vmax.f32 %v596, %v598
      %v617 = vmax.f32 %v599, %v601
      %v618 = vmax.f32 %v600, %v602
      %v635 = vcombine.high %v603, %v603
      %v637 = vunpack.c.l.s4 1983009808
      %v638 = vunpack.c.0.s8 %v637
      %v639 = vlaneseq
      %v640 = vshrl.u32 %v639, 7
      %v641 = vsub.s32 %v638, %v640
      %v642 = vrot.slane %v603, %v641
      %v644 = vunpack.c.l.s4 1983009808
      %v645 = vunpack.c.0.s8 %v644
      %v646 = vlaneseq
      %v647 = vshrl.u32 %v646, 7
      %v648 = vsub.s32 %v645, %v647
      %v649 = vrot.slane %v635, %v648
      %v650 = vcombine.high %v642, %v642
      %v651 = vcombine.high %v649, %v649
      %v652 = vcombine.high %v604, %v604
      %v654 = vunpack.c.l.s4 1983009808
      %v655 = vunpack.c.0.s8 %v654
      %v656 = vlaneseq
      %v657 = vshrl.u32 %v656, 7
      %v658 = vsub.s32 %v655, %v657
      %v659 = vrot.slane %v604, %v658
      %v661 = vunpack.c.l.s4 1983009808
      %v662 = vunpack.c.0.s8 %v661
      %v663 = vlaneseq
      %v664 = vshrl.u32 %v663, 7
      %v665 = vsub.s32 %v662, %v664
      %v666 = vrot.slane %v652, %v665
      %v667 = vcombine.high %v659, %v659
      %v668 = vcombine.high %v666, %v666
      %v669 = vcombine.high %v605, %v605
      %v671 = vunpack.c.l.s4 1983009808
      %v672 = vunpack.c.0.s8 %v671
      %v673 = vlaneseq
      %v674 = vshrl.u32 %v673, 7
      %v675 = vsub.s32 %v672, %v674
      %v676 = vrot.slane %v605, %v675
      %v678 = vunpack.c.l.s4 1983009808
      %v679 = vunpack.c.0.s8 %v678
      %v680 = vlaneseq
      %v681 = vshrl.u32 %v680, 7
      %v682 = vsub.s32 %v679, %v681
      %v683 = vrot.slane %v669, %v682
      %v684 = vcombine.high %v676, %v676
      %v685 = vcombine.high %v683, %v683
      %v686 = vcombine.high %v606, %v606
      %v688 = vunpack.c.l.s4 1983009808
      %v689 = vunpack.c.0.s8 %v688
      %v690 = vlaneseq
      %v691 = vshrl.u32 %v690, 7
      %v692 = vsub.s32 %v689, %v691
      %v693 = vrot.slane %v606, %v692
      %v695 = vunpack.c.l.s4 1983009808
      %v696 = vunpack.c.0.s8 %v695
      %v697 = vlaneseq
      %v698 = vshrl.u32 %v697, 7
      %v699 = vsub.s32 %v696, %v698
      %v700 = vrot.slane %v686, %v699
      %v701 = vcombine.high %v693, %v693
      %v702 = vcombine.high %v700, %v700
      %v703 = vcombine.high %v607, %v607
      %v705 = vunpack.c.l.s4 1983009808
      %v706 = vunpack.c.0.s8 %v705
      %v707 = vlaneseq
      %v708 = vshrl.u32 %v707, 7
      %v709 = vsub.s32 %v706, %v708
      %v710 = vrot.slane %v607, %v709
      %v712 = vunpack.c.l.s4 1983009808
      %v713 = vunpack.c.0.s8 %v712
      %v714 = vlaneseq
      %v715 = vshrl.u32 %v714, 7
      %v716 = vsub.s32 %v713, %v715
      %v717 = vrot.slane %v703, %v716
      %v718 = vcombine.high %v710, %v710
      %v719 = vcombine.high %v717, %v717
      %v720 = vcombine.high %v608, %v608
      %v722 = vunpack.c.l.s4 1983009808
      %v723 = vunpack.c.0.s8 %v722
      %v724 = vlaneseq
      %v725 = vshrl.u32 %v724, 7
      %v726 = vsub.s32 %v723, %v725
      %v727 = vrot.slane %v608, %v726
      %v729 = vunpack.c.l.s4 1983009808
      %v730 = vunpack.c.0.s8 %v729
      %v731 = vlaneseq
      %v732 = vshrl.u32 %v731, 7
      %v733 = vsub.s32 %v730, %v732
      %v734 = vrot.slane %v720, %v733
      %v735 = vcombine.high %v727, %v727
      %v736 = vcombine.high %v734, %v734
      %v737 = vcombine.high %v609, %v609
      %v739 = vunpack.c.l.s4 1983009808
      %v740 = vunpack.c.0.s8 %v739
      %v741 = vlaneseq
      %v742 = vshrl.u32 %v741, 7
      %v743 = vsub.s32 %v740, %v742
      %v744 = vrot.slane %v609, %v743
      %v746 = vunpack.c.l.s4 1983009808
      %v747 = vunpack.c.0.s8 %v746
      %v748 = vlaneseq
      %v749 = vshrl.u32 %v748, 7
      %v750 = vsub.s32 %v747, %v749
      %v751 = vrot.slane %v737, %v750
      %v752 = vcombine.high %v744, %v744
      %v753 = vcombine.high %v751, %v751
      %v754 = vcombine.high %v610, %v610
      %v756 = vunpack.c.l.s4 1983009808
      %v757 = vunpack.c.0.s8 %v756
      %v758 = vlaneseq
      %v759 = vshrl.u32 %v758, 7
      %v760 = vsub.s32 %v757, %v759
      %v761 = vrot.slane %v610, %v760
      %v763 = vunpack.c.l.s4 1983009808
      %v764 = vunpack.c.0.s8 %v763
      %v765 = vlaneseq
      %v766 = vshrl.u32 %v765, 7
      %v767 = vsub.s32 %v764, %v766
      %v768 = vrot.slane %v754, %v767
      %v769 = vcombine.high %v761, %v761
      %v770 = vcombine.high %v768, %v768
      %v771 = vcombine.high %v611, %v611
      %v773 = vunpack.c.l.s4 1983009808
      %v774 = vunpack.c.0.s8 %v773
      %v775 = vlaneseq
      %v776 = vshrl.u32 %v775, 7
      %v777 = vsub.s32 %v774, %v776
      %v778 = vrot.slane %v611, %v777
      %v780 = vunpack.c.l.s4 1983009808
      %v781 = vunpack.c.0.s8 %v780
      %v782 = vlaneseq
      %v783 = vshrl.u32 %v782, 7
      %v784 = vsub.s32 %v781, %v783
      %v785 = vrot.slane %v771, %v784
      %v786 = vcombine.high %v778, %v778
      %v787 = vcombine.high %v785, %v785
      %v788 = vcombine.high %v612, %v612
      %v790 = vunpack.c.l.s4 1983009808
      %v791 = vunpack.c.0.s8 %v790
      %v792 = vlaneseq
      %v793 = vshrl.u32 %v792, 7
      %v794 = vsub.s32 %v791, %v793
      %v795 = vrot.slane %v612, %v794
      %v797 = vunpack.c.l.s4 1983009808
      %v798 = vunpack.c.0.s8 %v797
      %v799 = vlaneseq
      %v800 = vshrl.u32 %v799, 7
      %v801 = vsub.s32 %v798, %v800
      %v802 = vrot.slane %v788, %v801
      %v803 = vcombine.high %v795, %v795
      %v804 = vcombine.high %v802, %v802
      %v805 = vcombine.high %v613, %v613
      %v807 = vunpack.c.l.s4 1983009808
      %v808 = vunpack.c.0.s8 %v807
      %v809 = vlaneseq
      %v810 = vshrl.u32 %v809, 7
      %v811 = vsub.s32 %v808, %v810
      %v812 = vrot.slane %v613, %v811
      %v814 = vunpack.c.l.s4 1983009808
      %v815 = vunpack.c.0.s8 %v814
      %v816 = vlaneseq
      %v817 = vshrl.u32 %v816, 7
      %v818 = vsub.s32 %v815, %v817
      %v819 = vrot.slane %v805, %v818
      %v820 = vcombine.high %v812, %v812
      %v821 = vcombine.high %v819, %v819
      %v822 = vcombine.high %v614, %v614
      %v824 = vunpack.c.l.s4 1983009808
      %v825 = vunpack.c.0.s8 %v824
      %v826 = vlaneseq
      %v827 = vshrl.u32 %v826, 7
      %v828 = vsub.s32 %v825, %v827
      %v829 = vrot.slane %v614, %v828
      %v831 = vunpack.c.l.s4 1983009808
      %v832 = vunpack.c.0.s8 %v831
      %v833 = vlaneseq
      %v834 = vshrl.u32 %v833, 7
      %v835 = vsub.s32 %v832, %v834
      %v836 = vrot.slane %v822, %v835
      %v837 = vcombine.high %v829, %v829
      %v838 = vcombine.high %v836, %v836
      %v839 = vcombine.high %v615, %v615
      %v841 = vunpack.c.l.s4 1983009808
      %v842 = vunpack.c.0.s8 %v841
      %v843 = vlaneseq
      %v844 = vshrl.u32 %v843, 7
      %v845 = vsub.s32 %v842, %v844
      %v846 = vrot.slane %v615, %v845
      %v848 = vunpack.c.l.s4 1983009808
      %v849 = vunpack.c.0.s8 %v848
      %v850 = vlaneseq
      %v851 = vshrl.u32 %v850, 7
      %v852 = vsub.s32 %v849, %v851
      %v853 = vrot.slane %v839, %v852
      %v854 = vcombine.high %v846, %v846
      %v855 = vcombine.high %v853, %v853
      %v856 = vcombine.high %v616, %v616
      %v858 = vunpack.c.l.s4 1983009808
      %v859 = vunpack.c.0.s8 %v858
      %v860 = vlaneseq
      %v861 = vshrl.u32 %v860, 7
      %v862 = vsub.s32 %v859, %v861
      %v863 = vrot.slane %v616, %v862
      %v865 = vunpack.c.l.s4 1983009808
      %v866 = vunpack.c.0.s8 %v865
      %v867 = vlaneseq
      %v868 = vshrl.u32 %v867, 7
      %v869 = vsub.s32 %v866, %v868
      %v870 = vrot.slane %v856, %v869
      %v871 = vcombine.high %v863, %v863
      %v872 = vcombine.high %v870, %v870
      %v873 = vcombine.high %v617, %v617
      %v875 = vunpack.c.l.s4 1983009808
      %v876 = vunpack.c.0.s8 %v875
      %v877 = vlaneseq
      %v878 = vshrl.u32 %v877, 7
      %v879 = vsub.s32 %v876, %v878
      %v880 = vrot.slane %v617, %v879
      %v882 = vunpack.c.l.s4 1983009808
      %v883 = vunpack.c.0.s8 %v882
      %v884 = vlaneseq
      %v885 = vshrl.u32 %v884, 7
      %v886 = vsub.s32 %v883, %v885
      %v887 = vrot.slane %v873, %v886
      %v888 = vcombine.high %v880, %v880
      %v889 = vcombine.high %v887, %v887
      %v890 = vcombine.high %v618, %v618
      %v892 = vunpack.c.l.s4 1983009808
      %v893 = vunpack.c.0.s8 %v892
      %v894 = vlaneseq
      %v895 = vshrl.u32 %v894, 7
      %v896 = vsub.s32 %v893, %v895
      %v897 = vrot.slane %v618, %v896
      %v899 = vunpack.c.l.s4 1983009808
      %v900 = vunpack.c.0.s8 %v899
      %v901 = vlaneseq
      %v902 = vshrl.u32 %v901, 7
      %v903 = vsub.s32 %v900, %v902
      %v904 = vrot.slane %v890, %v903
      %v905 = vcombine.high %v897, %v897
      %v906 = vcombine.high %v904, %v904
      %v971 = vrot.slane %v642, 7
      %v972 = vrot.slane %v971, 2
      %v973 = vrot.slane %v650, 7
      %v974 = vrot.slane %v973, 2
      %v975 = vrot.slane %v649, 7
      %v976 = vrot.slane %v975, 2
      %v977 = vrot.slane %v651, 7
      %v978 = vrot.slane %v977, 2
      %v979 = vrot.slane %v659, 7
      %v980 = vrot.slane %v979, 2
      %v981 = vrot.slane %v667, 7
      %v982 = vrot.slane %v981, 2
      %v983 = vrot.slane %v666, 7
      %v984 = vrot.slane %v983, 2
      %v985 = vrot.slane %v668, 7
      %v986 = vrot.slane %v985, 2
      %v987 = vrot.slane %v676, 7
      %v988 = vrot.slane %v987, 2
      %v989 = vrot.slane %v684, 7
      %v990 = vrot.slane %v989, 2
      %v991 = vrot.slane %v683, 7
      %v992 = vrot.slane %v991, 2
      %v993 = vrot.slane %v685, 7
      %v994 = vrot.slane %v993, 2
      %v995 = vrot.slane %v693, 7
      %v996 = vrot.slane %v995, 2
      %v997 = vrot.slane %v701, 7
      %v998 = vrot.slane %v997, 2
      %v999 = vrot.slane %v700, 7
      %v1000 = vrot.slane %v999, 2
      %v1001 = vrot.slane %v702, 7
      %v1002 = vrot.slane %v1001, 2
      %v1003 = vrot.slane %v710, 7
      %v1004 = vrot.slane %v1003, 2
      %v1005 = vrot.slane %v718, 7
      %v1006 = vrot.slane %v1005, 2
      %v1007 = vrot.slane %v717, 7
      %v1008 = vrot.slane %v1007, 2
      %v1009 = vrot.slane %v719, 7
      %v1010 = vrot.slane %v1009, 2
      %v1011 = vrot.slane %v727, 7
      %v1012 = vrot.slane %v1011, 2
      %v1013 = vrot.slane %v735, 7
      %v1014 = vrot.slane %v1013, 2
      %v1015 = vrot.slane %v734, 7
      %v1016 = vrot.slane %v1015, 2
      %v1017 = vrot.slane %v736, 7
      %v1018 = vrot.slane %v1017, 2
      %v1019 = vrot.slane %v744, 7
      %v1020 = vrot.slane %v1019, 2
      %v1021 = vrot.slane %v752, 7
      %v1022 = vrot.slane %v1021, 2
      %v1023 = vrot.slane %v751, 7
      %v1024 = vrot.slane %v1023, 2
      %v1025 = vrot.slane %v753, 7
      %v1026 = vrot.slane %v1025, 2
      %v1027 = vrot.slane %v761, 7
      %v1028 = vrot.slane %v1027, 2
      %v1029 = vrot.slane %v769, 7
      %v1030 = vrot.slane %v1029, 2
      %v1031 = vrot.slane %v768, 7
      %v1032 = vrot.slane %v1031, 2
      %v1033 = vrot.slane %v770, 7
      %v1034 = vrot.slane %v1033, 2
      %v1035 = vrot.slane %v778, 7
      %v1036 = vrot.slane %v1035, 2
      %v1037 = vrot.slane %v786, 7
      %v1038 = vrot.slane %v1037, 2
      %v1039 = vrot.slane %v785, 7
      %v1040 = vrot.slane %v1039, 2
      %v1041 = vrot.slane %v787, 7
      %v1042 = vrot.slane %v1041, 2
      %v1043 = vrot.slane %v795, 7
      %v1044 = vrot.slane %v1043, 2
      %v1045 = vrot.slane %v803, 7
      %v1046 = vrot.slane %v1045, 2
      %v1047 = vrot.slane %v802, 7
      %v1048 = vrot.slane %v1047, 2
      %v1049 = vrot.slane %v804, 7
      %v1050 = vrot.slane %v1049, 2
      %v1051 = vrot.slane %v812, 7
      %v1052 = vrot.slane %v1051, 2
      %v1053 = vrot.slane %v820, 7
      %v1054 = vrot.slane %v1053, 2
      %v1055 = vrot.slane %v819, 7
      %v1056 = vrot.slane %v1055, 2
      %v1057 = vrot.slane %v821, 7
      %v1058 = vrot.slane %v1057, 2
      %v1059 = vrot.slane %v829, 7
      %v1060 = vrot.slane %v1059, 2
      %v1061 = vrot.slane %v837, 7
      %v1062 = vrot.slane %v1061, 2
      %v1063 = vrot.slane %v836, 7
      %v1064 = vrot.slane %v1063, 2
      %v1065 = vrot.slane %v838, 7
      %v1066 = vrot.slane %v1065, 2
      %v1067 = vrot.slane %v846, 7
      %v1068 = vrot.slane %v1067, 2
      %v1069 = vrot.slane %v854, 7
      %v1070 = vrot.slane %v1069, 2
      %v1071 = vrot.slane %v853, 7
      %v1072 = vrot.slane %v1071, 2
      %v1073 = vrot.slane %v855, 7
      %v1074 = vrot.slane %v1073, 2
      %v1075 = vrot.slane %v863, 7
      %v1076 = vrot.slane %v1075, 2
      %v1077 = vrot.slane %v871, 7
      %v1078 = vrot.slane %v1077, 2
      %v1079 = vrot.slane %v870, 7
      %v1080 = vrot.slane %v1079, 2
      %v1081 = vrot.slane %v872, 7
      %v1082 = vrot.slane %v1081, 2
      %v1083 = vrot.slane %v880, 7
      %v1084 = vrot.slane %v1083, 2
      %v1085 = vrot.slane %v888, 7
      %v1086 = vrot.slane %v1085, 2
      %v1087 = vrot.slane %v887, 7
      %v1088 = vrot.slane %v1087, 2
      %v1089 = vrot.slane %v889, 7
      %v1090 = vrot.slane %v1089, 2
      %v1091 = vrot.slane %v897, 7
      %v1092 = vrot.slane %v1091, 2
      %v1093 = vrot.slane %v905, 7
      %v1094 = vrot.slane %v1093, 2
      %v1095 = vrot.slane %v904, 7
      %v1096 = vrot.slane %v1095, 2
      %v1097 = vrot.slane %v906, 7
      %v1098 = vrot.slane %v1097, 2
      %v1163 = vmax.f32 %v642, %v972
      %v1164 = vmax.f32 %v650, %v974
      %v1165 = vmax.f32 %v649, %v976
      %v1166 = vmax.f32 %v651, %v978
      %v1167 = vmax.f32 %v659, %v980
      %v1168 = vmax.f32 %v667, %v982
      %v1169 = vmax.f32 %v666, %v984
      %v1170 = vmax.f32 %v668, %v986
      %v1171 = vmax.f32 %v676, %v988
      %v1172 = vmax.f32 %v684, %v990
      %v1173 = vmax.f32 %v683, %v992
      %v1174 = vmax.f32 %v685, %v994
      %v1175 = vmax.f32 %v693, %v996
      %v1176 = vmax.f32 %v701, %v998
      %v1177 = vmax.f32 %v700, %v1000
      %v1178 = vmax.f32 %v702, %v1002
      %v1179 = vmax.f32 %v710, %v1004
      %v1180 = vmax.f32 %v718, %v1006
      %v1181 = vmax.f32 %v717, %v1008
      %v1182 = vmax.f32 %v719, %v1010
      %v1183 = vmax.f32 %v727, %v1012
      %v1184 = vmax.f32 %v735, %v1014
      %v1185 = vmax.f32 %v734, %v1016
      %v1186 = vmax.f32 %v736, %v1018
      %v1187 = vmax.f32 %v744, %v1020
      %v1188 = vmax.f32 %v752, %v1022
      %v1189 = vmax.f32 %v751, %v1024
      %v1190 = vmax.f32 %v753, %v1026
      %v1191 = vmax.f32 %v761, %v1028
      %v1192 = vmax.f32 %v769, %v1030
      %v1193 = vmax.f32 %v768, %v1032
      %v1194 = vmax.f32 %v770, %v1034
      %v1195 = vmax.f32 %v778, %v1036
      %v1196 = vmax.f32 %v786, %v1038
      %v1197 = vmax.f32 %v785, %v1040
      %v1198 = vmax.f32 %v787, %v1042
      %v1199 = vmax.f32 %v795, %v1044
      %v1200 = vmax.f32 %v803, %v1046
      %v1201 = vmax.f32 %v802, %v1048
      %v1202 = vmax.f32 %v804, %v1050
      %v1203 = vmax.f32 %v812, %v1052
      %v1204 = vmax.f32 %v820, %v1054
      %v1205 = vmax.f32 %v819, %v1056
      %v1206 = vmax.f32 %v821, %v1058
      %v1207 = vmax.f32 %v829, %v1060
      %v1208 = vmax.f32 %v837, %v1062
      %v1209 = vmax.f32 %v836, %v1064
      %v1210 = vmax.f32 %v838, %v1066
      %v1211 = vmax.f32 %v846, %v1068
      %v1212 = vmax.f32 %v854, %v1070
      %v1213 = vmax.f32 %v853, %v1072
      %v1214 = vmax.f32 %v855, %v1074
      %v1215 = vmax.f32 %v863, %v1076
      %v1216 = vmax.f32 %v871, %v1078
      %v1217 = vmax.f32 %v870, %v1080
      %v1218 = vmax.f32 %v872, %v1082
      %v1219 = vmax.f32 %v880, %v1084
      %v1220 = vmax.f32 %v888, %v1086
      %v1221 = vmax.f32 %v887, %v1088
      %v1222 = vmax.f32 %v889, %v1090
      %v1223 = vmax.f32 %v897, %v1092
      %v1224 = vmax.f32 %v905, %v1094
      %v1225 = vmax.f32 %v904, %v1096
      %v1226 = vmax.f32 %v906, %v1098
      %1227 = vst.msk [vmem:[#allocation2] sm:$0xff] %vm361, 0.0
      %vm1228 = vcmask 254976
      %1229 = vst.msk [vmem:[#allocation2 + $0x8] sm:$0x3] %vm1228, 0.0
      %s1230 = scalar_lea.vmem [#allocation2], 144
      %1231 = vst.msk [vmem:[%s1230] sm:$0xff] %vm361, 0.0
      %1232 = vst.msk [vmem:[%s1230 + $0x8] sm:$0x3] %vm1228, 0.0
      %vm1233 = vcmask 253952
      %1234 = vst.msk [vmem:[#allocation2] sm:$0x1] %vm1233, 0.0
      %1235 = vst.msk [vmem:[#allocation2 + $0x10] sm:$0x1] %vm1233, 0.0
      %1236 = vst.msk [vmem:[#allocation2 + $0x20] sm:$0x1] %vm1233, 0.0
      %1237 = vst.msk [vmem:[#allocation2 + $0x30] sm:$0x1] %vm1233, 0.0
      %1238 = vst.msk [vmem:[#allocation2 + $0x40] sm:$0x1] %vm1233, 0.0
      %1239 = vst.msk [vmem:[#allocation2 + $0x50] sm:$0x1] %vm1233, 0.0
      %1240 = vst.msk [vmem:[#allocation2 + $0x60] sm:$0x1] %vm1233, 0.0
      %1241 = vst.msk [vmem:[#allocation2 + $0x70] sm:$0x1] %vm1233, 0.0
      %1242 = vst.msk [vmem:[#allocation2 + $0x80] sm:$0x1] %vm1233, 0.0
      %1243 = vst.msk [vmem:[#allocation2 + $0x90] sm:$0x1] %vm1233, 0.0
      %1244 = vst.msk [vmem:[#allocation2 + $0x9] sm:$0x1] %vm1233, 0.0
      %1245 = vst.msk [vmem:[#allocation2 + $0x19] sm:$0x1] %vm1233, 0.0
      %1246 = vst.msk [vmem:[#allocation2 + $0x29] sm:$0x1] %vm1233, 0.0
      %1247 = vst.msk [vmem:[#allocation2 + $0x39] sm:$0x1] %vm1233, 0.0
      %1248 = vst.msk [vmem:[#allocation2 + $0x49] sm:$0x1] %vm1233, 0.0
      %1249 = vst.msk [vmem:[#allocation2 + $0x59] sm:$0x1] %vm1233, 0.0
      %1250 = vst.msk [vmem:[#allocation2 + $0x69] sm:$0x1] %vm1233, 0.0
      %1251 = vst.msk [vmem:[#allocation2 + $0x79] sm:$0x1] %vm1233, 0.0
      %1252 = vst.msk [vmem:[#allocation2 + $0x89] sm:$0x1] %vm1233, 0.0
      %1253 = vst.msk [vmem:[#allocation2 + $0x99] sm:$0x1] %vm1233, 0.0
      %v1318 = vlaneseq
      %v1319 = vshrl.u32 %v1318, 7
      %v1320 = vsub.s32 0, %v1319
      %v1321 = vrot.slane %v1163, %v1320
      %v1322 = vlaneseq
      %v1323 = vshrl.u32 %v1322, 7
      %v1324 = vsub.s32 0, %v1323
      %v1325 = vrot.slane %v1164, %v1324
      %v1326 = vlaneseq
      %v1327 = vshrl.u32 %v1326, 7
      %v1328 = vsub.s32 0, %v1327
      %v1329 = vrot.slane %v1165, %v1328
      %v1330 = vlaneseq
      %v1331 = vshrl.u32 %v1330, 7
      %v1332 = vsub.s32 0, %v1331
      %v1333 = vrot.slane %v1166, %v1332
      %v1334 = vlaneseq
      %v1335 = vshrl.u32 %v1334, 7
      %v1336 = vsub.s32 0, %v1335
      %v1337 = vrot.slane %v1167, %v1336
      %v1338 = vlaneseq
      %v1339 = vshrl.u32 %v1338, 7
      %v1340 = vsub.s32 0, %v1339
      %v1341 = vrot.slane %v1168, %v1340
      %v1342 = vlaneseq
      %v1343 = vshrl.u32 %v1342, 7
      %v1344 = vsub.s32 0, %v1343
      %v1345 = vrot.slane %v1169, %v1344
      %v1346 = vlaneseq
      %v1347 = vshrl.u32 %v1346, 7
      %v1348 = vsub.s32 0, %v1347
      %v1349 = vrot.slane %v1170, %v1348
      %v1350 = vlaneseq
      %v1351 = vshrl.u32 %v1350, 7
      %v1352 = vsub.s32 0, %v1351
      %v1353 = vrot.slane %v1171, %v1352
      %v1354 = vlaneseq
      %v1355 = vshrl.u32 %v1354, 7
      %v1356 = vsub.s32 0, %v1355
      %v1357 = vrot.slane %v1172, %v1356
      %v1358 = vlaneseq
      %v1359 = vshrl.u32 %v1358, 7
      %v1360 = vsub.s32 0, %v1359
      %v1361 = vrot.slane %v1173, %v1360
      %v1362 = vlaneseq
      %v1363 = vshrl.u32 %v1362, 7
      %v1364 = vsub.s32 0, %v1363
      %v1365 = vrot.slane %v1174, %v1364
      %v1366 = vlaneseq
      %v1367 = vshrl.u32 %v1366, 7
      %v1368 = vsub.s32 0, %v1367
      %v1369 = vrot.slane %v1175, %v1368
      %v1370 = vlaneseq
      %v1371 = vshrl.u32 %v1370, 7
      %v1372 = vsub.s32 0, %v1371
      %v1373 = vrot.slane %v1176, %v1372
      %v1374 = vlaneseq
      %v1375 = vshrl.u32 %v1374, 7
      %v1376 = vsub.s32 0, %v1375
      %v1377 = vrot.slane %v1177, %v1376
      %v1378 = vlaneseq
      %v1379 = vshrl.u32 %v1378, 7
      %v1380 = vsub.s32 0, %v1379
      %v1381 = vrot.slane %v1178, %v1380
      %v1382 = vlaneseq
      %v1383 = vshrl.u32 %v1382, 7
      %v1384 = vsub.s32 0, %v1383
      %v1385 = vrot.slane %v1179, %v1384
      %v1386 = vlaneseq
      %v1387 = vshrl.u32 %v1386, 7
      %v1388 = vsub.s32 0, %v1387
      %v1389 = vrot.slane %v1180, %v1388
      %v1390 = vlaneseq
      %v1391 = vshrl.u32 %v1390, 7
      %v1392 = vsub.s32 0, %v1391
      %v1393 = vrot.slane %v1181, %v1392
      %v1394 = vlaneseq
      %v1395 = vshrl.u32 %v1394, 7
      %v1396 = vsub.s32 0, %v1395
      %v1397 = vrot.slane %v1182, %v1396
      %v1398 = vlaneseq
      %v1399 = vshrl.u32 %v1398, 7
      %v1400 = vsub.s32 0, %v1399
      %v1401 = vrot.slane %v1183, %v1400
      %v1402 = vlaneseq
      %v1403 = vshrl.u32 %v1402, 7
      %v1404 = vsub.s32 0, %v1403
      %v1405 = vrot.slane %v1184, %v1404
      %v1406 = vlaneseq
      %v1407 = vshrl.u32 %v1406, 7
      %v1408 = vsub.s32 0, %v1407
      %v1409 = vrot.slane %v1185, %v1408
      %v1410 = vlaneseq
      %v1411 = vshrl.u32 %v1410, 7
      %v1412 = vsub.s32 0, %v1411
      %v1413 = vrot.slane %v1186, %v1412
      %v1414 = vlaneseq
      %v1415 = vshrl.u32 %v1414, 7
      %v1416 = vsub.s32 0, %v1415
      %v1417 = vrot.slane %v1187, %v1416
      %v1418 = vlaneseq
      %v1419 = vshrl.u32 %v1418, 7
      %v1420 = vsub.s32 0, %v1419
      %v1421 = vrot.slane %v1188, %v1420
      %v1422 = vlaneseq
      %v1423 = vshrl.u32 %v1422, 7
      %v1424 = vsub.s32 0, %v1423
      %v1425 = vrot.slane %v1189, %v1424
      %v1426 = vlaneseq
      %v1427 = vshrl.u32 %v1426, 7
      %v1428 = vsub.s32 0, %v1427
      %v1429 = vrot.slane %v1190, %v1428
      %v1430 = vlaneseq
      %v1431 = vshrl.u32 %v1430, 7
      %v1432 = vsub.s32 0, %v1431
      %v1433 = vrot.slane %v1191, %v1432
      %v1434 = vlaneseq
      %v1435 = vshrl.u32 %v1434, 7
      %v1436 = vsub.s32 0, %v1435
      %v1437 = vrot.slane %v1192, %v1436
      %v1438 = vlaneseq
      %v1439 = vshrl.u32 %v1438, 7
      %v1440 = vsub.s32 0, %v1439
      %v1441 = vrot.slane %v1193, %v1440
      %v1442 = vlaneseq
      %v1443 = vshrl.u32 %v1442, 7
      %v1444 = vsub.s32 0, %v1443
      %v1445 = vrot.slane %v1194, %v1444
      %v1446 = vlaneseq
      %v1447 = vshrl.u32 %v1446, 7
      %v1448 = vsub.s32 0, %v1447
      %v1449 = vrot.slane %v1195, %v1448
      %v1450 = vlaneseq
      %v1451 = vshrl.u32 %v1450, 7
      %v1452 = vsub.s32 0, %v1451
      %v1453 = vrot.slane %v1196, %v1452
      %v1454 = vlaneseq
      %v1455 = vshrl.u32 %v1454, 7
      %v1456 = vsub.s32 0, %v1455
      %v1457 = vrot.slane %v1197, %v1456
      %v1458 = vlaneseq
      %v1459 = vshrl.u32 %v1458, 7
      %v1460 = vsub.s32 0, %v1459
      %v1461 = vrot.slane %v1198, %v1460
      %v1462 = vlaneseq
      %v1463 = vshrl.u32 %v1462, 7
      %v1464 = vsub.s32 0, %v1463
      %v1465 = vrot.slane %v1199, %v1464
      %v1466 = vlaneseq
      %v1467 = vshrl.u32 %v1466, 7
      %v1468 = vsub.s32 0, %v1467
      %v1469 = vrot.slane %v1200, %v1468
      %v1470 = vlaneseq
      %v1471 = vshrl.u32 %v1470, 7
      %v1472 = vsub.s32 0, %v1471
      %v1473 = vrot.slane %v1201, %v1472
      %v1474 = vlaneseq
      %v1475 = vshrl.u32 %v1474, 7
      %v1476 = vsub.s32 0, %v1475
      %v1477 = vrot.slane %v1202, %v1476
      %v1478 = vlaneseq
      %v1479 = vshrl.u32 %v1478, 7
      %v1480 = vsub.s32 0, %v1479
      %v1481 = vrot.slane %v1203, %v1480
      %v1482 = vlaneseq
      %v1483 = vshrl.u32 %v1482, 7
      %v1484 = vsub.s32 0, %v1483
      %v1485 = vrot.slane %v1204, %v1484
      %v1486 = vlaneseq
      %v1487 = vshrl.u32 %v1486, 7
      %v1488 = vsub.s32 0, %v1487
      %v1489 = vrot.slane %v1205, %v1488
      %v1490 = vlaneseq
      %v1491 = vshrl.u32 %v1490, 7
      %v1492 = vsub.s32 0, %v1491
      %v1493 = vrot.slane %v1206, %v1492
      %v1494 = vlaneseq
      %v1495 = vshrl.u32 %v1494, 7
      %v1496 = vsub.s32 0, %v1495
      %v1497 = vrot.slane %v1207, %v1496
      %v1498 = vlaneseq
      %v1499 = vshrl.u32 %v1498, 7
      %v1500 = vsub.s32 0, %v1499
      %v1501 = vrot.slane %v1208, %v1500
      %v1502 = vlaneseq
      %v1503 = vshrl.u32 %v1502, 7
      %v1504 = vsub.s32 0, %v1503
      %v1505 = vrot.slane %v1209, %v1504
      %v1506 = vlaneseq
      %v1507 = vshrl.u32 %v1506, 7
      %v1508 = vsub.s32 0, %v1507
      %v1509 = vrot.slane %v1210, %v1508
      %v1510 = vlaneseq
      %v1511 = vshrl.u32 %v1510, 7
      %v1512 = vsub.s32 0, %v1511
      %v1513 = vrot.slane %v1211, %v1512
      %v1514 = vlaneseq
      %v1515 = vshrl.u32 %v1514, 7
      %v1516 = vsub.s32 0, %v1515
      %v1517 = vrot.slane %v1212, %v1516
      %v1518 = vlaneseq
      %v1519 = vshrl.u32 %v1518, 7
      %v1520 = vsub.s32 0, %v1519
      %v1521 = vrot.slane %v1213, %v1520
      %v1522 = vlaneseq
      %v1523 = vshrl.u32 %v1522, 7
      %v1524 = vsub.s32 0, %v1523
      %v1525 = vrot.slane %v1214, %v1524
      %v1526 = vlaneseq
      %v1527 = vshrl.u32 %v1526, 7
      %v1528 = vsub.s32 0, %v1527
      %v1529 = vrot.slane %v1215, %v1528
      %v1530 = vlaneseq
      %v1531 = vshrl.u32 %v1530, 7
      %v1532 = vsub.s32 0, %v1531
      %v1533 = vrot.slane %v1216, %v1532
      %v1534 = vlaneseq
      %v1535 = vshrl.u32 %v1534, 7
      %v1536 = vsub.s32 0, %v1535
      %v1537 = vrot.slane %v1217, %v1536
      %v1538 = vlaneseq
      %v1539 = vshrl.u32 %v1538, 7
      %v1540 = vsub.s32 0, %v1539
      %v1541 = vrot.slane %v1218, %v1540
      %v1542 = vlaneseq
      %v1543 = vshrl.u32 %v1542, 7
      %v1544 = vsub.s32 0, %v1543
      %v1545 = vrot.slane %v1219, %v1544
      %v1546 = vlaneseq
      %v1547 = vshrl.u32 %v1546, 7
      %v1548 = vsub.s32 0, %v1547
      %v1549 = vrot.slane %v1220, %v1548
      %v1550 = vlaneseq
      %v1551 = vshrl.u32 %v1550, 7
      %v1552 = vsub.s32 0, %v1551
      %v1553 = vrot.slane %v1221, %v1552
      %v1554 = vlaneseq
      %v1555 = vshrl.u32 %v1554, 7
      %v1556 = vsub.s32 0, %v1555
      %v1557 = vrot.slane %v1222, %v1556
      %v1558 = vlaneseq
      %v1559 = vshrl.u32 %v1558, 7
      %v1560 = vsub.s32 0, %v1559
      %v1561 = vrot.slane %v1223, %v1560
      %v1562 = vlaneseq
      %v1563 = vshrl.u32 %v1562, 7
      %v1564 = vsub.s32 0, %v1563
      %v1565 = vrot.slane %v1224, %v1564
      %v1566 = vlaneseq
      %v1567 = vshrl.u32 %v1566, 7
      %v1568 = vsub.s32 0, %v1567
      %v1569 = vrot.slane %v1225, %v1568
      %v1570 = vlaneseq
      %v1571 = vshrl.u32 %v1570, 7
      %v1572 = vsub.s32 0, %v1571
      %v1573 = vrot.slane %v1226, %v1572
      %vm1574 = vcmask 1041409
      %v1575 = vsel %vm1574, %v1325, %v1321
      %vm1576 = vcmask 1042434
      %v1577 = vsel %vm1576, %v1329, %v1575
      %vm1578 = vcmask 1043459
      %v1579 = vsel %vm1578, %v1333, %v1577
      %vm1580 = vcmask 1044484
      %v1581 = vsel %vm1580, %v1337, %v1579
      %vm1582 = vcmask 1045509
      %v1583 = vsel %vm1582, %v1341, %v1581
      %vm1584 = vcmask 1046534
      %v1585 = vsel %vm1584, %v1345, %v1583
      %vm1586 = vcmask 1047559
      %v1587 = vsel %vm1586, %v1349, %v1585
      %v1588 = vsel %vm1574, %v1357, %v1353
      %v1589 = vsel %vm1576, %v1361, %v1588
      %v1590 = vsel %vm1578, %v1365, %v1589
      %v1591 = vsel %vm1580, %v1369, %v1590
      %v1592 = vsel %vm1582, %v1373, %v1591
      %v1593 = vsel %vm1584, %v1377, %v1592
      %v1594 = vsel %vm1586, %v1381, %v1593
      %v1595 = vsel %vm1574, %v1389, %v1385
      %v1596 = vsel %vm1576, %v1393, %v1595
      %v1597 = vsel %vm1578, %v1397, %v1596
      %v1598 = vsel %vm1580, %v1401, %v1597
      %v1599 = vsel %vm1582, %v1405, %v1598
      %v1600 = vsel %vm1584, %v1409, %v1599
      %v1601 = vsel %vm1586, %v1413, %v1600
      %v1602 = vsel %vm1574, %v1421, %v1417
      %v1603 = vsel %vm1576, %v1425, %v1602
      %v1604 = vsel %vm1578, %v1429, %v1603
      %v1605 = vsel %vm1580, %v1433, %v1604
      %v1606 = vsel %vm1582, %v1437, %v1605
      %v1607 = vsel %vm1584, %v1441, %v1606
      %v1608 = vsel %vm1586, %v1445, %v1607
      %v1609 = vsel %vm1574, %v1453, %v1449
      %v1610 = vsel %vm1576, %v1457, %v1609
      %v1611 = vsel %vm1578, %v1461, %v1610
      %v1612 = vsel %vm1580, %v1465, %v1611
      %v1613 = vsel %vm1582, %v1469, %v1612
      %v1614 = vsel %vm1584, %v1473, %v1613
      %v1615 = vsel %vm1586, %v1477, %v1614
      %v1616 = vsel %vm1574, %v1485, %v1481
      %v1617 = vsel %vm1576, %v1489, %v1616
      %v1618 = vsel %vm1578, %v1493, %v1617
      %v1619 = vsel %vm1580, %v1497, %v1618
      %v1620 = vsel %vm1582, %v1501, %v1619
      %v1621 = vsel %vm1584, %v1505, %v1620
      %v1622 = vsel %vm1586, %v1509, %v1621
      %v1623 = vsel %vm1574, %v1517, %v1513
      %v1624 = vsel %vm1576, %v1521, %v1623
      %v1625 = vsel %vm1578, %v1525, %v1624
      %v1626 = vsel %vm1580, %v1529, %v1625
      %v1627 = vsel %vm1582, %v1533, %v1626
      %v1628 = vsel %vm1584, %v1537, %v1627
      %v1629 = vsel %vm1586, %v1541, %v1628
      %v1630 = vsel %vm1574, %v1549, %v1545
      %v1631 = vsel %vm1576, %v1553, %v1630
      %v1632 = vsel %vm1578, %v1557, %v1631
      %v1633 = vsel %vm1580, %v1561, %v1632
      %v1634 = vsel %vm1582, %v1565, %v1633
      %v1635 = vsel %vm1584, %v1569, %v1634
      %v1636 = vsel %vm1586, %v1573, %v1635
      %s1645 = scalar_lea.vmem [#allocation2], 16
      %1646 = vst.msk [vmem:[%s1645 + $0x1] sm:$0xff] %vm361, %v1587
      %1647 = vst.msk [vmem:[%s1645 + $0x11] sm:$0xff] %vm361, %v1594
      %1648 = vst.msk [vmem:[%s1645 + $0x21] sm:$0xff] %vm361, %v1601
      %1649 = vst.msk [vmem:[%s1645 + $0x31] sm:$0xff] %vm361, %v1608
      %1650 = vst.msk [vmem:[%s1645 + $0x41] sm:$0xff] %vm361, %v1615
      %1651 = vst.msk [vmem:[%s1645 + $0x51] sm:$0xff] %vm361, %v1622
      %1652 = vst.msk [vmem:[%s1645 + $0x61] sm:$0xff] %vm361, %v1629
      %1653 = vst.msk [vmem:[%s1645 + $0x71] sm:$0xff] %vm361, %v1636
      %v1654 = vld [vmem:[#allocation2] sm:$0xff]
      %v1655 = vld [vmem:[#allocation2 + $0x10] sm:$0xff]
      %v1656 = vld [vmem:[#allocation2 + $0x20] sm:$0xff]
      %v1657 = vld [vmem:[#allocation2 + $0x30] sm:$0xff]
      %v1658 = vld [vmem:[#allocation2 + $0x40] sm:$0xff]
      %v1659 = vld [vmem:[#allocation2 + $0x50] sm:$0xff]
      %v1660 = vld [vmem:[#allocation2 + $0x60] sm:$0xff]
      %v1661 = vld [vmem:[#allocation2 + $0x70] sm:$0xff]
      %v1662 = vpack.c.bf16 %v1655, %v1654
      %v1663 = vpack.c.bf16 %v1657, %v1656
      %v1664 = vpack.c.bf16 %v1659, %v1658
      %v1665 = vpack.c.bf16 %v1661, %v1660
      %v1670 = vunpack.c.l.b16 %v1662
      %v1671 = vunpack.c.h.b16 %v1662
      %v1672 = vunpack.c.l.b16 %v1663
      %v1673 = vunpack.c.h.b16 %v1663
      %v1674 = vunpack.c.l.b16 %v1664
      %v1675 = vunpack.c.h.b16 %v1664
      %v1676 = vunpack.c.l.b16 %v1665
      %v1677 = vunpack.c.h.b16 %v1665
      %v1678 = vpack.c.b16 %v1670, %v1670
      %v1679 = vpack.c.b16 %v1671, %v1671
      %v1680 = vpack.c.b16 %v1672, %v1672
      %v1681 = vpack.c.b16 %v1673, %v1673
      %v1682 = vpack.c.b16 %v1674, %v1674
      %v1683 = vpack.c.b16 %v1675, %v1675
      %v1684 = vpack.c.b16 %v1676, %v1676
      %v1685 = vpack.c.b16 %v1677, %v1677
      %vm1694 = vcmask 257024
      %1695 = vst.msk [vmem:[#allocation3] sm:$0xf] %vm1694, %v1678
      %1696 = vst.msk [vmem:[#allocation3 + $0xc] sm:$0xf] %vm1694, %v1679
      %1697 = vst.msk [vmem:[#allocation3 + $0x18] sm:$0xf] %vm1694, %v1680
      %1698 = vst.msk [vmem:[#allocation3 + $0x24] sm:$0xf] %vm1694, %v1681
      %1699 = vst.msk [vmem:[#allocation3 + $0x30] sm:$0xf] %vm1694, %v1682
      %1700 = vst.msk [vmem:[#allocation3 + $0x3c] sm:$0xf] %vm1694, %v1683
      %1701 = vst.msk [vmem:[#allocation3 + $0x48] sm:$0xf] %vm1694, %v1684
      %1702 = vst.msk [vmem:[#allocation3 + $0x54] sm:$0xf] %vm1694, %v1685
      %v1703 = vld [vmem:[#allocation2 + $0x1] sm:$0xff]
      %v1704 = vld [vmem:[#allocation2 + $0x11] sm:$0xff]
      %v1705 = vld [vmem:[#allocation2 + $0x21] sm:$0xff]
      %v1706 = vld [vmem:[#allocation2 + $0x31] sm:$0xff]
      %v1707 = vld [vmem:[#allocation2 + $0x41] sm:$0xff]
      %v1708 = vld [vmem:[#allocation2 + $0x51] sm:$0xff]
      %v1709 = vld [vmem:[#allocation2 + $0x61] sm:$0xff]
      %v1710 = vld [vmem:[#allocation2 + $0x71] sm:$0xff]
      %v1711 = vpack.c.bf16 %v1704, %v1703
      %v1712 = vpack.c.bf16 %v1706, %v1705
      %v1713 = vpack.c.bf16 %v1708, %v1707
      %v1714 = vpack.c.bf16 %v1710, %v1709
      %v1719 = vunpack.c.l.b16 %v1711
      %v1720 = vunpack.c.h.b16 %v1711
      %v1721 = vunpack.c.l.b16 %v1712
      %v1722 = vunpack.c.h.b16 %v1712
      %v1723 = vunpack.c.l.b16 %v1713
      %v1724 = vunpack.c.h.b16 %v1713
      %v1725 = vunpack.c.l.b16 %v1714
      %v1726 = vunpack.c.h.b16 %v1714
      %v1727 = vpack.c.b16 %v1719, %v1719
      %v1728 = vpack.c.b16 %v1720, %v1720
      %v1729 = vpack.c.b16 %v1721, %v1721
      %v1730 = vpack.c.b16 %v1722, %v1722
      %v1731 = vpack.c.b16 %v1723, %v1723
      %v1732 = vpack.c.b16 %v1724, %v1724
      %v1733 = vpack.c.b16 %v1725, %v1725
      %v1734 = vpack.c.b16 %v1726, %v1726
      %1735 = vrot.lane.b32.xlu0 %v1727, 32
      %v1736 = vpop.permute.xlu0 %1735
      %1737 = vrot.lane.b32.xlu0 %v1728, 32
      %v1738 = vpop.permute.xlu0 %1737
      %1739 = vrot.lane.b32.xlu0 %v1729, 32
      %v1740 = vpop.permute.xlu0 %1739
      %1741 = vrot.lane.b32.xlu0 %v1730, 32
      %v1742 = vpop.permute.xlu0 %1741
      %1743 = vrot.lane.b32.xlu0 %v1731, 32
      %v1744 = vpop.permute.xlu0 %1743
      %1745 = vrot.lane.b32.xlu0 %v1732, 32
      %v1746 = vpop.permute.xlu0 %1745
      %1747 = vrot.lane.b32.xlu0 %v1733, 32
      %v1748 = vpop.permute.xlu0 %1747
      %1749 = vrot.lane.b32.xlu0 %v1734, 32
      %v1750 = vpop.permute.xlu0 %1749
      %vm1759 = vcmask 519424
      %1760 = vst.msk [vmem:[#allocation3] sm:$0xf] %vm1759, %v1736
      %1761 = vst.msk [vmem:[#allocation3 + $0xc] sm:$0xf] %vm1759, %v1738
      %1762 = vst.msk [vmem:[#allocation3 + $0x18] sm:$0xf] %vm1759, %v1740
      %1763 = vst.msk [vmem:[#allocation3 + $0x24] sm:$0xf] %vm1759, %v1742
      %1764 = vst.msk [vmem:[#allocation3 + $0x30] sm:$0xf] %vm1759, %v1744
      %1765 = vst.msk [vmem:[#allocation3 + $0x3c] sm:$0xf] %vm1759, %v1746
      %1766 = vst.msk [vmem:[#allocation3 + $0x48] sm:$0xf] %vm1759, %v1748
      %1767 = vst.msk [vmem:[#allocation3 + $0x54] sm:$0xf] %vm1759, %v1750
      %v1768 = vld [vmem:[#allocation2 + $0x2] sm:$0xff]
      %v1769 = vld [vmem:[#allocation2 + $0x12] sm:$0xff]
      %v1770 = vld [vmem:[#allocation2 + $0x22] sm:$0xff]
      %v1771 = vld [vmem:[#allocation2 + $0x32] sm:$0xff]
      %v1772 = vld [vmem:[#allocation2 + $0x42] sm:$0xff]
      %v1773 = vld [vmem:[#allocation2 + $0x52] sm:$0xff]
      %v1774 = vld [vmem:[#allocation2 + $0x62] sm:$0xff]
      %v1775 = vld [vmem:[#allocation2 + $0x72] sm:$0xff]
      %v1776 = vpack.c.bf16 %v1769, %v1768
      %v1777 = vpack.c.bf16 %v1771, %v1770
      %v1778 = vpack.c.bf16 %v1773, %v1772
      %v1779 = vpack.c.bf16 %v1775, %v1774
      %v1784 = vunpack.c.l.b16 %v1776
      %v1785 = vunpack.c.h.b16 %v1776
      %v1786 = vunpack.c.l.b16 %v1777
      %v1787 = vunpack.c.h.b16 %v1777
      %v1788 = vunpack.c.l.b16 %v1778
      %v1789 = vunpack.c.h.b16 %v1778
      %v1790 = vunpack.c.l.b16 %v1779
      %v1791 = vunpack.c.h.b16 %v1779
      %v1792 = vpack.c.b16 %v1784, %v1784
      %v1793 = vpack.c.b16 %v1785, %v1785
      %v1794 = vpack.c.b16 %v1786, %v1786
      %v1795 = vpack.c.b16 %v1787, %v1787
      %v1796 = vpack.c.b16 %v1788, %v1788
      %v1797 = vpack.c.b16 %v1789, %v1789
      %v1798 = vpack.c.b16 %v1790, %v1790
      %v1799 = vpack.c.b16 %v1791, %v1791
      %1800 = vrot.lane.b32.xlu0 %v1792, 64
      %v1801 = vpop.permute.xlu0 %1800
      %1802 = vrot.lane.b32.xlu0 %v1793, 64
      %v1803 = vpop.permute.xlu0 %1802
      %1804 = vrot.lane.b32.xlu0 %v1794, 64
      %v1805 = vpop.permute.xlu0 %1804
      %1806 = vrot.lane.b32.xlu0 %v1795, 64
      %v1807 = vpop.permute.xlu0 %1806
      %1808 = vrot.lane.b32.xlu0 %v1796, 64
      %v1809 = vpop.permute.xlu0 %1808
      %1810 = vrot.lane.b32.xlu0 %v1797, 64
      %v1811 = vpop.permute.xlu0 %1810
      %1812 = vrot.lane.b32.xlu0 %v1798, 64
      %v1813 = vpop.permute.xlu0 %1812
      %1814 = vrot.lane.b32.xlu0 %v1799, 64
      %v1815 = vpop.permute.xlu0 %1814
      %vm1824 = vcmask 781824
      %1825 = vst.msk [vmem:[#allocation3] sm:$0xf] %vm1824, %v1801
      %1826 = vst.msk [vmem:[#allocation3 + $0xc] sm:$0xf] %vm1824, %v1803
      %1827 = vst.msk [vmem:[#allocation3 + $0x18] sm:$0xf] %vm1824, %v1805
      %1828 = vst.msk [vmem:[#allocation3 + $0x24] sm:$0xf] %vm1824, %v1807
      %1829 = vst.msk [vmem:[#allocation3 + $0x30] sm:$0xf] %vm1824, %v1809
      %1830 = vst.msk [vmem:[#allocation3 + $0x3c] sm:$0xf] %vm1824, %v1811
      %1831 = vst.msk [vmem:[#allocation3 + $0x48] sm:$0xf] %vm1824, %v1813
      %1832 = vst.msk [vmem:[#allocation3 + $0x54] sm:$0xf] %vm1824, %v1815
      %v1833 = vld [vmem:[%s1645] sm:$0xff]
      %v1834 = vld [vmem:[%s1645 + $0x10] sm:$0xff]
      %v1835 = vld [vmem:[%s1645 + $0x20] sm:$0xff]
      %v1836 = vld [vmem:[%s1645 + $0x30] sm:$0xff]
      %v1837 = vld [vmem:[%s1645 + $0x40] sm:$0xff]
      %v1838 = vld [vmem:[%s1645 + $0x50] sm:$0xff]
      %v1839 = vld [vmem:[%s1645 + $0x60] sm:$0xff]
      %v1840 = vld [vmem:[%s1645 + $0x70] sm:$0xff]
      %v1841 = vpack.c.bf16 %v1834, %v1833
      %v1842 = vpack.c.bf16 %v1836, %v1835
      %v1843 = vpack.c.bf16 %v1838, %v1837
      %v1844 = vpack.c.bf16 %v1840, %v1839
      %v1849 = vunpack.c.l.b16 %v1841
      %v1850 = vunpack.c.h.b16 %v1841
      %v1851 = vunpack.c.l.b16 %v1842
      %v1852 = vunpack.c.h.b16 %v1842
      %v1853 = vunpack.c.l.b16 %v1843
      %v1854 = vunpack.c.h.b16 %v1843
      %v1855 = vunpack.c.l.b16 %v1844
      %v1856 = vunpack.c.h.b16 %v1844
      %v1857 = vpack.c.b16 %v1849, %v1849
      %v1858 = vpack.c.b16 %v1850, %v1850
      %v1859 = vpack.c.b16 %v1851, %v1851
      %v1860 = vpack.c.b16 %v1852, %v1852
      %v1861 = vpack.c.b16 %v1853, %v1853
      %v1862 = vpack.c.b16 %v1854, %v1854
      %v1863 = vpack.c.b16 %v1855, %v1855
      %v1864 = vpack.c.b16 %v1856, %v1856
      %1865 = vrot.lane.b32.xlu0 %v1857, 96
      %v1866 = vpop.permute.xlu0 %1865
      %1867 = vrot.lane.b32.xlu0 %v1858, 96
      %v1868 = vpop.permute.xlu0 %1867
      %1869 = vrot.lane.b32.xlu0 %v1859, 96
      %v1870 = vpop.permute.xlu0 %1869
      %1871 = vrot.lane.b32.xlu0 %v1860, 96
      %v1872 = vpop.permute.xlu0 %1871
      %1873 = vrot.lane.b32.xlu0 %v1861, 96
      %v1874 = vpop.permute.xlu0 %1873
      %1875 = vrot.lane.b32.xlu0 %v1862, 96
      %v1876 = vpop.permute.xlu0 %1875
      %1877 = vrot.lane.b32.xlu0 %v1863, 96
      %v1878 = vpop.permute.xlu0 %1877
      %1879 = vrot.lane.b32.xlu0 %v1864, 96
      %v1880 = vpop.permute.xlu0 %1879
      %vm1889 = vcmask 1044224
      %1890 = vst.msk [vmem:[#allocation3] sm:$0xf] %vm1889, %v1866
      %1891 = vst.msk [vmem:[#allocation3 + $0xc] sm:$0xf] %vm1889, %v1868
      %1892 = vst.msk [vmem:[#allocation3 + $0x18] sm:$0xf] %vm1889, %v1870
      %1893 = vst.msk [vmem:[#allocation3 + $0x24] sm:$0xf] %vm1889, %v1872
      %1894 = vst.msk [vmem:[#allocation3 + $0x30] sm:$0xf] %vm1889, %v1874
      %1895 = vst.msk [vmem:[#allocation3 + $0x3c] sm:$0xf] %vm1889, %v1876
      %1896 = vst.msk [vmem:[#allocation3 + $0x48] sm:$0xf] %vm1889, %v1878
      %1897 = vst.msk [vmem:[#allocation3 + $0x54] sm:$0xf] %vm1889, %v1880
      %v1898 = vld [vmem:[%s1645 + $0x1] sm:$0xff]
      %v1899 = vld [vmem:[%s1645 + $0x11] sm:$0xff]
      %v1900 = vld [vmem:[%s1645 + $0x21] sm:$0xff]
      %v1901 = vld [vmem:[%s1645 + $0x31] sm:$0xff]
      %v1902 = vld [vmem:[%s1645 + $0x41] sm:$0xff]
      %v1903 = vld [vmem:[%s1645 + $0x51] sm:$0xff]
      %v1904 = vld [vmem:[%s1645 + $0x61] sm:$0xff]
      %v1905 = vld [vmem:[%s1645 + $0x71] sm:$0xff]
      %v1906 = vpack.c.bf16 %v1899, %v1898
      %v1907 = vpack.c.bf16 %v1901, %v1900
      %v1908 = vpack.c.bf16 %v1903, %v1902
      %v1909 = vpack.c.bf16 %v1905, %v1904
      %v1914 = vunpack.c.l.b16 %v1906
      %v1915 = vunpack.c.h.b16 %v1906
      %v1916 = vunpack.c.l.b16 %v1907
      %v1917 = vunpack.c.h.b16 %v1907
      %v1918 = vunpack.c.l.b16 %v1908
      %v1919 = vunpack.c.h.b16 %v1908
      %v1920 = vunpack.c.l.b16 %v1909
      %v1921 = vunpack.c.h.b16 %v1909
      %v1922 = vpack.c.b16 %v1914, %v1914
      %v1923 = vpack.c.b16 %v1915, %v1915
      %v1924 = vpack.c.b16 %v1916, %v1916
      %v1925 = vpack.c.b16 %v1917, %v1917
      %v1926 = vpack.c.b16 %v1918, %v1918
      %v1927 = vpack.c.b16 %v1919, %v1919
      %v1928 = vpack.c.b16 %v1920, %v1920
      %v1929 = vpack.c.b16 %v1921, %v1921
      %1938 = vst.msk [vmem:[#allocation3 + $0x4] sm:$0xf] %vm1694, %v1922
      %1939 = vst.msk [vmem:[#allocation3 + $0x10] sm:$0xf] %vm1694, %v1923
      %1940 = vst.msk [vmem:[#allocation3 + $0x1c] sm:$0xf] %vm1694, %v1924
      %1941 = vst.msk [vmem:[#allocation3 + $0x28] sm:$0xf] %vm1694, %v1925
      %1942 = vst.msk [vmem:[#allocation3 + $0x34] sm:$0xf] %vm1694, %v1926
      %1943 = vst.msk [vmem:[#allocation3 + $0x40] sm:$0xf] %vm1694, %v1927
      %1944 = vst.msk [vmem:[#allocation3 + $0x4c] sm:$0xf] %vm1694, %v1928
      %1945 = vst.msk [vmem:[#allocation3 + $0x58] sm:$0xf] %vm1694, %v1929
      %v1946 = vld [vmem:[%s1645 + $0x2] sm:$0xff]
      %v1947 = vld [vmem:[%s1645 + $0x12] sm:$0xff]
      %v1948 = vld [vmem:[%s1645 + $0x22] sm:$0xff]
      %v1949 = vld [vmem:[%s1645 + $0x32] sm:$0xff]
      %v1950 = vld [vmem:[%s1645 + $0x42] sm:$0xff]
      %v1951 = vld [vmem:[%s1645 + $0x52] sm:$0xff]
      %v1952 = vld [vmem:[%s1645 + $0x62] sm:$0xff]
      %v1953 = vld [vmem:[%s1645 + $0x72] sm:$0xff]
      %v1954 = vpack.c.bf16 %v1947, %v1946
      %v1955 = vpack.c.bf16 %v1949, %v1948
      %v1956 = vpack.c.bf16 %v1951, %v1950
      %v1957 = vpack.c.bf16 %v1953, %v1952
      %v1962 = vunpack.c.l.b16 %v1954
      %v1963 = vunpack.c.h.b16 %v1954
      %v1964 = vunpack.c.l.b16 %v1955
      %v1965 = vunpack.c.h.b16 %v1955
      %v1966 = vunpack.c.l.b16 %v1956
      %v1967 = vunpack.c.h.b16 %v1956
      %v1968 = vunpack.c.l.b16 %v1957
      %v1969 = vunpack.c.h.b16 %v1957
      %v1970 = vpack.c.b16 %v1962, %v1962
      %v1971 = vpack.c.b16 %v1963, %v1963
      %v1972 = vpack.c.b16 %v1964, %v1964
      %v1973 = vpack.c.b16 %v1965, %v1965
      %v1974 = vpack.c.b16 %v1966, %v1966
      %v1975 = vpack.c.b16 %v1967, %v1967
      %v1976 = vpack.c.b16 %v1968, %v1968
      %v1977 = vpack.c.b16 %v1969, %v1969
      %1978 = vrot.lane.b32.xlu0 %v1970, 32
      %v1979 = vpop.permute.xlu0 %1978
      %1980 = vrot.lane.b32.xlu0 %v1971, 32
      %v1981 = vpop.permute.xlu0 %1980
      %1982 = vrot.lane.b32.xlu0 %v1972, 32
      %v1983 = vpop.permute.xlu0 %1982
      %1984 = vrot.lane.b32.xlu0 %v1973, 32
      %v1985 = vpop.permute.xlu0 %1984
      %1986 = vrot.lane.b32.xlu0 %v1974, 32
      %v1987 = vpop.permute.xlu0 %1986
      %1988 = vrot.lane.b32.xlu0 %v1975, 32
      %v1989 = vpop.permute.xlu0 %1988
      %1990 = vrot.lane.b32.xlu0 %v1976, 32
      %v1991 = vpop.permute.xlu0 %1990
      %1992 = vrot.lane.b32.xlu0 %v1977, 32
      %v1993 = vpop.permute.xlu0 %1992
      %2002 = vst.msk [vmem:[#allocation3 + $0x4] sm:$0xf] %vm1759, %v1979
      %2003 = vst.msk [vmem:[#allocation3 + $0x10] sm:$0xf] %vm1759, %v1981
      %2004 = vst.msk [vmem:[#allocation3 + $0x1c] sm:$0xf] %vm1759, %v1983
      %2005 = vst.msk [vmem:[#allocation3 + $0x28] sm:$0xf] %vm1759, %v1985
      %2006 = vst.msk [vmem:[#allocation3 + $0x34] sm:$0xf] %vm1759, %v1987
      %2007 = vst.msk [vmem:[#allocation3 + $0x40] sm:$0xf] %vm1759, %v1989
      %2008 = vst.msk [vmem:[#allocation3 + $0x4c] sm:$0xf] %vm1759, %v1991
      %2009 = vst.msk [vmem:[#allocation3 + $0x58] sm:$0xf] %vm1759, %v1993
      %s2010 = scalar_lea.vmem [#allocation2], 32
      %v2011 = vld [vmem:[%s2010] sm:$0xff]
      %v2012 = vld [vmem:[%s2010 + $0x10] sm:$0xff]
      %v2013 = vld [vmem:[%s2010 + $0x20] sm:$0xff]
      %v2014 = vld [vmem:[%s2010 + $0x30] sm:$0xff]
      %v2015 = vld [vmem:[%s2010 + $0x40] sm:$0xff]
      %v2016 = vld [vmem:[%s2010 + $0x50] sm:$0xff]
      %v2017 = vld [vmem:[%s2010 + $0x60] sm:$0xff]
      %v2018 = vld [vmem:[%s2010 + $0x70] sm:$0xff]
      %v2019 = vpack.c.bf16 %v2012, %v2011
      %v2020 = vpack.c.bf16 %v2014, %v2013
      %v2021 = vpack.c.bf16 %v2016, %v2015
      %v2022 = vpack.c.bf16 %v2018, %v2017
      %v2027 = vunpack.c.l.b16 %v2019
      %v2028 = vunpack.c.h.b16 %v2019
      %v2029 = vunpack.c.l.b16 %v2020
      %v2030 = vunpack.c.h.b16 %v2020
      %v2031 = vunpack.c.l.b16 %v2021
      %v2032 = vunpack.c.h.b16 %v2021
      %v2033 = vunpack.c.l.b16 %v2022
      %v2034 = vunpack.c.h.b16 %v2022
      %v2035 = vpack.c.b16 %v2027, %v2027
      %v2036 = vpack.c.b16 %v2028, %v2028
      %v2037 = vpack.c.b16 %v2029, %v2029
      %v2038 = vpack.c.b16 %v2030, %v2030
      %v2039 = vpack.c.b16 %v2031, %v2031
      %v2040 = vpack.c.b16 %v2032, %v2032
      %v2041 = vpack.c.b16 %v2033, %v2033
      %v2042 = vpack.c.b16 %v2034, %v2034
      %2043 = vrot.lane.b32.xlu0 %v2035, 64
      %v2044 = vpop.permute.xlu0 %2043
      %2045 = vrot.lane.b32.xlu0 %v2036, 64
      %v2046 = vpop.permute.xlu0 %2045
      %2047 = vrot.lane.b32.xlu0 %v2037, 64
      %v2048 = vpop.permute.xlu0 %2047
      %2049 = vrot.lane.b32.xlu0 %v2038, 64
      %v2050 = vpop.permute.xlu0 %2049
      %2051 = vrot.lane.b32.xlu0 %v2039, 64
      %v2052 = vpop.permute.xlu0 %2051
      %2053 = vrot.lane.b32.xlu0 %v2040, 64
      %v2054 = vpop.permute.xlu0 %2053
      %2055 = vrot.lane.b32.xlu0 %v2041, 64
      %v2056 = vpop.permute.xlu0 %2055
      %2057 = vrot.lane.b32.xlu0 %v2042, 64
      %v2058 = vpop.permute.xlu0 %2057
      %2067 = vst.msk [vmem:[#allocation3 + $0x4] sm:$0xf] %vm1824, %v2044
      %2068 = vst.msk [vmem:[#allocation3 + $0x10] sm:$0xf] %vm1824, %v2046
      %2069 = vst.msk [vmem:[#allocation3 + $0x1c] sm:$0xf] %vm1824, %v2048
      %2070 = vst.msk [vmem:[#allocation3 + $0x28] sm:$0xf] %vm1824, %v2050
      %2071 = vst.msk [vmem:[#allocation3 + $0x34] sm:$0xf] %vm1824, %v2052
      %2072 = vst.msk [vmem:[#allocation3 + $0x40] sm:$0xf] %vm1824, %v2054
      %2073 = vst.msk [vmem:[#allocation3 + $0x4c] sm:$0xf] %vm1824, %v2056
      %2074 = vst.msk [vmem:[#allocation3 + $0x58] sm:$0xf] %vm1824, %v2058
      %v2075 = vld [vmem:[%s2010 + $0x1] sm:$0xff]
      %v2076 = vld [vmem:[%s2010 + $0x11] sm:$0xff]
      %v2077 = vld [vmem:[%s2010 + $0x21] sm:$0xff]
      %v2078 = vld [vmem:[%s2010 + $0x31] sm:$0xff]
      %v2079 = vld [vmem:[%s2010 + $0x41] sm:$0xff]
      %v2080 = vld [vmem:[%s2010 + $0x51] sm:$0xff]
      %v2081 = vld [vmem:[%s2010 + $0x61] sm:$0xff]
      %v2082 = vld [vmem:[%s2010 + $0x71] sm:$0xff]
      %v2083 = vpack.c.bf16 %v2076, %v2075
      %v2084 = vpack.c.bf16 %v2078, %v2077
      %v2085 = vpack.c.bf16 %v2080, %v2079
      %v2086 = vpack.c.bf16 %v2082, %v2081
      %v2091 = vunpack.c.l.b16 %v2083
      %v2092 = vunpack.c.h.b16 %v2083
      %v2093 = vunpack.c.l.b16 %v2084
      %v2094 = vunpack.c.h.b16 %v2084
      %v2095 = vunpack.c.l.b16 %v2085
      %v2096 = vunpack.c.h.b16 %v2085
      %v2097 = vunpack.c.l.b16 %v2086
      %v2098 = vunpack.c.h.b16 %v2086
      %v2099 = vpack.c.b16 %v2091, %v2091
      %v2100 = vpack.c.b16 %v2092, %v2092
      %v2101 = vpack.c.b16 %v2093, %v2093
      %v2102 = vpack.c.b16 %v2094, %v2094
      %v2103 = vpack.c.b16 %v2095, %v2095
      %v2104 = vpack.c.b16 %v2096, %v2096
      %v2105 = vpack.c.b16 %v2097, %v2097
      %v2106 = vpack.c.b16 %v2098, %v2098
      %2107 = vrot.lane.b32.xlu0 %v2099, 96
      %v2108 = vpop.permute.xlu0 %2107
      %2109 = vrot.lane.b32.xlu0 %v2100, 96
      %v2110 = vpop.permute.xlu0 %2109
      %2111 = vrot.lane.b32.xlu0 %v2101, 96
      %v2112 = vpop.permute.xlu0 %2111
      %2113 = vrot.lane.b32.xlu0 %v2102, 96
      %v2114 = vpop.permute.xlu0 %2113
      %2115 = vrot.lane.b32.xlu0 %v2103, 96
      %v2116 = vpop.permute.xlu0 %2115
      %2117 = vrot.lane.b32.xlu0 %v2104, 96
      %v2118 = vpop.permute.xlu0 %2117
      %2119 = vrot.lane.b32.xlu0 %v2105, 96
      %v2120 = vpop.permute.xlu0 %2119
      %2121 = vrot.lane.b32.xlu0 %v2106, 96
      %v2122 = vpop.permute.xlu0 %2121
      %2131 = vst.msk [vmem:[#allocation3 + $0x4] sm:$0xf] %vm1889, %v2108
      %2132 = vst.msk [vmem:[#allocation3 + $0x10] sm:$0xf] %vm1889, %v2110
      %2133 = vst.msk [vmem:[#allocation3 + $0x1c] sm:$0xf] %vm1889, %v2112
      %2134 = vst.msk [vmem:[#allocation3 + $0x28] sm:$0xf] %vm1889, %v2114
      %2135 = vst.msk [vmem:[#allocation3 + $0x34] sm:$0xf] %vm1889, %v2116
      %2136 = vst.msk [vmem:[#allocation3 + $0x40] sm:$0xf] %vm1889, %v2118
      %2137 = vst.msk [vmem:[#allocation3 + $0x4c] sm:$0xf] %vm1889, %v2120
      %2138 = vst.msk [vmem:[#allocation3 + $0x58] sm:$0xf] %vm1889, %v2122
      %v2139 = vld [vmem:[%s2010 + $0x2] sm:$0xff]
      %v2140 = vld [vmem:[%s2010 + $0x12] sm:$0xff]
      %v2141 = vld [vmem:[%s2010 + $0x22] sm:$0xff]
      %v2142 = vld [vmem:[%s2010 + $0x32] sm:$0xff]
      %v2143 = vld [vmem:[%s2010 + $0x42] sm:$0xff]
      %v2144 = vld [vmem:[%s2010 + $0x52] sm:$0xff]
      %v2145 = vld [vmem:[%s2010 + $0x62] sm:$0xff]
      %v2146 = vld [vmem:[%s2010 + $0x72] sm:$0xff]
      %v2147 = vpack.c.bf16 %v2140, %v2139
      %v2148 = vpack.c.bf16 %v2142, %v2141
      %v2149 = vpack.c.bf16 %v2144, %v2143
      %v2150 = vpack.c.bf16 %v2146, %v2145
      %v2155 = vunpack.c.l.b16 %v2147
      %v2156 = vunpack.c.h.b16 %v2147
      %v2157 = vunpack.c.l.b16 %v2148
      %v2158 = vunpack.c.h.b16 %v2148
      %v2159 = vunpack.c.l.b16 %v2149
      %v2160 = vunpack.c.h.b16 %v2149
      %v2161 = vunpack.c.l.b16 %v2150
      %v2162 = vunpack.c.h.b16 %v2150
      %v2163 = vpack.c.b16 %v2155, %v2155
      %v2164 = vpack.c.b16 %v2156, %v2156
      %v2165 = vpack.c.b16 %v2157, %v2157
      %v2166 = vpack.c.b16 %v2158, %v2158
      %v2167 = vpack.c.b16 %v2159, %v2159
      %v2168 = vpack.c.b16 %v2160, %v2160
      %v2169 = vpack.c.b16 %v2161, %v2161
      %v2170 = vpack.c.b16 %v2162, %v2162
      %2179 = vst.msk [vmem:[#allocation3 + $0x8] sm:$0xf] %vm1694, %v2163
      %2180 = vst.msk [vmem:[#allocation3 + $0x14] sm:$0xf] %vm1694, %v2164
      %2181 = vst.msk [vmem:[#allocation3 + $0x20] sm:$0xf] %vm1694, %v2165
      %2182 = vst.msk [vmem:[#allocation3 + $0x2c] sm:$0xf] %vm1694, %v2166
      %2183 = vst.msk [vmem:[#allocation3 + $0x38] sm:$0xf] %vm1694, %v2167
      %2184 = vst.msk [vmem:[#allocation3 + $0x44] sm:$0xf] %vm1694, %v2168
      %2185 = vst.msk [vmem:[#allocation3 + $0x50] sm:$0xf] %vm1694, %v2169
      %2186 = vst.msk [vmem:[#allocation3 + $0x5c] sm:$0xf] %vm1694, %v2170
      %v2187 = vld [vmem:[#allocation3] sm:$0xff]
      %v2188 = vld [vmem:[#allocation3 + $0x8] sm:$0xf]
      %v2189 = vld [vmem:[#allocation3 + $0xc] sm:$0xff]
      %v2190 = vld [vmem:[#allocation3 + $0x14] sm:$0xf]
      %v2191 = vld [vmem:[#allocation3 + $0x18] sm:$0xff]
      %v2192 = vld [vmem:[#allocation3 + $0x20] sm:$0xf]
      %v2193 = vld [vmem:[#allocation3 + $0x24] sm:$0xff]
      %v2194 = vld [vmem:[#allocation3 + $0x2c] sm:$0xf]
      %v2195 = vld [vmem:[#allocation3 + $0x30] sm:$0xff]
      %v2196 = vld [vmem:[#allocation3 + $0x38] sm:$0xf]
      %v2197 = vld [vmem:[#allocation3 + $0x3c] sm:$0xff]
      %v2198 = vld [vmem:[#allocation3 + $0x44] sm:$0xf]
      %v2199 = vld [vmem:[#allocation3 + $0x48] sm:$0xff]
      %v2200 = vld [vmem:[#allocation3 + $0x50] sm:$0xf]
      %v2201 = vld [vmem:[#allocation3 + $0x54] sm:$0xff]
      %v2202 = vld [vmem:[#allocation3 + $0x5c] sm:$0xf]
      %v2203 = vld [vmem:[%s3] sm:$0xf]
      %v2204 = vld [vmem:[%s3 + $0x4] sm:$0xf]
      %v2205 = vld [vmem:[%s3 + $0x8] sm:$0xf]
      %v2206 = vld [vmem:[%s3 + $0xc] sm:$0xf]
      %v2207 = vld [vmem:[%s3 + $0x10] sm:$0xf]
      %v2208 = vld [vmem:[%s3 + $0x14] sm:$0xf]
      %v2209 = vld [vmem:[%s3 + $0x18] sm:$0xf]
      %v2210 = vld [vmem:[%s3 + $0x1c] sm:$0xf]
      %v2211 = vld [vmem:[%s3 + $0x20] sm:$0xf]
      %v2212 = vld [vmem:[%s3 + $0x24] sm:$0xf]
      %v2213 = vld [vmem:[%s3 + $0x28] sm:$0xf]
      %v2214 = vld [vmem:[%s3 + $0x2c] sm:$0xf]
      %v2215 = vld [vmem:[%s3 + $0x30] sm:$0xf]
      %v2216 = vld [vmem:[%s3 + $0x34] sm:$0xf]
      %v2217 = vld [vmem:[%s3 + $0x38] sm:$0xf]
      %v2218 = vld [vmem:[%s3 + $0x3c] sm:$0xf]
      %v2219 = vld [vmem:[%s3 + $0x40] sm:$0xf]
      %v2220 = vld [vmem:[%s3 + $0x44] sm:$0xf]
      %v2221 = vld [vmem:[%s3 + $0x48] sm:$0xf]
      %v2222 = vld [vmem:[%s3 + $0x4c] sm:$0xf]
      %v2223 = vld [vmem:[%s3 + $0x50] sm:$0xf]
      %v2224 = vld [vmem:[%s3 + $0x54] sm:$0xf]
      %v2225 = vld [vmem:[%s3 + $0x58] sm:$0xf]
      %v2226 = vld [vmem:[%s3 + $0x5c] sm:$0xf]
      %v2227 = vld [vmem:[%s3 + $0x60] sm:$0xf]
      %v2228 = vld [vmem:[%s3 + $0x64] sm:$0xf]
      %v2229 = vld [vmem:[%s3 + $0x68] sm:$0xf]
      %v2230 = vld [vmem:[%s3 + $0x6c] sm:$0xf]
      %v2231 = vld [vmem:[%s3 + $0x70] sm:$0xf]
      %v2232 = vld [vmem:[%s3 + $0x74] sm:$0xf]
      %v2233 = vld [vmem:[%s3 + $0x78] sm:$0xf]
      %v2234 = vld [vmem:[%s3 + $0x7c] sm:$0xf]
      %v2235 = vld [vmem:[%s3 + $0x80] sm:$0xf]
      %v2236 = vld [vmem:[%s3 + $0x84] sm:$0xf]
      %v2237 = vld [vmem:[%s3 + $0x88] sm:$0xf]
      %v2238 = vld [vmem:[%s3 + $0x8c] sm:$0xf]
      %v2239 = vld [vmem:[%s4] sm:$0x1]
      %v2241 = vlaneseq
      %v2242 = vshrl.u32 %v2241, 7
      %v2243 = vsub.s32 0, %v2242
      %v2244 = vrot.slane %v2239, %v2243
      %v2262 = vunpack.c.l.b16 %v2187
      %v2263 = vunpack.c.h.b16 %v2187
      %v2264 = vunpack.c.l.b16 %v2188
      %v2265 = vunpack.c.l.b16 %v2189
      %v2266 = vunpack.c.h.b16 %v2189
      %v2267 = vunpack.c.l.b16 %v2190
      %v2268 = vunpack.c.l.b16 %v2191
      %v2269 = vunpack.c.h.b16 %v2191
      %v2270 = vunpack.c.l.b16 %v2192
      %v2271 = vunpack.c.l.b16 %v2193
      %v2272 = vunpack.c.h.b16 %v2193
      %v2273 = vunpack.c.l.b16 %v2194
      %v2274 = vunpack.c.l.b16 %v2195
      %v2275 = vunpack.c.h.b16 %v2195
      %v2276 = vunpack.c.l.b16 %v2196
      %v2277 = vunpack.c.l.b16 %v2197
      %v2278 = vunpack.c.h.b16 %v2197
      %v2279 = vunpack.c.l.b16 %v2198
      %v2280 = vunpack.c.l.b16 %v2199
      %v2281 = vunpack.c.h.b16 %v2199
      %v2282 = vunpack.c.l.b16 %v2200
      %v2283 = vunpack.c.l.b16 %v2201
      %v2284 = vunpack.c.h.b16 %v2201
      %v2285 = vunpack.c.l.b16 %v2202
      %v2286 = vpack.c.b16 %v2265, %v2262
      %v2287 = vpack.c.b16 %v2266, %v2263
      %v2288 = vpack.c.b16 %v2267, %v2264
      %v2289 = vpack.c.b16 %v2271, %v2268
      %v2290 = vpack.c.b16 %v2272, %v2269
      %v2291 = vpack.c.b16 %v2273, %v2270
      %v2292 = vpack.c.b16 %v2277, %v2274
      %v2293 = vpack.c.b16 %v2278, %v2275
      %v2294 = vpack.c.b16 %v2279, %v2276
      %v2295 = vpack.c.b16 %v2283, %v2280
      %v2296 = vpack.c.b16 %v2284, %v2281
      %v2297 = vpack.c.b16 %v2285, %v2282
      %v2342 = vunpack.c.l.b16 %v2203
      %v2343 = vunpack.c.l.b16 %v2204
      %v2344 = vunpack.c.l.b16 %v2205
      %v2345 = vunpack.c.l.b16 %v2206
      %v2346 = vunpack.c.l.b16 %v2207
      %v2347 = vunpack.c.l.b16 %v2208
      %v2348 = vunpack.c.l.b16 %v2209
      %v2349 = vunpack.c.l.b16 %v2210
      %v2350 = vunpack.c.l.b16 %v2211
      %v2351 = vunpack.c.l.b16 %v2212
      %v2352 = vunpack.c.l.b16 %v2213
      %v2353 = vunpack.c.l.b16 %v2214
      %v2354 = vunpack.c.l.b16 %v2215
      %v2355 = vunpack.c.l.b16 %v2216
      %v2356 = vunpack.c.l.b16 %v2217
      %v2357 = vunpack.c.l.b16 %v2218
      %v2358 = vunpack.c.l.b16 %v2219
      %v2359 = vunpack.c.l.b16 %v2220
      %v2360 = vunpack.c.l.b16 %v2221
      %v2361 = vunpack.c.l.b16 %v2222
      %v2362 = vunpack.c.l.b16 %v2223
      %v2363 = vunpack.c.l.b16 %v2224
      %v2364 = vunpack.c.l.b16 %v2225
      %v2365 = vunpack.c.l.b16 %v2226
      %v2366 = vunpack.c.l.b16 %v2227
      %v2367 = vunpack.c.l.b16 %v2228
      %v2368 = vunpack.c.l.b16 %v2229
      %v2369 = vunpack.c.l.b16 %v2230
      %v2370 = vunpack.c.l.b16 %v2231
      %v2371 = vunpack.c.l.b16 %v2232
      %v2372 = vunpack.c.l.b16 %v2233
      %v2373 = vunpack.c.l.b16 %v2234
      %v2374 = vunpack.c.l.b16 %v2235
      %v2375 = vunpack.c.l.b16 %v2236
      %v2376 = vunpack.c.l.b16 %v2237
      %v2377 = vunpack.c.l.b16 %v2238
      %v2378 = vpack.c.b16 %v2343, %v2342
      %v2379 = vpack.c.b16 %v2345, %v2344
      %v2380 = vpack.c.b16 %v2347, %v2346
      %v2381 = vpack.c.b16 %v2349, %v2348
      %v2382 = vpack.c.b16 %v2351, %v2350
      %v2383 = vpack.c.b16 %v2353, %v2352
      %v2384 = vpack.c.b16 %v2355, %v2354
      %v2385 = vpack.c.b16 %v2357, %v2356
      %v2386 = vpack.c.b16 %v2359, %v2358
      %v2387 = vpack.c.b16 %v2361, %v2360
      %v2388 = vpack.c.b16 %v2363, %v2362
      %v2389 = vpack.c.b16 %v2365, %v2364
      %v2390 = vpack.c.b16 %v2367, %v2366
      %v2391 = vpack.c.b16 %v2369, %v2368
      %v2392 = vpack.c.b16 %v2371, %v2370
      %v2393 = vpack.c.b16 %v2373, %v2372
      %v2394 = vpack.c.b16 %v2375, %v2374
      %v2395 = vpack.c.b16 %v2377, %v2376
      %v2415 = vsel %vm361, %v2288, 0
      %v2418 = vsel %vm361, %v2291, 0
      %v2421 = vsel %vm361, %v2294, 0
      %v2424 = vsel %vm361, %v2297, 0
      %2426 = vmatprep.subr.bf16.mxu0 0
      %2427 = vmatpush1.bf16.msra.mxu0 %v2385
      %2428 = vmatprep.subr.bf16.mxu0 0
      %2429 = vmatpush1.bf16.msra.mxu0 %v2384
      %2430 = vmatprep.subr.bf16.mxu0 0
      %2431 = vmatpush1.bf16.msra.mxu0 %v2383
      %2432 = vmatprep.subr.bf16.mxu0 0
      %2433 = vmatpush1.bf16.msra.mxu0 %v2382
      %2434 = vmatprep.subr.bf16.mxu0 0
      %2435 = vmatpush1.bf16.msra.mxu0 %v2381
      %2436 = vmatprep.subr.bf16.mxu0 0
      %2437 = vmatpush1.bf16.msra.mxu0 %v2380
      %2438 = vmatprep.subr.bf16.mxu0 0
      %2439 = vmatpush1.bf16.msra.mxu0 %v2379
      %2440 = vmatprep.subr.bf16.mxu0 0
      %2441 = vmatpush1.bf16.msra.mxu0 %v2378
      %2442 = vmatprep.subr.bf16.mxu0 0
      %2443 = vmatpush2.bf16.msra.mxu0 %v2393
      %2444 = vmatprep.subr.bf16.mxu0 0
      %2445 = vmatpush2.bf16.msra.mxu0 %v2392
      %2446 = vmatprep.subr.bf16.mxu0 0
      %2447 = vmatpush2.bf16.msra.mxu0 %v2391
      %2448 = vmatprep.subr.bf16.mxu0 0
      %2449 = vmatpush2.bf16.msra.mxu0 %v2390
      %2450 = vmatprep.subr.bf16.mxu0 0
      %2451 = vmatpush2.bf16.msra.mxu0 %v2389
      %2452 = vmatprep.subr.bf16.mxu0 0
      %2453 = vmatpush2.bf16.msra.mxu0 %v2388
      %2454 = vmatprep.subr.bf16.mxu0 0
      %2455 = vmatpush2.bf16.msra.mxu0 %v2387
      %2456 = vmatprep.subr.bf16.mxu0 0
      %2457 = vmatpush2.bf16.msra.mxu0 %v2386
      %2458 = vmatprep.mubr.bf16.mxu0 %v2287
      %2459 = vmatmul.mubr.bf16.gmra.mxu0 %v2286
      %v2460 = vpop.f32.mrf.mxu0
      %v2461 = vadd.f32 %v2244, %v2460
      %v2462 = vpop.f32.mrf.mxu0
      %v2463 = vpop.f32.mrf.mxu0
      %v2464 = vadd.f32 %v2244, %v2463
      %v2465 = vpop.f32.mrf.mxu0
      %2466 = vmatprep.mubr.bf16.mxu0 %v2290
      %2467 = vmatmul.mubr.bf16.gmra.mxu0 %v2289
      %v2468 = vpop.f32.mrf.mxu0
      %v2469 = vadd.f32 %v2244, %v2468
      %v2470 = vpop.f32.mrf.mxu0
      %v2471 = vpop.f32.mrf.mxu0
      %v2472 = vadd.f32 %v2244, %v2471
      %v2473 = vpop.f32.mrf.mxu0
      %2474 = vmatprep.mubr.bf16.mxu0 %v2293
      %2475 = vmatmul.mubr.bf16.gmra.mxu0 %v2292
      %v2476 = vpop.f32.mrf.mxu0
      %v2477 = vadd.f32 %v2244, %v2476
      %v2478 = vpop.f32.mrf.mxu0
      %v2479 = vpop.f32.mrf.mxu0
      %v2480 = vadd.f32 %v2244, %v2479
      %v2481 = vpop.f32.mrf.mxu0
      %2482 = vmatprep.mubr.bf16.mxu0 %v2296
      %2483 = vmatmul.mubr.bf16.gmra.mxu0 %v2295
      %v2484 = vpop.f32.mrf.mxu0
      %v2485 = vadd.f32 %v2244, %v2484
      %v2486 = vpop.f32.mrf.mxu0
      %v2487 = vpop.f32.mrf.mxu0
      %v2488 = vadd.f32 %v2244, %v2487
      %v2489 = vpop.f32.mrf.mxu0
      %2490 = vdwg.mxu0
      %2491 = vmatprep.subr.bf16.mxu0 0
      %2492 = vmatpush1.bf16.msra.mxu0 0
      %2493 = vmatprep.subr.bf16.mxu0 0
      %2494 = vmatpush1.bf16.msra.mxu0 0
      %2495 = vmatprep.subr.bf16.mxu0 0
      %2496 = vmatpush1.bf16.msra.mxu0 0
      %2497 = vmatprep.subr.bf16.mxu0 0
      %2498 = vmatpush1.bf16.msra.mxu0 0
      %2499 = vmatprep.subr.bf16.mxu0 0
      %2500 = vmatpush1.bf16.msra.mxu0 0
      %2501 = vmatprep.subr.bf16.mxu0 0
      %2502 = vmatpush1.bf16.msra.mxu0 0
      %2503 = vmatprep.subr.bf16.mxu0 0
      %2504 = vmatpush1.bf16.msra.mxu0 %v2395
      %2505 = vmatprep.subr.bf16.mxu0 0
      %2506 = vmatpush1.bf16.msra.mxu0 %v2394
      %2507 = vmatprep.subr.bf16.mxu0 0
      %2508 = vmatpush2.bf16.msra.mxu0 0
      %2509 = vmatprep.subr.bf16.mxu0 0
      %2510 = vmatpush2.bf16.msra.mxu0 0
      %2511 = vmatprep.subr.bf16.mxu0 0
      %2512 = vmatpush2.bf16.msra.mxu0 0
      %2513 = vmatprep.subr.bf16.mxu0 0
      %2514 = vmatpush2.bf16.msra.mxu0 0
      %2515 = vmatprep.subr.bf16.mxu0 0
      %2516 = vmatpush2.bf16.msra.mxu0 0
      %2517 = vmatprep.subr.bf16.mxu0 0
      %2518 = vmatpush2.bf16.msra.mxu0 0
      %2519 = vmatprep.subr.bf16.mxu0 0
      %2520 = vmatpush2.bf16.msra.mxu0 0
      %2521 = vmatprep.subr.bf16.mxu0 0
      %2522 = vmatpush2.bf16.msra.mxu0 0
      %2523 = vmatprep.mubr.bf16.mxu0 0
      %2524 = vmatmul.mubr.bf16.gmra.mxu0 %v2415
      %v2525 = vpop.f32.mrf.mxu0
      %v2526 = vadd.f32 %v2461, %v2525
      %v2527 = vpop.f32.mrf.mxu0
      %v2528 = vpop.f32.mrf.mxu0
      %v2529 = vadd.f32 %v2464, %v2528
      %v2530 = vpop.f32.mrf.mxu0
      %2531 = vmatprep.mubr.bf16.mxu0 0
      %2532 = vmatmul.mubr.bf16.gmra.mxu0 %v2418
      %v2533 = vpop.f32.mrf.mxu0
      %v2534 = vadd.f32 %v2469, %v2533
      %v2535 = vpop.f32.mrf.mxu0
      %v2536 = vpop.f32.mrf.mxu0
      %v2537 = vadd.f32 %v2472, %v2536
      %v2538 = vpop.f32.mrf.mxu0
      %2539 = vmatprep.mubr.bf16.mxu0 0
      %2540 = vmatmul.mubr.bf16.gmra.mxu0 %v2421
      %v2541 = vpop.f32.mrf.mxu0
      %v2542 = vadd.f32 %v2477, %v2541
      %v2543 = vpop.f32.mrf.mxu0
      %v2544 = vpop.f32.mrf.mxu0
      %v2545 = vadd.f32 %v2480, %v2544
      %v2546 = vpop.f32.mrf.mxu0
      %2547 = vmatprep.mubr.bf16.mxu0 0
      %2548 = vmatmul.mubr.bf16.gmra.mxu0 %v2424
      %v2549 = vpop.f32.mrf.mxu0
      %v2550 = vadd.f32 %v2485, %v2549
      %v2551 = vpop.f32.mrf.mxu0
      %v2552 = vpop.f32.mrf.mxu0
      %v2553 = vadd.f32 %v2488, %v2552
      %v2554 = vpop.f32.mrf.mxu0
      %2555 = vdwg.mxu0
      %v2556 = vmax.f32 %v2526, 0.0
      %v2557 = vmax.f32 %v2529, 0.0
      %v2558 = vmax.f32 %v2534, 0.0
      %v2559 = vmax.f32 %v2537, 0.0
      %v2560 = vmax.f32 %v2542, 0.0
      %v2561 = vmax.f32 %v2545, 0.0
      %v2562 = vmax.f32 %v2550, 0.0
      %v2563 = vmax.f32 %v2553, 0.0
      %v2564 = vmax.f32 %v2556, %v2557
      %v2565 = vmax.f32 %v2558, %v2559
      %v2566 = vmax.f32 %v2560, %v2561
      %v2567 = vmax.f32 %v2562, %v2563
      %v2572 = vcombine.high %v2564, %v2564
      %v2574 = vunpack.c.l.s4 1983009808
      %v2575 = vunpack.c.0.s8 %v2574
      %v2576 = vlaneseq
      %v2577 = vshrl.u32 %v2576, 7
      %v2578 = vsub.s32 %v2575, %v2577
      %v2579 = vrot.slane %v2564, %v2578
      %v2581 = vunpack.c.l.s4 1983009808
      %v2582 = vunpack.c.0.s8 %v2581
      %v2583 = vlaneseq
      %v2584 = vshrl.u32 %v2583, 7
      %v2585 = vsub.s32 %v2582, %v2584
      %v2586 = vrot.slane %v2572, %v2585
      %v2587 = vcombine.high %v2579, %v2579
      %v2588 = vcombine.high %v2586, %v2586
      %v2589 = vcombine.high %v2565, %v2565
      %v2591 = vunpack.c.l.s4 1983009808
      %v2592 = vunpack.c.0.s8 %v2591
      %v2593 = vlaneseq
      %v2594 = vshrl.u32 %v2593, 7
      %v2595 = vsub.s32 %v2592, %v2594
      %v2596 = vrot.slane %v2565, %v2595
      %v2598 = vunpack.c.l.s4 1983009808
      %v2599 = vunpack.c.0.s8 %v2598
      %v2600 = vlaneseq
      %v2601 = vshrl.u32 %v2600, 7
      %v2602 = vsub.s32 %v2599, %v2601
      %v2603 = vrot.slane %v2589, %v2602
      %v2604 = vcombine.high %v2596, %v2596
      %v2605 = vcombine.high %v2603, %v2603
      %v2606 = vcombine.high %v2566, %v2566
      %v2608 = vunpack.c.l.s4 1983009808
      %v2609 = vunpack.c.0.s8 %v2608
      %v2610 = vlaneseq
      %v2611 = vshrl.u32 %v2610, 7
      %v2612 = vsub.s32 %v2609, %v2611
      %v2613 = vrot.slane %v2566, %v2612
      %v2615 = vunpack.c.l.s4 1983009808
      %v2616 = vunpack.c.0.s8 %v2615
      %v2617 = vlaneseq
      %v2618 = vshrl.u32 %v2617, 7
      %v2619 = vsub.s32 %v2616, %v2618
      %v2620 = vrot.slane %v2606, %v2619
      %v2621 = vcombine.high %v2613, %v2613
      %v2622 = vcombine.high %v2620, %v2620
      %v2623 = vcombine.high %v2567, %v2567
      %v2625 = vunpack.c.l.s4 1983009808
      %v2626 = vunpack.c.0.s8 %v2625
      %v2627 = vlaneseq
      %v2628 = vshrl.u32 %v2627, 7
      %v2629 = vsub.s32 %v2626, %v2628
      %v2630 = vrot.slane %v2567, %v2629
      %v2632 = vunpack.c.l.s4 1983009808
      %v2633 = vunpack.c.0.s8 %v2632
      %v2634 = vlaneseq
      %v2635 = vshrl.u32 %v2634, 7
      %v2636 = vsub.s32 %v2633, %v2635
      %v2637 = vrot.slane %v2623, %v2636
      %v2638 = vcombine.high %v2630, %v2630
      %v2639 = vcombine.high %v2637, %v2637
      %v2656 = vrot.slane %v2579, 7
      %v2657 = vrot.slane %v2656, 2
      %v2658 = vrot.slane %v2587, 7
      %v2659 = vrot.slane %v2658, 2
      %v2660 = vrot.slane %v2586, 7
      %v2661 = vrot.slane %v2660, 2
      %v2662 = vrot.slane %v2588, 7
      %v2663 = vrot.slane %v2662, 2
      %v2664 = vrot.slane %v2596, 7
      %v2665 = vrot.slane %v2664, 2
      %v2666 = vrot.slane %v2604, 7
      %v2667 = vrot.slane %v2666, 2
      %v2668 = vrot.slane %v2603, 7
      %v2669 = vrot.slane %v2668, 2
      %v2670 = vrot.slane %v2605, 7
      %v2671 = vrot.slane %v2670, 2
      %v2672 = vrot.slane %v2613, 7
      %v2673 = vrot.slane %v2672, 2
      %v2674 = vrot.slane %v2621, 7
      %v2675 = vrot.slane %v2674, 2
      %v2676 = vrot.slane %v2620, 7
      %v2677 = vrot.slane %v2676, 2
      %v2678 = vrot.slane %v2622, 7
      %v2679 = vrot.slane %v2678, 2
      %v2680 = vrot.slane %v2630, 7
      %v2681 = vrot.slane %v2680, 2
      %v2682 = vrot.slane %v2638, 7
      %v2683 = vrot.slane %v2682, 2
      %v2684 = vrot.slane %v2637, 7
      %v2685 = vrot.slane %v2684, 2
      %v2686 = vrot.slane %v2639, 7
      %v2687 = vrot.slane %v2686, 2
      %v2704 = vmax.f32 %v2579, %v2657
      %v2705 = vmax.f32 %v2587, %v2659
      %v2706 = vmax.f32 %v2586, %v2661
      %v2707 = vmax.f32 %v2588, %v2663
      %v2708 = vmax.f32 %v2596, %v2665
      %v2709 = vmax.f32 %v2604, %v2667
      %v2710 = vmax.f32 %v2603, %v2669
      %v2711 = vmax.f32 %v2605, %v2671
      %v2712 = vmax.f32 %v2613, %v2673
      %v2713 = vmax.f32 %v2621, %v2675
      %v2714 = vmax.f32 %v2620, %v2677
      %v2715 = vmax.f32 %v2622, %v2679
      %v2716 = vmax.f32 %v2630, %v2681
      %v2717 = vmax.f32 %v2638, %v2683
      %v2718 = vmax.f32 %v2637, %v2685
      %v2719 = vmax.f32 %v2639, %v2687
      %v2720 = vpack.c.bf16 %v2704, %v2704
      %v2721 = vpack.c.bf16 %v2708, %v2708
      %v2722 = vpack.c.bf16 %v2712, %v2712
      %v2723 = vpack.c.bf16 %v2716, %v2716
      %v2729 = vunpack.c.l.s4 1983009808
      %v2730 = vunpack.c.0.s8 %v2729
      %v2731 = vlaneseq
      %v2732 = vshrl.u32 %v2731, 7
      %v2733 = vsub.s32 %v2730, %v2732
      %v2734 = vrot.slane %v2720, %v2733
      %v2736 = vunpack.c.l.s4 1983009808
      %v2737 = vunpack.c.0.s8 %v2736
      %v2738 = vlaneseq
      %v2739 = vshrl.u32 %v2738, 7
      %v2740 = vsub.s32 %v2737, %v2739
      %v2741 = vrot.slane %v2721, %v2740
      %v2743 = vunpack.c.l.s4 1983009808
      %v2744 = vunpack.c.0.s8 %v2743
      %v2745 = vlaneseq
      %v2746 = vshrl.u32 %v2745, 7
      %v2747 = vsub.s32 %v2744, %v2746
      %v2748 = vrot.slane %v2722, %v2747
      %v2750 = vunpack.c.l.s4 1983009808
      %v2751 = vunpack.c.0.s8 %v2750
      %v2752 = vlaneseq
      %v2753 = vshrl.u32 %v2752, 7
      %v2754 = vsub.s32 %v2751, %v2753
      %v2755 = vrot.slane %v2723, %v2754
      %v2757 = vunpack.c.l.s4 1983009808
      %v2758 = vunpack.c.0.s8 %v2757
      %v2759 = vlaneseq
      %v2760 = vshrl.u32 %v2759, 7
      %v2761 = vsub.s32 %v2758, %v2760
      %v2762 = vrot.slane %v2734, %v2761
      %v2764 = vunpack.c.l.s4 1983009808
      %v2765 = vunpack.c.0.s8 %v2764
      %v2766 = vlaneseq
      %v2767 = vshrl.u32 %v2766, 7
      %v2768 = vsub.s32 %v2765, %v2767
      %v2769 = vrot.slane %v2741, %v2768
      %v2771 = vunpack.c.l.s4 1983009808
      %v2772 = vunpack.c.0.s8 %v2771
      %v2773 = vlaneseq
      %v2774 = vshrl.u32 %v2773, 7
      %v2775 = vsub.s32 %v2772, %v2774
      %v2776 = vrot.slane %v2748, %v2775
      %v2778 = vunpack.c.l.s4 1983009808
      %v2779 = vunpack.c.0.s8 %v2778
      %v2780 = vlaneseq
      %v2781 = vshrl.u32 %v2780, 7
      %v2782 = vsub.s32 %v2779, %v2781
      %v2783 = vrot.slane %v2755, %v2782
      %v2784 = vunpack.c.l.b16 %v2762
      %v2785 = vunpack.c.l.b16 %v2769
      %v2786 = vunpack.c.l.b16 %v2776
      %v2787 = vunpack.c.l.b16 %v2783
      %v2788 = vrot.slane %v2785, 7
      %v2789 = vsel %vm1574, %v2788, %v2784
      %v2790 = vrot.slane %v2786, 6
      %v2791 = vsel %vm1576, %v2790, %v2789
      %v2792 = vrot.slane %v2787, 5
      %v2793 = vsel %vm1578, %v2792, %v2791
      %v2794 = vpack.c.b16 %v2793, %v2793
      %v2796 = vunpack.c.l.s4 1983009808
      %v2797 = vunpack.c.0.s8 %v2796
      %v2798 = vlaneseq
      %v2799 = vshrl.u32 %v2798, 7
      %v2800 = vsub.s32 %v2797, %v2799
      %v2801 = vrot.slane %v2794, %v2800
      %vm2803 = vcmask 517120
      %2804 = vst.msk [vmem:[%s224] sm:$0x3] %vm2803, %v2801
      %v2805 = vpack.c.bf16 %v2705, %v2705
      %v2806 = vpack.c.bf16 %v2709, %v2709
      %v2807 = vpack.c.bf16 %v2713, %v2713
      %v2808 = vpack.c.bf16 %v2717, %v2717
      %v2814 = vunpack.c.l.s4 1983009808
      %v2815 = vunpack.c.0.s8 %v2814
      %v2816 = vlaneseq
      %v2817 = vshrl.u32 %v2816, 7
      %v2818 = vsub.s32 %v2815, %v2817
      %v2819 = vrot.slane %v2805, %v2818
      %v2821 = vunpack.c.l.s4 1983009808
      %v2822 = vunpack.c.0.s8 %v2821
      %v2823 = vlaneseq
      %v2824 = vshrl.u32 %v2823, 7
      %v2825 = vsub.s32 %v2822, %v2824
      %v2826 = vrot.slane %v2806, %v2825
      %v2828 = vunpack.c.l.s4 1983009808
      %v2829 = vunpack.c.0.s8 %v2828
      %v2830 = vlaneseq
      %v2831 = vshrl.u32 %v2830, 7
      %v2832 = vsub.s32 %v2829, %v2831
      %v2833 = vrot.slane %v2807, %v2832
      %v2835 = vunpack.c.l.s4 1983009808
      %v2836 = vunpack.c.0.s8 %v2835
      %v2837 = vlaneseq
      %v2838 = vshrl.u32 %v2837, 7
      %v2839 = vsub.s32 %v2836, %v2838
      %v2840 = vrot.slane %v2808, %v2839
      %v2842 = vunpack.c.l.s4 1983009808
      %v2843 = vunpack.c.0.s8 %v2842
      %v2844 = vlaneseq
      %v2845 = vshrl.u32 %v2844, 7
      %v2846 = vsub.s32 %v2843, %v2845
      %v2847 = vrot.slane %v2819, %v2846
      %v2849 = vunpack.c.l.s4 1983009808
      %v2850 = vunpack.c.0.s8 %v2849
      %v2851 = vlaneseq
      %v2852 = vshrl.u32 %v2851, 7
      %v2853 = vsub.s32 %v2850, %v2852
      %v2854 = vrot.slane %v2826, %v2853
      %v2856 = vunpack.c.l.s4 1983009808
      %v2857 = vunpack.c.0.s8 %v2856
      %v2858 = vlaneseq
      %v2859 = vshrl.u32 %v2858, 7
      %v2860 = vsub.s32 %v2857, %v2859
      %v2861 = vrot.slane %v2833, %v2860
      %v2863 = vunpack.c.l.s4 1983009808
      %v2864 = vunpack.c.0.s8 %v2863
      %v2865 = vlaneseq
      %v2866 = vshrl.u32 %v2865, 7
      %v2867 = vsub.s32 %v2864, %v2866
      %v2868 = vrot.slane %v2840, %v2867
      %v2869 = vunpack.c.l.b16 %v2847
      %v2870 = vunpack.c.l.b16 %v2854
      %v2871 = vunpack.c.l.b16 %v2861
      %v2872 = vunpack.c.l.b16 %v2868
      %v2873 = vrot.slane %v2870, 7
      %v2874 = vsel %vm1574, %v2873, %v2869
      %v2875 = vrot.slane %v2871, 6
      %v2876 = vsel %vm1576, %v2875, %v2874
      %v2877 = vrot.slane %v2872, 5
      %v2878 = vsel %vm1578, %v2877, %v2876
      %v2879 = vpack.c.b16 %v2878, %v2878
      %v2881 = vunpack.c.l.s4 1983009808
      %v2882 = vunpack.c.0.s8 %v2881
      %v2883 = vlaneseq
      %v2884 = vshrl.u32 %v2883, 7
      %v2885 = vsub.s32 %v2882, %v2884
      %v2886 = vrot.slane %v2879, %v2885
      %2887 = vrot.lane.b32.xlu0 %v2886, 64
      %v2888 = vpop.permute.xlu0 %2887
      %vm2890 = vcmask 1041920
      %2891 = vst.msk [vmem:[%s224] sm:$0x3] %vm2890, %v2888
      %v2892 = vpack.c.bf16 %v2706, %v2706
      %v2893 = vpack.c.bf16 %v2710, %v2710
      %v2894 = vpack.c.bf16 %v2714, %v2714
      %v2895 = vpack.c.bf16 %v2718, %v2718
      %v2901 = vunpack.c.l.s4 1983009808
      %v2902 = vunpack.c.0.s8 %v2901
      %v2903 = vlaneseq
      %v2904 = vshrl.u32 %v2903, 7
      %v2905 = vsub.s32 %v2902, %v2904
      %v2906 = vrot.slane %v2892, %v2905
      %v2908 = vunpack.c.l.s4 1983009808
      %v2909 = vunpack.c.0.s8 %v2908
      %v2910 = vlaneseq
      %v2911 = vshrl.u32 %v2910, 7
      %v2912 = vsub.s32 %v2909, %v2911
      %v2913 = vrot.slane %v2893, %v2912
      %v2915 = vunpack.c.l.s4 1983009808
      %v2916 = vunpack.c.0.s8 %v2915
      %v2917 = vlaneseq
      %v2918 = vshrl.u32 %v2917, 7
      %v2919 = vsub.s32 %v2916, %v2918
      %v2920 = vrot.slane %v2894, %v2919
      %v2922 = vunpack.c.l.s4 1983009808
      %v2923 = vunpack.c.0.s8 %v2922
      %v2924 = vlaneseq
      %v2925 = vshrl.u32 %v2924, 7
      %v2926 = vsub.s32 %v2923, %v2925
      %v2927 = vrot.slane %v2895, %v2926
      %v2929 = vunpack.c.l.s4 1983009808
      %v2930 = vunpack.c.0.s8 %v2929
      %v2931 = vlaneseq
      %v2932 = vshrl.u32 %v2931, 7
      %v2933 = vsub.s32 %v2930, %v2932
      %v2934 = vrot.slane %v2906, %v2933
      %v2936 = vunpack.c.l.s4 1983009808
      %v2937 = vunpack.c.0.s8 %v2936
      %v2938 = vlaneseq
      %v2939 = vshrl.u32 %v2938, 7
      %v2940 = vsub.s32 %v2937, %v2939
      %v2941 = vrot.slane %v2913, %v2940
      %v2943 = vunpack.c.l.s4 1983009808
      %v2944 = vunpack.c.0.s8 %v2943
      %v2945 = vlaneseq
      %v2946 = vshrl.u32 %v2945, 7
      %v2947 = vsub.s32 %v2944, %v2946
      %v2948 = vrot.slane %v2920, %v2947
      %v2950 = vunpack.c.l.s4 1983009808
      %v2951 = vunpack.c.0.s8 %v2950
      %v2952 = vlaneseq
      %v2953 = vshrl.u32 %v2952, 7
      %v2954 = vsub.s32 %v2951, %v2953
      %v2955 = vrot.slane %v2927, %v2954
      %v2956 = vunpack.c.l.b16 %v2934
      %v2957 = vunpack.c.l.b16 %v2941
      %v2958 = vunpack.c.l.b16 %v2948
      %v2959 = vunpack.c.l.b16 %v2955
      %v2960 = vrot.slane %v2957, 7
      %v2961 = vsel %vm1574, %v2960, %v2956
      %v2962 = vrot.slane %v2958, 6
      %v2963 = vsel %vm1576, %v2962, %v2961
      %v2964 = vrot.slane %v2959, 5
      %v2965 = vsel %vm1578, %v2964, %v2963
      %v2966 = vpack.c.b16 %v2965, %v2965
      %v2968 = vunpack.c.l.s4 1983009808
      %v2969 = vunpack.c.0.s8 %v2968
      %v2970 = vlaneseq
      %v2971 = vshrl.u32 %v2970, 7
      %v2972 = vsub.s32 %v2969, %v2971
      %v2973 = vrot.slane %v2966, %v2972
      %2975 = vst.msk [vmem:[%s224 + $0x2] sm:$0x3] %vm2803, %v2973
      %v2976 = vpack.c.bf16 %v2707, %v2707
      %v2977 = vpack.c.bf16 %v2711, %v2711
      %v2978 = vpack.c.bf16 %v2715, %v2715
      %v2979 = vpack.c.bf16 %v2719, %v2719
      %v2985 = vunpack.c.l.s4 1983009808
      %v2986 = vunpack.c.0.s8 %v2985
      %v2987 = vlaneseq
      %v2988 = vshrl.u32 %v2987, 7
      %v2989 = vsub.s32 %v2986, %v2988
      %v2990 = vrot.slane %v2976, %v2989
      %v2992 = vunpack.c.l.s4 1983009808
      %v2993 = vunpack.c.0.s8 %v2992
      %v2994 = vlaneseq
      %v2995 = vshrl.u32 %v2994, 7
      %v2996 = vsub.s32 %v2993, %v2995
      %v2997 = vrot.slane %v2977, %v2996
      %v2999 = vunpack.c.l.s4 1983009808
      %v3000 = vunpack.c.0.s8 %v2999
      %v3001 = vlaneseq
      %v3002 = vshrl.u32 %v3001, 7
      %v3003 = vsub.s32 %v3000, %v3002
      %v3004 = vrot.slane %v2978, %v3003
      %v3006 = vunpack.c.l.s4 1983009808
      %v3007 = vunpack.c.0.s8 %v3006
      %v3008 = vlaneseq
      %v3009 = vshrl.u32 %v3008, 7
      %v3010 = vsub.s32 %v3007, %v3009
      %v3011 = vrot.slane %v2979, %v3010
      %v3013 = vunpack.c.l.s4 1983009808
      %v3014 = vunpack.c.0.s8 %v3013
      %v3015 = vlaneseq
      %v3016 = vshrl.u32 %v3015, 7
      %v3017 = vsub.s32 %v3014, %v3016
      %v3018 = vrot.slane %v2990, %v3017
      %v3020 = vunpack.c.l.s4 1983009808
      %v3021 = vunpack.c.0.s8 %v3020
      %v3022 = vlaneseq
      %v3023 = vshrl.u32 %v3022, 7
      %v3024 = vsub.s32 %v3021, %v3023
      %v3025 = vrot.slane %v2997, %v3024
      %v3027 = vunpack.c.l.s4 1983009808
      %v3028 = vunpack.c.0.s8 %v3027
      %v3029 = vlaneseq
      %v3030 = vshrl.u32 %v3029, 7
      %v3031 = vsub.s32 %v3028, %v3030
      %v3032 = vrot.slane %v3004, %v3031
      %v3034 = vunpack.c.l.s4 1983009808
      %v3035 = vunpack.c.0.s8 %v3034
      %v3036 = vlaneseq
      %v3037 = vshrl.u32 %v3036, 7
      %v3038 = vsub.s32 %v3035, %v3037
      %v3039 = vrot.slane %v3011, %v3038
      %v3040 = vunpack.c.l.b16 %v3018
      %v3041 = vunpack.c.l.b16 %v3025
      %v3042 = vunpack.c.l.b16 %v3032
      %v3043 = vunpack.c.l.b16 %v3039
      %v3044 = vrot.slane %v3041, 7
      %v3045 = vsel %vm1574, %v3044, %v3040
      %v3046 = vrot.slane %v3042, 6
      %v3047 = vsel %vm1576, %v3046, %v3045
      %v3048 = vrot.slane %v3043, 5
      %v3049 = vsel %vm1578, %v3048, %v3047
      %v3050 = vpack.c.b16 %v3049, %v3049
      %v3052 = vunpack.c.l.s4 1983009808
      %v3053 = vunpack.c.0.s8 %v3052
      %v3054 = vlaneseq
      %v3055 = vshrl.u32 %v3054, 7
      %v3056 = vsub.s32 %v3053, %v3055
      %v3057 = vrot.slane %v3050, %v3056
      %3058 = vrot.lane.b32.xlu0 %v3057, 64
      %v3059 = vpop.permute.xlu0 %3058
      %3061 = vst.msk [vmem:[%s224 + $0x2] sm:$0x3] %vm2890, %v3059
      %p3062 = scmp.lt.s32.totalorder %s16, 1
      %s3063 = scalar_select %p3062, %s16, 1
      %s3064 = smul.addr %s3063, 2
      %s3065 = smul.addr %s3064, 2
      %s3066 = scalar_lea.vmem %s5, %s3065
      // Predicated region
      $region41: #{brain_tumor_cnn_forward.2} parent=39 // pred_check
        %p3067 = pneg %p144
      $region42: #{brain_tumor_cnn_forward.2} parent=39 // pred_check_branch
        %3069 = sbr.rel (%p3067) target = $region44
      $region43: #{brain_tumor_cnn_forward.2} parent=39 // pred_region
        _
      $region44: #{brain_tumor_cnn_forward.2} parent=39 // pred_fallthru
        _
    $region40: #{brain_tumor_cnn_forward.2} parent=5 // pred_fallthru
      _
    %p3070 = scmp.le.s32.totalorder 2, %s11
    // Predicated region
    $region45: #{brain_tumor_cnn_forward.2} parent=5 // pred_check
      %p3071 = pneg %p3070
    $region46: #{brain_tumor_cnn_forward.2} parent=5 // pred_check_branch
      %3073 = sbr.rel (%p3071) target = $region48
    $region47: #{brain_tumor_cnn_forward.2} parent=5 // pred_region
      %s3074 = ssub.s32 %s11, 2
      // Predicated region
      $region49: #{brain_tumor_cnn_forward.2} parent=47 // pred_check
        %p3075 = pneg %p150
      $region50: #{brain_tumor_cnn_forward.2} parent=47 // pred_check_branch
        %3077 = sbr.rel (%p3075) target = $region52
      $region51: #{brain_tumor_cnn_forward.2} parent=47 // pred_region
        %p3078 = scmp.lt.s32.totalorder %s17, 1
        %s3079 = scalar_select %p3078, %s17, 1
        %s3080 = smul.addr %s3079, 2
        %s3081 = smul.addr %s3080, 2
        %s3082 = scalar_lea.vmem %s5, %s3081
      $region52: #{brain_tumor_cnn_forward.2} parent=47 // pred_fallthru
        _
    $region48: #{brain_tumor_cnn_forward.2} parent=5 // pred_fallthru
      _
  $region6: #{brain_tumor_cnn_forward.2} parent=0 // loop_footer
    %s15 = sadd.s32 1, %s11
  $region7: #{brain_tumor_cnn_forward.2} parent=0 // loop_footer_branch
    %10 = sbr.rel target = $region3
  $region8: #{brain_tumor_cnn_forward.2} parent=0 // loop_exit
    _

</llo_original>
